<compile_context>
chip_gen: v7x
topology: tpu7x:2x2x1
jax: 0.10.0
libtpu: 0.0.40
codegen_flags: <defaults>
</compile_context>

<pallas_src>
import math
from functools import partial

import jax
import jax.numpy as jnp
from jax import lax
from jax.experimental import pallas as pl
from jax.experimental.pallas import tpu as pltpu


# x (M, K) . w (N, K) -> (M, N)   (== x @ w.T, weight consumed transposed by MXU)
_DN_T = (((1,), (1,)), ((), ()))
# batched attention dot_generals (batch dim 0, contract last dims)
_DN_QK = (((2,), (2,)), ((0,), (0,)))   # (B,L,D).(B,S,D) -> (B,L,S)
_DN_PV = (((2,), (1,)), ((0,), (0,)))   # (B,L,S).(B,S,D) -> (B,L,D)


# ----------------------------------------------------------------------------
# Fused MHA kernel: one grid step = one group of heads (in-projection +
# attention + partial out-projection over that group's hd embedding columns).
# ----------------------------------------------------------------------------
def _mha_group_kernel(xq_ref, xk_ref, xv_ref,
                      wq_ref, wk_ref, wv_ref,
                      bq_ref, bk_ref, bv_ref,
                      wo_ref, bo_ref,
                      o_ref, attn_ref, *,
                      bsz, q_len, kv_len, heads_per_group, head_dim):
    # ---- packed in-projection for this head group (lane-dense matmuls) ----
    q = lax.dot_general(xq_ref[...], wq_ref[...], _DN_T,
                        preferred_element_type=jnp.float32) + bq_ref[0]
    k = lax.dot_general(xk_ref[...], wk_ref[...], _DN_T,
                        preferred_element_type=jnp.float32) + bk_ref[0]
    v = lax.dot_general(xv_ref[...], wv_ref[...], _DN_T,
                        preferred_element_type=jnp.float32) + bv_ref[0]

    scale = 1.0 / math.sqrt(head_dim)

    # ---- scaled dot-product attention --------------------------------------
    # One iteration per head of this group; the batch dim rides as a
    # dot_general batch dim; head outputs are written straight into the VMEM
    # scratch slab (no jnp.concatenate).
    for h in range(heads_per_group):
        sl = slice(h * head_dim, (h + 1) * head_dim)
        qh = (q[:, sl] * scale).reshape(bsz, q_len, head_dim)
        kh = k[:, sl].reshape(bsz, kv_len, head_dim)
        vh = v[:, sl].reshape(bsz, kv_len, head_dim)

        s = lax.dot_general(qh, kh, _DN_QK, preferred_element_type=jnp.float32)
        s = s - jnp.max(s, axis=-1, keepdims=True)
        p = jnp.exp(s)
        p = p / jnp.sum(p, axis=-1, keepdims=True)          # exact; denom is tiny
        oh = lax.dot_general(p, vh, _DN_PV, preferred_element_type=jnp.float32)

        attn_ref[:, sl] = oh.reshape(bsz * q_len, head_dim)

    # ---- partial out-projection over this group's hd weight columns --------
    out = lax.dot_general(attn_ref[...], wo_ref[...], _DN_T,
                          preferred_element_type=jnp.float32)

    # out_proj bias is contributed exactly once (by head group 0)
    @pl.when(pl.program_id(0) == 0)
    def _():
        o_ref[0] = (out + bo_ref[...]).astype(o_ref.dtype)

    @pl.when(pl.program_id(0) != 0)
    def _():
        o_ref[0] = out.astype(o_ref.dtype)


# ----------------------------------------------------------------------------
# Wrapper
# ----------------------------------------------------------------------------
def _default_groups(num_heads, embed_dim):
    """2 head groups (one per TensorCore) on 2-TC chips (v7x), else 1."""
    groups = 1
    try:
        kind = jax.devices()[0].device_kind.lower()
        if "v7" in kind:                      # v7x: 2 TensorCores per chip
            groups = 2
    except Exception:
        pass
    if num_heads % groups != 0 or (embed_dim // groups) % 128 != 0:
        groups = 1
    return groups


@partial(jax.jit, static_argnames=("num_heads", "groups"))
def _mha_forward(query, key, value, in_proj_weight, in_proj_bias,
                 out_proj_weight, out_proj_bias, *, num_heads, groups):
    tgt_len, bsz, embed_dim = query.shape
    src_len = key.shape[0]
    head_dim = embed_dim // num_heads
    heads_per_group = num_heads // groups
    hd = heads_per_group * head_dim            # embedding columns per grid step
    m_q = bsz * tgt_len
    m_kv = bsz * src_len

    # batch-major activation slabs (tiny, ~32 KiB each); weights stay untouched
    x_q = query.transpose(1, 0, 2).reshape(m_q, embed_dim)
    x_k = key.transpose(1, 0, 2).reshape(m_kv, embed_dim)
    x_v = value.transpose(1, 0, 2).reshape(m_kv, embed_dim)
    b_in = in_proj_bias.reshape(3 * groups, 1, hd)      # pure reshape, no repack
    b_out = out_proj_bias.reshape(1, embed_dim)

    kernel = partial(_mha_group_kernel, bsz=bsz, q_len=tgt_len, kv_len=src_len,
                     heads_per_group=heads_per_group, head_dim=head_dim)

    partials = pl.pallas_call(
        kernel,
        out_shape=jax.ShapeDtypeStruct((groups, m_q, embed_dim), jnp.float32),
        grid=(groups,),
        in_specs=[
            pl.BlockSpec((m_q, embed_dim), lambda g: (0, 0)),               # x_q
            pl.BlockSpec((m_kv, embed_dim), lambda g: (0, 0)),              # x_k
            pl.BlockSpec((m_kv, embed_dim), lambda g: (0, 0)),              # x_v
            # q/k/v row-blocks of the ORIGINAL (3E, E) in_proj weight:
            pl.BlockSpec((hd, embed_dim), lambda g: (g, 0)),                # Wq rows
            pl.BlockSpec((hd, embed_dim), lambda g: (groups + g, 0)),       # Wk rows
            pl.BlockSpec((hd, embed_dim), lambda g: (2 * groups + g, 0)),   # Wv rows
            pl.BlockSpec((1, 1, hd), lambda g: (g, 0, 0)),                  # bq
            pl.BlockSpec((1, 1, hd), lambda g: (groups + g, 0, 0)),         # bk
            pl.BlockSpec((1, 1, hd), lambda g: (2 * groups + g, 0, 0)),     # bv
            pl.BlockSpec((embed_dim, hd), lambda g: (0, g)),                # Wout cols
            pl.BlockSpec((1, embed_dim), lambda g: (0, 0)),                 # bout
        ],
        out_specs=pl.BlockSpec((1, m_q, embed_dim), lambda g: (g, 0, 0)),
        scratch_shapes=[pltpu.VMEM((m_q, hd), jnp.float32)],
        compiler_params=pltpu.CompilerParams(
            dimension_semantics=("parallel",),
            vmem_limit_bytes=32 * 1024 * 1024,
        ),
    )(x_q, x_k, x_v,
      in_proj_weight, in_proj_weight, in_proj_weight,
      b_in, b_in, b_in,
      out_proj_weight, b_out)

    # groups==1: single block already holds bias; groups==2: tiny cross-group sum
    out = partials[0] if groups == 1 else jnp.sum(partials, axis=0)
    return out.reshape(bsz, tgt_len, embed_dim).transpose(1, 0, 2)   # (L, B, E)


def multihead_attention_forward(query, key, value, num_heads,
                                in_proj_weight, in_proj_bias,
                                out_proj_weight, out_proj_bias, groups=None):
    if groups is None:
        groups = _default_groups(num_heads, query.shape[-1])
    return _mha_forward(query, key, value, in_proj_weight, in_proj_bias,
                        out_proj_weight, out_proj_bias,
                        num_heads=num_heads, groups=groups)


# ----------------------------------------------------------------------------
# Pure-JAX reference (for correctness check)
# ----------------------------------------------------------------------------
def reference_forward(query, key, value, num_heads,
                      in_proj_weight, in_proj_bias,
                      out_proj_weight, out_proj_bias):
    L, B, E = query.shape
    S = key.shape[0]
    D = E // num_heads
    w_q, w_k, w_v = jnp.split(in_proj_weight, 3, axis=0)
    b_q, b_k, b_v = jnp.split(in_proj_bias, 3, axis=0)
    q = query @ w_q.T + b_q
    k = key @ w_k.T + b_k
    v = value @ w_v.T + b_v
    q = q.reshape(L, B * num_heads, D).transpose(1, 0, 2) / math.sqrt(D)
    k = k.reshape(S, B * num_heads, D).transpose(1, 0, 2)
    v = v.reshape(S, B * num_heads, D).transpose(1, 0, 2)
    s = jnp.einsum('bld,bsd->bls', q, k)
    p = jax.nn.softmax(s, axis=-1)
    o = jnp.einsum('bls,bsd->bld', p, v)
    o = o.transpose(1, 0, 2).reshape(L * B, E)
    o = o @ out_proj_weight.T + out_proj_bias
    return o.reshape(L, B, E)


if __name__ == "__main__":
    # Module asserts embed_dim == 512 and num_heads == 8.
    EMBED_DIM = 512
    NUM_HEADS = 8
    TGT_LEN = 8
    SRC_LEN = 8
    BATCH = 2

    root = jax.random.PRNGKey(0)
    keys = jax.random.split(root, 8)

    # deterministic synthetic parameters (module __init__ gives the shapes)
    in_proj_weight = jax.random.normal(keys[0], (3 * EMBED_DIM, EMBED_DIM),
                                       dtype=jnp.float32) * 0.02
    in_proj_bias = jax.random.normal(keys[1], (3 * EMBED_DIM,),
                                     dtype=jnp.float32) * 0.02
    out_proj_weight = jax.random.normal(keys[2], (EMBED_DIM, EMBED_DIM),
                                        dtype=jnp.float32) * 0.02
    out_proj_bias = jax.random.normal(keys[3], (EMBED_DIM,),
                                      dtype=jnp.float32) * 0.02

    # inputs: (seq_len, batch, embed_dim), seq-first like PyTorch
    query = jax.random.normal(keys[4], (TGT_LEN, BATCH, EMBED_DIM), jnp.float32)
    key_t = jax.random.normal(keys[5], (SRC_LEN, BATCH, EMBED_DIM), jnp.float32)
    value = jax.random.normal(keys[6], (SRC_LEN, BATCH, EMBED_DIM), jnp.float32)

    out = multihead_attention_forward(query, key_t, value, NUM_HEADS,
                                      in_proj_weight, in_proj_bias,
                                      out_proj_weight, out_proj_bias)
    out = jax.block_until_ready(out)

    ref = reference_forward(query, key_t, value, NUM_HEADS,
                            in_proj_weight, in_proj_bias,
                            out_proj_weight, out_proj_bias)
    ref = jax.block_until_ready(ref)

    assert out.shape == (TGT_LEN, BATCH, EMBED_DIM)
    assert jnp.allclose(out, ref, rtol=1e-4, atol=1e-4), \
        f"max abs err = {jnp.max(jnp.abs(out - ref))}"

    print("KERNEL_OK")
</pallas_src>

<mosaic_0001>
module attributes {stable_mosaic.version = 11 : i64} {
  func.func @_mha_group_kernel(%arg0: i32, %arg1: memref<16x512xf32, #tpu.memory_space<vmem>>, %arg2: memref<16x512xf32, #tpu.memory_space<vmem>>, %arg3: memref<16x512xf32, #tpu.memory_space<vmem>>, %arg4: memref<512x512xf32, #tpu.memory_space<vmem>>, %arg5: memref<512x512xf32, #tpu.memory_space<vmem>>, %arg6: memref<512x512xf32, #tpu.memory_space<vmem>>, %arg7: memref<1x1x512xf32, #tpu.memory_space<vmem>>, %arg8: memref<1x1x512xf32, #tpu.memory_space<vmem>>, %arg9: memref<1x1x512xf32, #tpu.memory_space<vmem>>, %arg10: memref<512x512xf32, #tpu.memory_space<vmem>>, %arg11: memref<1x512xf32, #tpu.memory_space<vmem>>, %arg12: memref<1x16x512xf32, #tpu.memory_space<vmem>>, %arg13: memref<16x512xf32, #tpu.memory_space<vmem>>) attributes {dimension_semantics = [#tpu.dimension_semantics<parallel>], iteration_bounds = array<i64: 1>, scalar_prefetch = 0 : i64, scratch_operands = 1 : i64, tpu.core_type = #tpu.core_type<tc>, window_params = [{pipeline_mode = #tpu.pipeline_mode<synchronous>, transform_indices = @transform_0, window_bounds = array<i64: 16, 512>}, {pipeline_mode = #tpu.pipeline_mode<synchronous>, transform_indices = @transform_1, window_bounds = array<i64: 16, 512>}, {pipeline_mode = #tpu.pipeline_mode<synchronous>, transform_indices = @transform_2, window_bounds = array<i64: 16, 512>}, {transform_indices = @transform_3, window_bounds = array<i64: 512, 512>}, {transform_indices = @transform_4, window_bounds = array<i64: 512, 512>}, {transform_indices = @transform_5, window_bounds = array<i64: 512, 512>}, {transform_indices = @transform_6, window_bounds = array<i64: 1, 1, 512>}, {transform_indices = @transform_7, window_bounds = array<i64: 1, 1, 512>}, {transform_indices = @transform_8, window_bounds = array<i64: 1, 1, 512>}, {transform_indices = @transform_9, window_bounds = array<i64: 512, 512>}, {pipeline_mode = #tpu.pipeline_mode<synchronous>, transform_indices = @transform_10, window_bounds = array<i64: 1, 512>}, {transform_indices = @transform_11, window_bounds = array<i64: 1, 16, 512>}]} {
    %c0 = arith.constant 0 : index
    %c0_0 = arith.constant 0 : index
    %0 = vector.load %arg1[%c0, %c0_0] : memref<16x512xf32, #tpu.memory_space<vmem>>, vector<16x512xf32>
    %c0_1 = arith.constant 0 : index
    %c0_2 = arith.constant 0 : index
    %1 = vector.load %arg4[%c0_1, %c0_2] : memref<512x512xf32, #tpu.memory_space<vmem>>, vector<512x512xf32>
    %cst = arith.constant dense<0.000000e+00> : vector<16x512xf32>
    %2 = tpu.matmul %0, %1, %cst {dimension_numbers = #tpu.dot_dimension_numbers<[1], [1], [0], [0], [0, 0, 1, 0], [], []>} : vector<16x512xf32>, vector<512x512xf32>, vector<16x512xf32> -> vector<16x512xf32>
    %c0_3 = arith.constant 0 : index
    %c0_4 = arith.constant 0 : index
    %c0_5 = arith.constant 0 : index
    %3 = vector.load %arg7[%c0_3, %c0_4, %c0_5] : memref<1x1x512xf32, #tpu.memory_space<vmem>>, vector<1x1x512xf32>
    %4 = vector.shape_cast %3 : vector<1x1x512xf32> to vector<1x512xf32>
    %5 = vector.broadcast %4 : vector<1x512xf32> to vector<16x512xf32>
    %6 = arith.addf %2, %5 : vector<16x512xf32>
    %c0_6 = arith.constant 0 : index
    %c0_7 = arith.constant 0 : index
    %7 = vector.load %arg2[%c0_6, %c0_7] : memref<16x512xf32, #tpu.memory_space<vmem>>, vector<16x512xf32>
    %c0_8 = arith.constant 0 : index
    %c0_9 = arith.constant 0 : index
    %8 = vector.load %arg5[%c0_8, %c0_9] : memref<512x512xf32, #tpu.memory_space<vmem>>, vector<512x512xf32>
    %cst_10 = arith.constant dense<0.000000e+00> : vector<16x512xf32>
    %9 = tpu.matmul %7, %8, %cst_10 {dimension_numbers = #tpu.dot_dimension_numbers<[1], [1], [0], [0], [0, 0, 1, 0], [], []>} : vector<16x512xf32>, vector<512x512xf32>, vector<16x512xf32> -> vector<16x512xf32>
    %c0_11 = arith.constant 0 : index
    %c0_12 = arith.constant 0 : index
    %c0_13 = arith.constant 0 : index
    %10 = vector.load %arg8[%c0_11, %c0_12, %c0_13] : memref<1x1x512xf32, #tpu.memory_space<vmem>>, vector<1x1x512xf32>
    %11 = vector.shape_cast %10 : vector<1x1x512xf32> to vector<1x512xf32>
    %12 = vector.broadcast %11 : vector<1x512xf32> to vector<16x512xf32>
    %13 = arith.addf %9, %12 : vector<16x512xf32>
    %c0_14 = arith.constant 0 : index
    %c0_15 = arith.constant 0 : index
    %14 = vector.load %arg3[%c0_14, %c0_15] : memref<16x512xf32, #tpu.memory_space<vmem>>, vector<16x512xf32>
    %c0_16 = arith.constant 0 : index
    %c0_17 = arith.constant 0 : index
    %15 = vector.load %arg6[%c0_16, %c0_17] : memref<512x512xf32, #tpu.memory_space<vmem>>, vector<512x512xf32>
    %cst_18 = arith.constant dense<0.000000e+00> : vector<16x512xf32>
    %16 = tpu.matmul %14, %15, %cst_18 {dimension_numbers = #tpu.dot_dimension_numbers<[1], [1], [0], [0], [0, 0, 1, 0], [], []>} : vector<16x512xf32>, vector<512x512xf32>, vector<16x512xf32> -> vector<16x512xf32>
    %c0_19 = arith.constant 0 : index
    %c0_20 = arith.constant 0 : index
    %c0_21 = arith.constant 0 : index
    %17 = vector.load %arg9[%c0_19, %c0_20, %c0_21] : memref<1x1x512xf32, #tpu.memory_space<vmem>>, vector<1x1x512xf32>
    %18 = vector.shape_cast %17 : vector<1x1x512xf32> to vector<1x512xf32>
    %19 = vector.broadcast %18 : vector<1x512xf32> to vector<16x512xf32>
    %20 = arith.addf %16, %19 : vector<16x512xf32>
    %21 = vector.extract_strided_slice %6 {offsets = [0, 0], sizes = [16, 64], strides = [1, 1]} : vector<16x512xf32> to vector<16x64xf32>
    %cst_22 = arith.constant 1.250000e-01 : f32
    %22 = vector.broadcast %cst_22 : f32 to vector<16x64xf32>
    %23 = arith.mulf %21, %22 : vector<16x64xf32>
    %24 = vector.shape_cast %23 : vector<16x64xf32> to vector<2x8x64xf32>
    %25 = vector.extract_strided_slice %13 {offsets = [0, 0], sizes = [16, 64], strides = [1, 1]} : vector<16x512xf32> to vector<16x64xf32>
    %26 = vector.shape_cast %25 : vector<16x64xf32> to vector<2x8x64xf32>
    %27 = vector.extract_strided_slice %20 {offsets = [0, 0], sizes = [16, 64], strides = [1, 1]} : vector<16x512xf32> to vector<16x64xf32>
    %28 = vector.shape_cast %27 : vector<16x64xf32> to vector<2x8x64xf32>
    %cst_23 = arith.constant dense<0.000000e+00> : vector<2x8x8xf32>
    %29 = tpu.matmul %24, %26, %cst_23 {dimension_numbers = #tpu.dot_dimension_numbers<[2], [2], [1], [1], [0, 0, 0, 1, 1, 1], [0], [0]>} : vector<2x8x64xf32>, vector<2x8x64xf32>, vector<2x8x8xf32> -> vector<2x8x8xf32>
    %cst_24 = arith.constant dense<0xFF800000> : vector<2x8xf32>
    %30 = vector.multi_reduction <maximumf>, %29, %cst_24 [2] : vector<2x8x8xf32> to vector<2x8xf32>
    %31 = vector.shape_cast %30 : vector<2x8xf32> to vector<2x8x1xf32>
    %32 = vector.broadcast %31 : vector<2x8x1xf32> to vector<2x8x8xf32>
    %33 = arith.subf %29, %32 : vector<2x8x8xf32>
    %34 = math.exp %33 : vector<2x8x8xf32>
    %cst_25 = arith.constant dense<0.000000e+00> : vector<2x8xf32>
    %35 = vector.multi_reduction <add>, %34, %cst_25 [2] : vector<2x8x8xf32> to vector<2x8xf32>
    %36 = vector.shape_cast %35 : vector<2x8xf32> to vector<2x8x1xf32>
    %37 = vector.broadcast %36 : vector<2x8x1xf32> to vector<2x8x8xf32>
    %38 = arith.divf %34, %37 : vector<2x8x8xf32>
    %cst_26 = arith.constant dense<0.000000e+00> : vector<2x8x64xf32>
    %39 = tpu.matmul %38, %28, %cst_26 {dimension_numbers = #tpu.dot_dimension_numbers<[2], [1], [1], [2], [0, 0, 0, 1, 1, 2], [0], [0]>} : vector<2x8x8xf32>, vector<2x8x64xf32>, vector<2x8x64xf32> -> vector<2x8x64xf32>
    %40 = vector.shape_cast %39 : vector<2x8x64xf32> to vector<16x64xf32>
    %c0_27 = arith.constant 0 : index
    %c0_28 = arith.constant 0 : index
    %41 = vector.load %arg13[%c0_27, %c0_28] : memref<16x512xf32, #tpu.memory_space<vmem>>, vector<16x64xf32>
    tpu.vector_store %arg13[%c0_27, %c0_28], %40 {strides = array<i32>} : memref<16x512xf32, #tpu.memory_space<vmem>>, vector<16x64xf32>,
    %42 = vector.extract_strided_slice %6 {offsets = [0, 64], sizes = [16, 64], strides = [1, 1]} : vector<16x512xf32> to vector<16x64xf32>
    %cst_29 = arith.constant 1.250000e-01 : f32
    %43 = vector.broadcast %cst_29 : f32 to vector<16x64xf32>
    %44 = arith.mulf %42, %43 : vector<16x64xf32>
    %45 = vector.shape_cast %44 : vector<16x64xf32> to vector<2x8x64xf32>
    %46 = vector.extract_strided_slice %13 {offsets = [0, 64], sizes = [16, 64], strides = [1, 1]} : vector<16x512xf32> to vector<16x64xf32>
    %47 = vector.shape_cast %46 : vector<16x64xf32> to vector<2x8x64xf32>
    %48 = vector.extract_strided_slice %20 {offsets = [0, 64], sizes = [16, 64], strides = [1, 1]} : vector<16x512xf32> to vector<16x64xf32>
    %49 = vector.shape_cast %48 : vector<16x64xf32> to vector<2x8x64xf32>
    %cst_30 = arith.constant dense<0.000000e+00> : vector<2x8x8xf32>
    %50 = tpu.matmul %45, %47, %cst_30 {dimension_numbers = #tpu.dot_dimension_numbers<[2], [2], [1], [1], [0, 0, 0, 1, 1, 1], [0], [0]>} : vector<2x8x64xf32>, vector<2x8x64xf32>, vector<2x8x8xf32> -> vector<2x8x8xf32>
    %cst_31 = arith.constant dense<0xFF800000> : vector<2x8xf32>
    %51 = vector.multi_reduction <maximumf>, %50, %cst_31 [2] : vector<2x8x8xf32> to vector<2x8xf32>
    %52 = vector.shape_cast %51 : vector<2x8xf32> to vector<2x8x1xf32>
    %53 = vector.broadcast %52 : vector<2x8x1xf32> to vector<2x8x8xf32>
    %54 = arith.subf %50, %53 : vector<2x8x8xf32>
    %55 = math.exp %54 : vector<2x8x8xf32>
    %cst_32 = arith.constant dense<0.000000e+00> : vector<2x8xf32>
    %56 = vector.multi_reduction <add>, %55, %cst_32 [2] : vector<2x8x8xf32> to vector<2x8xf32>
    %57 = vector.shape_cast %56 : vector<2x8xf32> to vector<2x8x1xf32>
    %58 = vector.broadcast %57 : vector<2x8x1xf32> to vector<2x8x8xf32>
    %59 = arith.divf %55, %58 : vector<2x8x8xf32>
    %cst_33 = arith.constant dense<0.000000e+00> : vector<2x8x64xf32>
    %60 = tpu.matmul %59, %49, %cst_33 {dimension_numbers = #tpu.dot_dimension_numbers<[2], [1], [1], [2], [0, 0, 0, 1, 1, 2], [0], [0]>} : vector<2x8x8xf32>, vector<2x8x64xf32>, vector<2x8x64xf32> -> vector<2x8x64xf32>
    %61 = vector.shape_cast %60 : vector<2x8x64xf32> to vector<16x64xf32>
    %c0_34 = arith.constant 0 : index
    %c64 = arith.constant 64 : index
    %62 = vector.load %arg13[%c0_34, %c64] : memref<16x512xf32, #tpu.memory_space<vmem>>, vector<16x64xf32>
    tpu.vector_store %arg13[%c0_34, %c64], %61 {strides = array<i32>} : memref<16x512xf32, #tpu.memory_space<vmem>>, vector<16x64xf32>,
    %63 = vector.extract_strided_slice %6 {offsets = [0, 128], sizes = [16, 64], strides = [1, 1]} : vector<16x512xf32> to vector<16x64xf32>
    %cst_35 = arith.constant 1.250000e-01 : f32
    %64 = vector.broadcast %cst_35 : f32 to vector<16x64xf32>
    %65 = arith.mulf %63, %64 : vector<16x64xf32>
    %66 = vector.shape_cast %65 : vector<16x64xf32> to vector<2x8x64xf32>
    %67 = vector.extract_strided_slice %13 {offsets = [0, 128], sizes = [16, 64], strides = [1, 1]} : vector<16x512xf32> to vector<16x64xf32>
    %68 = vector.shape_cast %67 : vector<16x64xf32> to vector<2x8x64xf32>
    %69 = vector.extract_strided_slice %20 {offsets = [0, 128], sizes = [16, 64], strides = [1, 1]} : vector<16x512xf32> to vector<16x64xf32>
    %70 = vector.shape_cast %69 : vector<16x64xf32> to vector<2x8x64xf32>
    %cst_36 = arith.constant dense<0.000000e+00> : vector<2x8x8xf32>
    %71 = tpu.matmul %66, %68, %cst_36 {dimension_numbers = #tpu.dot_dimension_numbers<[2], [2], [1], [1], [0, 0, 0, 1, 1, 1], [0], [0]>} : vector<2x8x64xf32>, vector<2x8x64xf32>, vector<2x8x8xf32> -> vector<2x8x8xf32>
    %cst_37 = arith.constant dense<0xFF800000> : vector<2x8xf32>
    %72 = vector.multi_reduction <maximumf>, %71, %cst_37 [2] : vector<2x8x8xf32> to vector<2x8xf32>
    %73 = vector.shape_cast %72 : vector<2x8xf32> to vector<2x8x1xf32>
    %74 = vector.broadcast %73 : vector<2x8x1xf32> to vector<2x8x8xf32>
    %75 = arith.subf %71, %74 : vector<2x8x8xf32>
    %76 = math.exp %75 : vector<2x8x8xf32>
    %cst_38 = arith.constant dense<0.000000e+00> : vector<2x8xf32>
    %77 = vector.multi_reduction <add>, %76, %cst_38 [2] : vector<2x8x8xf32> to vector<2x8xf32>
    %78 = vector.shape_cast %77 : vector<2x8xf32> to vector<2x8x1xf32>
    %79 = vector.broadcast %78 : vector<2x8x1xf32> to vector<2x8x8xf32>
    %80 = arith.divf %76, %79 : vector<2x8x8xf32>
    %cst_39 = arith.constant dense<0.000000e+00> : vector<2x8x64xf32>
    %81 = tpu.matmul %80, %70, %cst_39 {dimension_numbers = #tpu.dot_dimension_numbers<[2], [1], [1], [2], [0, 0, 0, 1, 1, 2], [0], [0]>} : vector<2x8x8xf32>, vector<2x8x64xf32>, vector<2x8x64xf32> -> vector<2x8x64xf32>
    %82 = vector.shape_cast %81 : vector<2x8x64xf32> to vector<16x64xf32>
    %c0_40 = arith.constant 0 : index
    %c128 = arith.constant 128 : index
    %83 = vector.load %arg13[%c0_40, %c128] : memref<16x512xf32, #tpu.memory_space<vmem>>, vector<16x64xf32>
    tpu.vector_store %arg13[%c0_40, %c128], %82 {strides = array<i32>} : memref<16x512xf32, #tpu.memory_space<vmem>>, vector<16x64xf32>,
    %84 = vector.extract_strided_slice %6 {offsets = [0, 192], sizes = [16, 64], strides = [1, 1]} : vector<16x512xf32> to vector<16x64xf32>
    %cst_41 = arith.constant 1.250000e-01 : f32
    %85 = vector.broadcast %cst_41 : f32 to vector<16x64xf32>
    %86 = arith.mulf %84, %85 : vector<16x64xf32>
    %87 = vector.shape_cast %86 : vector<16x64xf32> to vector<2x8x64xf32>
    %88 = vector.extract_strided_slice %13 {offsets = [0, 192], sizes = [16, 64], strides = [1, 1]} : vector<16x512xf32> to vector<16x64xf32>
    %89 = vector.shape_cast %88 : vector<16x64xf32> to vector<2x8x64xf32>
    %90 = vector.extract_strided_slice %20 {offsets = [0, 192], sizes = [16, 64], strides = [1, 1]} : vector<16x512xf32> to vector<16x64xf32>
    %91 = vector.shape_cast %90 : vector<16x64xf32> to vector<2x8x64xf32>
    %cst_42 = arith.constant dense<0.000000e+00> : vector<2x8x8xf32>
    %92 = tpu.matmul %87, %89, %cst_42 {dimension_numbers = #tpu.dot_dimension_numbers<[2], [2], [1], [1], [0, 0, 0, 1, 1, 1], [0], [0]>} : vector<2x8x64xf32>, vector<2x8x64xf32>, vector<2x8x8xf32> -> vector<2x8x8xf32>
    %cst_43 = arith.constant dense<0xFF800000> : vector<2x8xf32>
    %93 = vector.multi_reduction <maximumf>, %92, %cst_43 [2] : vector<2x8x8xf32> to vector<2x8xf32>
    %94 = vector.shape_cast %93 : vector<2x8xf32> to vector<2x8x1xf32>
    %95 = vector.broadcast %94 : vector<2x8x1xf32> to vector<2x8x8xf32>
    %96 = arith.subf %92, %95 : vector<2x8x8xf32>
    %97 = math.exp %96 : vector<2x8x8xf32>
    %cst_44 = arith.constant dense<0.000000e+00> : vector<2x8xf32>
    %98 = vector.multi_reduction <add>, %97, %cst_44 [2] : vector<2x8x8xf32> to vector<2x8xf32>
    %99 = vector.shape_cast %98 : vector<2x8xf32> to vector<2x8x1xf32>
    %100 = vector.broadcast %99 : vector<2x8x1xf32> to vector<2x8x8xf32>
    %101 = arith.divf %97, %100 : vector<2x8x8xf32>
    %cst_45 = arith.constant dense<0.000000e+00> : vector<2x8x64xf32>
    %102 = tpu.matmul %101, %91, %cst_45 {dimension_numbers = #tpu.dot_dimension_numbers<[2], [1], [1], [2], [0, 0, 0, 1, 1, 2], [0], [0]>} : vector<2x8x8xf32>, vector<2x8x64xf32>, vector<2x8x64xf32> -> vector<2x8x64xf32>
    %103 = vector.shape_cast %102 : vector<2x8x64xf32> to vector<16x64xf32>
    %c0_46 = arith.constant 0 : index
    %c192 = arith.constant 192 : index
    %104 = vector.load %arg13[%c0_46, %c192] : memref<16x512xf32, #tpu.memory_space<vmem>>, vector<16x64xf32>
    tpu.vector_store %arg13[%c0_46, %c192], %103 {strides = array<i32>} : memref<16x512xf32, #tpu.memory_space<vmem>>, vector<16x64xf32>,
    %105 = vector.extract_strided_slice %6 {offsets = [0, 256], sizes = [16, 64], strides = [1, 1]} : vector<16x512xf32> to vector<16x64xf32>
    %cst_47 = arith.constant 1.250000e-01 : f32
    %106 = vector.broadcast %cst_47 : f32 to vector<16x64xf32>
    %107 = arith.mulf %105, %106 : vector<16x64xf32>
    %108 = vector.shape_cast %107 : vector<16x64xf32> to vector<2x8x64xf32>
    %109 = vector.extract_strided_slice %13 {offsets = [0, 256], sizes = [16, 64], strides = [1, 1]} : vector<16x512xf32> to vector<16x64xf32>
    %110 = vector.shape_cast %109 : vector<16x64xf32> to vector<2x8x64xf32>
    %111 = vector.extract_strided_slice %20 {offsets = [0, 256], sizes = [16, 64], strides = [1, 1]} : vector<16x512xf32> to vector<16x64xf32>
    %112 = vector.shape_cast %111 : vector<16x64xf32> to vector<2x8x64xf32>
    %cst_48 = arith.constant dense<0.000000e+00> : vector<2x8x8xf32>
    %113 = tpu.matmul %108, %110, %cst_48 {dimension_numbers = #tpu.dot_dimension_numbers<[2], [2], [1], [1], [0, 0, 0, 1, 1, 1], [0], [0]>} : vector<2x8x64xf32>, vector<2x8x64xf32>, vector<2x8x8xf32> -> vector<2x8x8xf32>
    %cst_49 = arith.constant dense<0xFF800000> : vector<2x8xf32>
    %114 = vector.multi_reduction <maximumf>, %113, %cst_49 [2] : vector<2x8x8xf32> to vector<2x8xf32>
    %115 = vector.shape_cast %114 : vector<2x8xf32> to vector<2x8x1xf32>
    %116 = vector.broadcast %115 : vector<2x8x1xf32> to vector<2x8x8xf32>
    %117 = arith.subf %113, %116 : vector<2x8x8xf32>
    %118 = math.exp %117 : vector<2x8x8xf32>
    %cst_50 = arith.constant dense<0.000000e+00> : vector<2x8xf32>
    %119 = vector.multi_reduction <add>, %118, %cst_50 [2] : vector<2x8x8xf32> to vector<2x8xf32>
    %120 = vector.shape_cast %119 : vector<2x8xf32> to vector<2x8x1xf32>
    %121 = vector.broadcast %120 : vector<2x8x1xf32> to vector<2x8x8xf32>
    %122 = arith.divf %118, %121 : vector<2x8x8xf32>
    %cst_51 = arith.constant dense<0.000000e+00> : vector<2x8x64xf32>
    %123 = tpu.matmul %122, %112, %cst_51 {dimension_numbers = #tpu.dot_dimension_numbers<[2], [1], [1], [2], [0, 0, 0, 1, 1, 2], [0], [0]>} : vector<2x8x8xf32>, vector<2x8x64xf32>, vector<2x8x64xf32> -> vector<2x8x64xf32>
    %124 = vector.shape_cast %123 : vector<2x8x64xf32> to vector<16x64xf32>
    %c0_52 = arith.constant 0 : index
    %c256 = arith.constant 256 : index
    %125 = vector.load %arg13[%c0_52, %c256] : memref<16x512xf32, #tpu.memory_space<vmem>>, vector<16x64xf32>
    tpu.vector_store %arg13[%c0_52, %c256], %124 {strides = array<i32>} : memref<16x512xf32, #tpu.memory_space<vmem>>, vector<16x64xf32>,
    %126 = vector.extract_strided_slice %6 {offsets = [0, 320], sizes = [16, 64], strides = [1, 1]} : vector<16x512xf32> to vector<16x64xf32>
    %cst_53 = arith.constant 1.250000e-01 : f32
    %127 = vector.broadcast %cst_53 : f32 to vector<16x64xf32>
    %128 = arith.mulf %126, %127 : vector<16x64xf32>
    %129 = vector.shape_cast %128 : vector<16x64xf32> to vector<2x8x64xf32>
    %130 = vector.extract_strided_slice %13 {offsets = [0, 320], sizes = [16, 64], strides = [1, 1]} : vector<16x512xf32> to vector<16x64xf32>
    %131 = vector.shape_cast %130 : vector<16x64xf32> to vector<2x8x64xf32>
    %132 = vector.extract_strided_slice %20 {offsets = [0, 320], sizes = [16, 64], strides = [1, 1]} : vector<16x512xf32> to vector<16x64xf32>
    %133 = vector.shape_cast %132 : vector<16x64xf32> to vector<2x8x64xf32>
    %cst_54 = arith.constant dense<0.000000e+00> : vector<2x8x8xf32>
    %134 = tpu.matmul %129, %131, %cst_54 {dimension_numbers = #tpu.dot_dimension_numbers<[2], [2], [1], [1], [0, 0, 0, 1, 1, 1], [0], [0]>} : vector<2x8x64xf32>, vector<2x8x64xf32>, vector<2x8x8xf32> -> vector<2x8x8xf32>
    %cst_55 = arith.constant dense<0xFF800000> : vector<2x8xf32>
    %135 = vector.multi_reduction <maximumf>, %134, %cst_55 [2] : vector<2x8x8xf32> to vector<2x8xf32>
    %136 = vector.shape_cast %135 : vector<2x8xf32> to vector<2x8x1xf32>
    %137 = vector.broadcast %136 : vector<2x8x1xf32> to vector<2x8x8xf32>
    %138 = arith.subf %134, %137 : vector<2x8x8xf32>
    %139 = math.exp %138 : vector<2x8x8xf32>
    %cst_56 = arith.constant dense<0.000000e+00> : vector<2x8xf32>
    %140 = vector.multi_reduction <add>, %139, %cst_56 [2] : vector<2x8x8xf32> to vector<2x8xf32>
    %141 = vector.shape_cast %140 : vector<2x8xf32> to vector<2x8x1xf32>
    %142 = vector.broadcast %141 : vector<2x8x1xf32> to vector<2x8x8xf32>
    %143 = arith.divf %139, %142 : vector<2x8x8xf32>
    %cst_57 = arith.constant dense<0.000000e+00> : vector<2x8x64xf32>
    %144 = tpu.matmul %143, %133, %cst_57 {dimension_numbers = #tpu.dot_dimension_numbers<[2], [1], [1], [2], [0, 0, 0, 1, 1, 2], [0], [0]>} : vector<2x8x8xf32>, vector<2x8x64xf32>, vector<2x8x64xf32> -> vector<2x8x64xf32>
    %145 = vector.shape_cast %144 : vector<2x8x64xf32> to vector<16x64xf32>
    %c0_58 = arith.constant 0 : index
    %c320 = arith.constant 320 : index
    %146 = vector.load %arg13[%c0_58, %c320] : memref<16x512xf32, #tpu.memory_space<vmem>>, vector<16x64xf32>
    tpu.vector_store %arg13[%c0_58, %c320], %145 {strides = array<i32>} : memref<16x512xf32, #tpu.memory_space<vmem>>, vector<16x64xf32>,
    %147 = vector.extract_strided_slice %6 {offsets = [0, 384], sizes = [16, 64], strides = [1, 1]} : vector<16x512xf32> to vector<16x64xf32>
    %cst_59 = arith.constant 1.250000e-01 : f32
    %148 = vector.broadcast %cst_59 : f32 to vector<16x64xf32>
    %149 = arith.mulf %147, %148 : vector<16x64xf32>
    %150 = vector.shape_cast %149 : vector<16x64xf32> to vector<2x8x64xf32>
    %151 = vector.extract_strided_slice %13 {offsets = [0, 384], sizes = [16, 64], strides = [1, 1]} : vector<16x512xf32> to vector<16x64xf32>
    %152 = vector.shape_cast %151 : vector<16x64xf32> to vector<2x8x64xf32>
    %153 = vector.extract_strided_slice %20 {offsets = [0, 384], sizes = [16, 64], strides = [1, 1]} : vector<16x512xf32> to vector<16x64xf32>
    %154 = vector.shape_cast %153 : vector<16x64xf32> to vector<2x8x64xf32>
    %cst_60 = arith.constant dense<0.000000e+00> : vector<2x8x8xf32>
    %155 = tpu.matmul %150, %152, %cst_60 {dimension_numbers = #tpu.dot_dimension_numbers<[2], [2], [1], [1], [0, 0, 0, 1, 1, 1], [0], [0]>} : vector<2x8x64xf32>, vector<2x8x64xf32>, vector<2x8x8xf32> -> vector<2x8x8xf32>
    %cst_61 = arith.constant dense<0xFF800000> : vector<2x8xf32>
    %156 = vector.multi_reduction <maximumf>, %155, %cst_61 [2] : vector<2x8x8xf32> to vector<2x8xf32>
    %157 = vector.shape_cast %156 : vector<2x8xf32> to vector<2x8x1xf32>
    %158 = vector.broadcast %157 : vector<2x8x1xf32> to vector<2x8x8xf32>
    %159 = arith.subf %155, %158 : vector<2x8x8xf32>
    %160 = math.exp %159 : vector<2x8x8xf32>
    %cst_62 = arith.constant dense<0.000000e+00> : vector<2x8xf32>
    %161 = vector.multi_reduction <add>, %160, %cst_62 [2] : vector<2x8x8xf32> to vector<2x8xf32>
    %162 = vector.shape_cast %161 : vector<2x8xf32> to vector<2x8x1xf32>
    %163 = vector.broadcast %162 : vector<2x8x1xf32> to vector<2x8x8xf32>
    %164 = arith.divf %160, %163 : vector<2x8x8xf32>
    %cst_63 = arith.constant dense<0.000000e+00> : vector<2x8x64xf32>
    %165 = tpu.matmul %164, %154, %cst_63 {dimension_numbers = #tpu.dot_dimension_numbers<[2], [1], [1], [2], [0, 0, 0, 1, 1, 2], [0], [0]>} : vector<2x8x8xf32>, vector<2x8x64xf32>, vector<2x8x64xf32> -> vector<2x8x64xf32>
    %166 = vector.shape_cast %165 : vector<2x8x64xf32> to vector<16x64xf32>
    %c0_64 = arith.constant 0 : index
    %c384 = arith.constant 384 : index
    %167 = vector.load %arg13[%c0_64, %c384] : memref<16x512xf32, #tpu.memory_space<vmem>>, vector<16x64xf32>
    tpu.vector_store %arg13[%c0_64, %c384], %166 {strides = array<i32>} : memref<16x512xf32, #tpu.memory_space<vmem>>, vector<16x64xf32>,
    %168 = vector.extract_strided_slice %6 {offsets = [0, 448], sizes = [16, 64], strides = [1, 1]} : vector<16x512xf32> to vector<16x64xf32>
    %cst_65 = arith.constant 1.250000e-01 : f32
    %169 = vector.broadcast %cst_65 : f32 to vector<16x64xf32>
    %170 = arith.mulf %168, %169 : vector<16x64xf32>
    %171 = vector.shape_cast %170 : vector<16x64xf32> to vector<2x8x64xf32>
    %172 = vector.extract_strided_slice %13 {offsets = [0, 448], sizes = [16, 64], strides = [1, 1]} : vector<16x512xf32> to vector<16x64xf32>
    %173 = vector.shape_cast %172 : vector<16x64xf32> to vector<2x8x64xf32>
    %174 = vector.extract_strided_slice %20 {offsets = [0, 448], sizes = [16, 64], strides = [1, 1]} : vector<16x512xf32> to vector<16x64xf32>
    %175 = vector.shape_cast %174 : vector<16x64xf32> to vector<2x8x64xf32>
    %cst_66 = arith.constant dense<0.000000e+00> : vector<2x8x8xf32>
    %176 = tpu.matmul %171, %173, %cst_66 {dimension_numbers = #tpu.dot_dimension_numbers<[2], [2], [1], [1], [0, 0, 0, 1, 1, 1], [0], [0]>} : vector<2x8x64xf32>, vector<2x8x64xf32>, vector<2x8x8xf32> -> vector<2x8x8xf32>
    %cst_67 = arith.constant dense<0xFF800000> : vector<2x8xf32>
    %177 = vector.multi_reduction <maximumf>, %176, %cst_67 [2] : vector<2x8x8xf32> to vector<2x8xf32>
    %178 = vector.shape_cast %177 : vector<2x8xf32> to vector<2x8x1xf32>
    %179 = vector.broadcast %178 : vector<2x8x1xf32> to vector<2x8x8xf32>
    %180 = arith.subf %176, %179 : vector<2x8x8xf32>
    %181 = math.exp %180 : vector<2x8x8xf32>
    %cst_68 = arith.constant dense<0.000000e+00> : vector<2x8xf32>
    %182 = vector.multi_reduction <add>, %181, %cst_68 [2] : vector<2x8x8xf32> to vector<2x8xf32>
    %183 = vector.shape_cast %182 : vector<2x8xf32> to vector<2x8x1xf32>
    %184 = vector.broadcast %183 : vector<2x8x1xf32> to vector<2x8x8xf32>
    %185 = arith.divf %181, %184 : vector<2x8x8xf32>
    %cst_69 = arith.constant dense<0.000000e+00> : vector<2x8x64xf32>
    %186 = tpu.matmul %185, %175, %cst_69 {dimension_numbers = #tpu.dot_dimension_numbers<[2], [1], [1], [2], [0, 0, 0, 1, 1, 2], [0], [0]>} : vector<2x8x8xf32>, vector<2x8x64xf32>, vector<2x8x64xf32> -> vector<2x8x64xf32>
    %187 = vector.shape_cast %186 : vector<2x8x64xf32> to vector<16x64xf32>
    %c0_70 = arith.constant 0 : index
    %c448 = arith.constant 448 : index
    %188 = vector.load %arg13[%c0_70, %c448] : memref<16x512xf32, #tpu.memory_space<vmem>>, vector<16x64xf32>
    tpu.vector_store %arg13[%c0_70, %c448], %187 {strides = array<i32>} : memref<16x512xf32, #tpu.memory_space<vmem>>, vector<16x64xf32>,
    %c0_71 = arith.constant 0 : index
    %c0_72 = arith.constant 0 : index
    %189 = vector.load %arg13[%c0_71, %c0_72] : memref<16x512xf32, #tpu.memory_space<vmem>>, vector<16x512xf32>
    %c0_73 = arith.constant 0 : index
    %c0_74 = arith.constant 0 : index
    %190 = vector.load %arg10[%c0_73, %c0_74] : memref<512x512xf32, #tpu.memory_space<vmem>>, vector<512x512xf32>
    %cst_75 = arith.constant dense<0.000000e+00> : vector<16x512xf32>
    %191 = tpu.matmul %189, %190, %cst_75 {dimension_numbers = #tpu.dot_dimension_numbers<[1], [1], [0], [0], [0, 0, 1, 0], [], []>} : vector<16x512xf32>, vector<512x512xf32>, vector<16x512xf32> -> vector<16x512xf32>
    %c0_i32 = arith.constant 0 : i32
    %192 = arith.cmpi eq, %arg0, %c0_i32 : i32
    %193 = arith.extui %192 : i1 to i32
    %c0_i32_76 = arith.constant 0 : i32
    %194 = arith.cmpi ne, %193, %c0_i32_76 : i32
    scf.if %194 {
      %c0_79 = arith.constant 0 : index
      %c0_80 = arith.constant 0 : index
      %198 = vector.load %arg11[%c0_79, %c0_80] : memref<1x512xf32, #tpu.memory_space<vmem>>, vector<1x512xf32>
      %199 = vector.broadcast %198 : vector<1x512xf32> to vector<16x512xf32>
      %200 = arith.addf %191, %199 : vector<16x512xf32>
      %c0_81 = arith.constant 0 : index
      %c0_82 = arith.constant 0 : index
      %c0_83 = arith.constant 0 : index
      %201 = vector.load %arg12[%c0_81, %c0_82, %c0_83] : memref<1x16x512xf32, #tpu.memory_space<vmem>>, vector<1x16x512xf32>
      %202 = vector.shape_cast %201 : vector<1x16x512xf32> to vector<16x512xf32>
      %203 = vector.shape_cast %200 : vector<16x512xf32> to vector<1x16x512xf32>
      tpu.vector_store %arg12[%c0_81, %c0_82, %c0_83], %203 {strides = array<i32>} : memref<1x16x512xf32, #tpu.memory_space<vmem>>, vector<1x16x512xf32>,
    } else {
    }
    %c0_i32_77 = arith.constant 0 : i32
    %195 = arith.cmpi ne, %arg0, %c0_i32_77 : i32
    %196 = arith.extui %195 : i1 to i32
    %c0_i32_78 = arith.constant 0 : i32
    %197 = arith.cmpi ne, %196, %c0_i32_78 : i32
    scf.if %197 {
      %c0_79 = arith.constant 0 : index
      %c0_80 = arith.constant 0 : index
      %c0_81 = arith.constant 0 : index
      %198 = vector.load %arg12[%c0_79, %c0_80, %c0_81] : memref<1x16x512xf32, #tpu.memory_space<vmem>>, vector<1x16x512xf32>
      %199 = vector.shape_cast %198 : vector<1x16x512xf32> to vector<16x512xf32>
      %200 = vector.shape_cast %191 : vector<16x512xf32> to vector<1x16x512xf32>
      tpu.vector_store %arg12[%c0_79, %c0_80, %c0_81], %200 {strides = array<i32>} : memref<1x16x512xf32, #tpu.memory_space<vmem>>, vector<1x16x512xf32>,
    } else {
    }
    return
  }
  func.func @transform_0(%arg0: i32) -> (i32, i32) {
    %c0_i32 = arith.constant 0 : i32
    %c0_i32_0 = arith.constant 0 : i32
    %c0_i32_1 = arith.constant 0 : i32
    return %c0_i32, %c0_i32_0 : i32, i32
  }
  func.func @transform_1(%arg0: i32) -> (i32, i32) {
    %c0_i32 = arith.constant 0 : i32
    %c0_i32_0 = arith.constant 0 : i32
    %c0_i32_1 = arith.constant 0 : i32
    return %c0_i32, %c0_i32_0 : i32, i32
  }
  func.func @transform_2(%arg0: i32) -> (i32, i32) {
    %c0_i32 = arith.constant 0 : i32
    %c0_i32_0 = arith.constant 0 : i32
    %c0_i32_1 = arith.constant 0 : i32
    return %c0_i32, %c0_i32_0 : i32, i32
  }
  func.func @transform_3(%arg0: i32) -> (i32, i32) {
    %c0_i32 = arith.constant 0 : i32
    %c0_i32_0 = arith.constant 0 : i32
    return %arg0, %c0_i32 : i32, i32
  }
  func.func @transform_4(%arg0: i32) -> (i32, i32) {
    %c1_i32 = arith.constant 1 : i32
    %0 = arith.addi %c1_i32, %arg0 : i32
    %c0_i32 = arith.constant 0 : i32
    %c0_i32_0 = arith.constant 0 : i32
    return %0, %c0_i32 : i32, i32
  }
  func.func @transform_5(%arg0: i32) -> (i32, i32) {
    %c2_i32 = arith.constant 2 : i32
    %0 = arith.addi %c2_i32, %arg0 : i32
    %c0_i32 = arith.constant 0 : i32
    %c0_i32_0 = arith.constant 0 : i32
    return %0, %c0_i32 : i32, i32
  }
  func.func @transform_6(%arg0: i32) -> (i32, i32, i32) {
    %c0_i32 = arith.constant 0 : i32
    %c0_i32_0 = arith.constant 0 : i32
    %c0_i32_1 = arith.constant 0 : i32
    return %arg0, %c0_i32, %c0_i32_0 : i32, i32, i32
  }
  func.func @transform_7(%arg0: i32) -> (i32, i32, i32) {
    %c1_i32 = arith.constant 1 : i32
    %0 = arith.addi %c1_i32, %arg0 : i32
    %c0_i32 = arith.constant 0 : i32
    %c0_i32_0 = arith.constant 0 : i32
    %c0_i32_1 = arith.constant 0 : i32
    return %0, %c0_i32, %c0_i32_0 : i32, i32, i32
  }
  func.func @transform_8(%arg0: i32) -> (i32, i32, i32) {
    %c2_i32 = arith.constant 2 : i32
    %0 = arith.addi %c2_i32, %arg0 : i32
    %c0_i32 = arith.constant 0 : i32
    %c0_i32_0 = arith.constant 0 : i32
    %c0_i32_1 = arith.constant 0 : i32
    return %0, %c0_i32, %c0_i32_0 : i32, i32, i32
  }
  func.func @transform_9(%arg0: i32) -> (i32, i32) {
    %c0_i32 = arith.constant 0 : i32
    %c0_i32_0 = arith.constant 0 : i32
    return %c0_i32, %arg0 : i32, i32
  }
  func.func @transform_10(%arg0: i32) -> (i32, i32) {
    %c0_i32 = arith.constant 0 : i32
    %c0_i32_0 = arith.constant 0 : i32
    %c0_i32_1 = arith.constant 0 : i32
    return %c0_i32, %c0_i32_0 : i32, i32
  }
  func.func @transform_11(%arg0: i32) -> (i32, i32, i32) {
    %c0_i32 = arith.constant 0 : i32
    %c0_i32_0 = arith.constant 0 : i32
    %c0_i32_1 = arith.constant 0 : i32
    return %arg0, %c0_i32, %c0_i32_0 : i32, i32, i32
  }
}

</mosaic_0001>

<llo_original>
// kernel: _mha_forward.1
$region0: #{_mha_forward.1}
  #allocation0 [shape = 'u32[]', space=smem, size = 0x4, offset = 0x4, fixed_abs, tag = 'smem constant byte address 0x4 - core index']
  #allocation1 [shape = 'u32[144,128]{1,0:T(1,128)}', space=vmem, size = 0x12000, scoped, tag = 'internal scratch']
  #allocation2 [shape = 'f32[16,512]{1,0:T(8,128)}', space=vmem, size = 0x8000, scoped, tag = 'scratch operand']
  %s0 = inlined_call_operand.vmem [shape: f32[16,512], index: 0, kind: input, shape index: {}]
  %s1 = inlined_call_operand.vmem [shape: f32[16,512], index: 1, kind: input, shape index: {}]
  %s2 = inlined_call_operand.vmem [shape: f32[16,512], index: 2, kind: input, shape index: {}]
  %s3 = inlined_call_operand.hbm [shape: f32[1536,512], index: 3, kind: input, shape index: {}, may-alias: {3,4,5}]
  %s4 = inlined_call_operand.hbm [shape: f32[1536,512], index: 4, kind: input, shape index: {}, may-alias: {3,4,5}]
  %s5 = inlined_call_operand.hbm [shape: f32[1536,512], index: 5, kind: input, shape index: {}, may-alias: {3,4,5}]
  %s6 = inlined_call_operand.vmem [shape: f32[3,1,512], index: 6, kind: input, shape index: {}, may-alias: {6,7,8}]
  %s7 = inlined_call_operand.vmem [shape: f32[3,1,512], index: 7, kind: input, shape index: {}, may-alias: {6,7,8}]
  %s8 = inlined_call_operand.vmem [shape: f32[3,1,512], index: 8, kind: input, shape index: {}, may-alias: {6,7,8}]
  %s9 = inlined_call_operand.hbm [shape: f32[512,512], index: 9, kind: input, shape index: {}]
  %s10 = inlined_call_operand.hbm [shape: f32[1,512], index: 10, kind: input, shape index: {}]
  %s11 = inlined_call_operand.vmem [shape: f32[1,16,512], index: 11, kind: output, shape index: {}]
  %s12 = sld [smem:[#allocation0]]
  $region82: #{_mha_forward.1} parent=0
    _
  %s14 = ssub.s32 1, %s12
  %s15 = scalar_select 0, %s14, %s12
  $region1: #{_mha_forward.1} parent=0
    #allocation3 [shape = 'u8[1048576]{0}', space=vmem, size = 0x100000, scoped, tag = 'input window, operand 3, single buffered']
    #allocation4 [shape = 's32[1]{0}', space=sflag, size = 0x4, scoped, tag = 'scoped memory for _mha_forward.1']
    #allocation5 [shape = 'u8[1048576]{0}', space=vmem, size = 0x100000, scoped, tag = 'input window, operand 4, single buffered']
    #allocation6 [shape = 's32[1]{0}', space=sflag, size = 0x4, scoped, tag = 'scoped memory for _mha_forward.1']
    #allocation7 [shape = 'u8[1048576]{0}', space=vmem, size = 0x100000, scoped, tag = 'input window, operand 5, single buffered']
    #allocation8 [shape = 'u8[1048576]{0}', space=vmem, size = 0x100000, scoped, tag = 'input window, operand 9, single buffered']
    #allocation9 [shape = 's32[1]{0}', space=sflag, size = 0x4, scoped, tag = 'scoped memory for _mha_forward.1']
    #allocation10 [shape = 'u8[2048]{0}', space=vmem, size = 0x800, scoped, tag = 'input window, operand 10, single buffered']
    %16 = vsyncpa [#allocation4], 0
    %17 = vsyncpa [#allocation6], 0
    %18 = vsyncpa [#allocation9], 0
    // Predicated region
    $region2: #{_mha_forward.1} parent=1 // pred_check
      _
    $region3: #{_mha_forward.1} parent=1 // pred_check_branch
      %20 = sbr.rel (0) target = $region5
    $region4: #{_mha_forward.1} parent=1 // pred_region
      _
    $region5: #{_mha_forward.1} parent=1 // pred_fallthru
      _
    // Predicated region
    $region6: #{_mha_forward.1} parent=1 // pred_check
      _
    $region7: #{_mha_forward.1} parent=1 // pred_check_branch
      %22 = sbr.rel (0) target = $region9
    $region8: #{_mha_forward.1} parent=1 // pred_region
      _
    $region9: #{_mha_forward.1} parent=1 // pred_fallthru
      _
    // Predicated region
    $region10: #{_mha_forward.1} parent=1 // pred_check
      _
    $region11: #{_mha_forward.1} parent=1 // pred_check_branch
      %24 = sbr.rel (0) target = $region13
    $region12: #{_mha_forward.1} parent=1 // pred_region
      _
    $region13: #{_mha_forward.1} parent=1 // pred_fallthru
      _
    // Predicated region
    $region14: #{_mha_forward.1} parent=1 // pred_check
      _
    $region15: #{_mha_forward.1} parent=1 // pred_check_branch
      %26 = sbr.rel (0) target = $region17
    $region16: #{_mha_forward.1} parent=1 // pred_region
      %s28 = ssub.s32 32768, 32768
      %29 = vsyncadd [#allocation4], %s28
      %s30 = sshll.u32 [#allocation3], 4
      %s31 = int_to_ptr.vmem [resolvable:$true] %s30
      %36 = dma.hbm_to_vmem [thread:$0]  %s3, 32768, %s31, [#allocation4], 512, 512, 32
    $region17: #{_mha_forward.1} parent=1 // pred_fallthru
      _
    // Predicated region
    $region18: #{_mha_forward.1} parent=1 // pred_check
      _
    $region19: #{_mha_forward.1} parent=1 // pred_check_branch
      %38 = sbr.rel (0) target = $region21
    $region20: #{_mha_forward.1} parent=1 // pred_region
      %s39 = sadd.s32 0, 1
      %s40 = smul.u32 64, %s39
      %s42 = ssub.s32 32768, 32768
      %43 = vsyncadd [#allocation6], %s42
      %s44 = smul.addr %s40, 4
      %s45 = smul.addr %s44, 128
      %s46 = scalar_lea.hbm %s4, %s45
      %s47 = sshll.u32 [#allocation5], 4
      %s48 = int_to_ptr.vmem [resolvable:$true] %s47
      %53 = dma.hbm_to_vmem [thread:$0]  %s46, 32768, %s48, [#allocation6], 512, 512, 32
    $region21: #{_mha_forward.1} parent=1 // pred_fallthru
      _
    // Predicated region
    $region22: #{_mha_forward.1} parent=1 // pred_check
      _
    $region23: #{_mha_forward.1} parent=1 // pred_check_branch
      %55 = sbr.rel (0) target = $region25
    $region24: #{_mha_forward.1} parent=1 // pred_region
      %s56 = sadd.s32 0, 2
      %s57 = smul.u32 64, %s56
      %s59 = ssub.s32 32768, 32768
      %60 = vsyncadd [#allocation6], %s59
      %s61 = smul.addr %s57, 4
      %s62 = smul.addr %s61, 128
      %s63 = scalar_lea.hbm %s5, %s62
      %s64 = sshll.u32 [#allocation7], 4
      %s65 = int_to_ptr.vmem [resolvable:$true] %s64
      %70 = dma.hbm_to_vmem [thread:$0]  %s63, 32768, %s65, [#allocation6], 512, 512, 32
    $region25: #{_mha_forward.1} parent=1 // pred_fallthru
      _
    // Predicated region
    $region26: #{_mha_forward.1} parent=1 // pred_check
      _
    $region27: #{_mha_forward.1} parent=1 // pred_check_branch
      %72 = sbr.rel (0) target = $region29
    $region28: #{_mha_forward.1} parent=1 // pred_region
      _
    $region29: #{_mha_forward.1} parent=1 // pred_fallthru
      _
    // Predicated region
    $region30: #{_mha_forward.1} parent=1 // pred_check
      _
    $region31: #{_mha_forward.1} parent=1 // pred_check_branch
      %74 = sbr.rel (0) target = $region33
    $region32: #{_mha_forward.1} parent=1 // pred_region
      %s75 = sadd.s32 0, 1
      %p76 = scmp.lt.s32.totalorder %s75, 2
      %s77 = scalar_select %p76, %s75, 2
      %s78 = smul.addr %s77, 4
      %s79 = scalar_lea.vmem %s7, %s78
      %s80 = sadd.s32 0, 1
    $region33: #{_mha_forward.1} parent=1 // pred_fallthru
      _
    // Predicated region
    $region34: #{_mha_forward.1} parent=1 // pred_check
      _
    $region35: #{_mha_forward.1} parent=1 // pred_check_branch
      %82 = sbr.rel (0) target = $region37
    $region36: #{_mha_forward.1} parent=1 // pred_region
      %s83 = sadd.s32 0, 2
      %p84 = scmp.lt.s32.totalorder %s83, 2
      %s85 = scalar_select %p84, %s83, 2
      %s86 = smul.addr %s85, 4
      %s87 = scalar_lea.vmem %s8, %s86
      %s88 = sadd.s32 0, 2
    $region37: #{_mha_forward.1} parent=1 // pred_fallthru
      _
    // Predicated region
    $region38: #{_mha_forward.1} parent=1 // pred_check
      _
    $region39: #{_mha_forward.1} parent=1 // pred_check_branch
      %90 = sbr.rel (0) target = $region41
    $region40: #{_mha_forward.1} parent=1 // pred_region
      %s92 = ssub.s32 32768, 32768
      %93 = vsyncadd [#allocation9], %s92
      %s94 = sshll.u32 [#allocation8], 4
      %s95 = int_to_ptr.vmem [resolvable:$true] %s94
      %100 = dma.hbm_to_vmem [thread:$0]  %s9, 32768, %s95, [#allocation9], 512, 512, 32
    $region41: #{_mha_forward.1} parent=1 // pred_fallthru
      _
    // Predicated region
    $region42: #{_mha_forward.1} parent=1 // pred_check
      _
    $region43: #{_mha_forward.1} parent=1 // pred_check_branch
      %102 = sbr.rel (0) target = $region45
    $region44: #{_mha_forward.1} parent=1 // pred_region
      %s104 = ssub.s32 64, 64
      %105 = vsyncadd [#allocation9], %s104
      %s107 = sshll.u32 [#allocation10], 4
      %s108 = int_to_ptr.vmem [resolvable:$true] %s107
      %110 = dma.hbm_to_vmem [thread:$0]  %s10, 64, %s108, [#allocation9]
    $region45: #{_mha_forward.1} parent=1 // pred_fallthru
      _
    // Predicated region
    $region46: #{_mha_forward.1} parent=1 // pred_check
      _
    $region47: #{_mha_forward.1} parent=1 // pred_check_branch
      %112 = sbr.rel (0) target = $region49
    $region48: #{_mha_forward.1} parent=1 // pred_region
      %113 = dma.done [#allocation4], 32768
    $region49: #{_mha_forward.1} parent=1 // pred_fallthru
      _
    // Predicated region
    $region50: #{_mha_forward.1} parent=1 // pred_check
      _
    $region51: #{_mha_forward.1} parent=1 // pred_check_branch
      %115 = sbr.rel (0) target = $region53
    $region52: #{_mha_forward.1} parent=1 // pred_region
      %116 = dma.done [#allocation6], 32768
    $region53: #{_mha_forward.1} parent=1 // pred_fallthru
      _
    // Predicated region
    $region54: #{_mha_forward.1} parent=1 // pred_check
      _
    $region55: #{_mha_forward.1} parent=1 // pred_check_branch
      %118 = sbr.rel (0) target = $region57
    $region56: #{_mha_forward.1} parent=1 // pred_region
      %119 = dma.done [#allocation6], 32768
    $region57: #{_mha_forward.1} parent=1 // pred_fallthru
      _
    // Predicated region
    $region58: #{_mha_forward.1} parent=1 // pred_check
      _
    $region59: #{_mha_forward.1} parent=1 // pred_check_branch
      %121 = sbr.rel (0) target = $region61
    $region60: #{_mha_forward.1} parent=1 // pred_region
      %122 = dma.done [#allocation9], 32768
    $region61: #{_mha_forward.1} parent=1 // pred_fallthru
      _
    // Predicated region
    $region62: #{_mha_forward.1} parent=1 // pred_check
      _
    $region63: #{_mha_forward.1} parent=1 // pred_check_branch
      %124 = sbr.rel (0) target = $region65
    $region64: #{_mha_forward.1} parent=1 // pred_region
      %125 = dma.done [#allocation9], 64
    $region65: #{_mha_forward.1} parent=1 // pred_fallthru
      _
    %s126 = sadd.s32 0, 1
    %p127 = scmp.lt.s32.totalorder %s126, 2
    %s128 = scalar_select %p127, %s126, 2
    %s129 = smul.addr %s128, 4
    %s130 = scalar_lea.vmem %s7, %s129
    %s131 = sadd.s32 0, 2
    %p132 = scmp.lt.s32.totalorder %s131, 2
    %s133 = scalar_select %p132, %s131, 2
    %s134 = smul.addr %s133, 4
    %s135 = scalar_lea.vmem %s8, %s134
    %s136 = sadd.s32 0, 1
    %s137 = smul.u32 64, %s136
    %s138 = sadd.s32 0, 2
    %s139 = smul.u32 64, %s138
    %s140 = sadd.s32 0, 1
    %p141 = scmp.lt.s32.totalorder %s140, 2
    %s142 = scalar_select %p141, %s140, 2
    %s143 = smul.addr %s142, 4
    %s144 = scalar_lea.vmem %s7, %s143
    %s145 = sadd.s32 0, 1
    %s146 = sadd.s32 0, 2
    %p147 = scmp.lt.s32.totalorder %s146, 2
    %s148 = scalar_select %p147, %s146, 2
    %s149 = smul.addr %s148, 4
    %s150 = scalar_lea.vmem %s8, %s149
    %s151 = sadd.s32 0, 2
    %v152 = vld [vmem:[%s0] sm:$0xff]
    %v153 = vld [vmem:[%s0 + $0x8] sm:$0xff]
    %v154 = vld [vmem:[%s0 + $0x10] sm:$0xff]
    %v155 = vld [vmem:[%s0 + $0x18] sm:$0xff]
    %v156 = vld [vmem:[%s0 + $0x20] sm:$0xff]
    %v157 = vld [vmem:[%s0 + $0x28] sm:$0xff]
    %v158 = vld [vmem:[%s0 + $0x30] sm:$0xff]
    %v159 = vld [vmem:[%s0 + $0x38] sm:$0xff]
    %v160 = vld [vmem:[#allocation3] sm:$0xff]
    %v161 = vld [vmem:[#allocation3 + $0x8] sm:$0xff]
    %v162 = vld [vmem:[#allocation3 + $0x10] sm:$0xff]
    %v163 = vld [vmem:[#allocation3 + $0x18] sm:$0xff]
    %v164 = vld [vmem:[#allocation3 + $0x20] sm:$0xff]
    %v165 = vld [vmem:[#allocation3 + $0x28] sm:$0xff]
    %v166 = vld [vmem:[#allocation3 + $0x30] sm:$0xff]
    %v167 = vld [vmem:[#allocation3 + $0x38] sm:$0xff]
    %v168 = vld [vmem:[#allocation3 + $0x40] sm:$0xff]
    %v169 = vld [vmem:[#allocation3 + $0x48] sm:$0xff]
    %v170 = vld [vmem:[#allocation3 + $0x50] sm:$0xff]
    %v171 = vld [vmem:[#allocation3 + $0x58] sm:$0xff]
    %v172 = vld [vmem:[#allocation3 + $0x60] sm:$0xff]
    %v173 = vld [vmem:[#allocation3 + $0x68] sm:$0xff]
    %v174 = vld [vmem:[#allocation3 + $0x70] sm:$0xff]
    %v175 = vld [vmem:[#allocation3 + $0x78] sm:$0xff]
    %v176 = vld [vmem:[#allocation3 + $0x80] sm:$0xff]
    %v177 = vld [vmem:[#allocation3 + $0x88] sm:$0xff]
    %v178 = vld [vmem:[#allocation3 + $0x90] sm:$0xff]
    %v179 = vld [vmem:[#allocation3 + $0x98] sm:$0xff]
    %v180 = vld [vmem:[#allocation3 + $0xa0] sm:$0xff]
    %v181 = vld [vmem:[#allocation3 + $0xa8] sm:$0xff]
    %v182 = vld [vmem:[#allocation3 + $0xb0] sm:$0xff]
    %v183 = vld [vmem:[#allocation3 + $0xb8] sm:$0xff]
    %v184 = vld [vmem:[#allocation3 + $0xc0] sm:$0xff]
    %v185 = vld [vmem:[#allocation3 + $0xc8] sm:$0xff]
    %v186 = vld [vmem:[#allocation3 + $0xd0] sm:$0xff]
    %v187 = vld [vmem:[#allocation3 + $0xd8] sm:$0xff]
    %v188 = vld [vmem:[#allocation3 + $0xe0] sm:$0xff]
    %v189 = vld [vmem:[#allocation3 + $0xe8] sm:$0xff]
    %v190 = vld [vmem:[#allocation3 + $0xf0] sm:$0xff]
    %v191 = vld [vmem:[#allocation3 + $0xf8] sm:$0xff]
    %v192 = vld [vmem:[#allocation3 + $0x100] sm:$0xff]
    %v193 = vld [vmem:[#allocation3 + $0x108] sm:$0xff]
    %v194 = vld [vmem:[#allocation3 + $0x110] sm:$0xff]
    %v195 = vld [vmem:[#allocation3 + $0x118] sm:$0xff]
    %v196 = vld [vmem:[#allocation3 + $0x120] sm:$0xff]
    %v197 = vld [vmem:[#allocation3 + $0x128] sm:$0xff]
    %v198 = vld [vmem:[#allocation3 + $0x130] sm:$0xff]
    %v199 = vld [vmem:[#allocation3 + $0x138] sm:$0xff]
    %v200 = vld [vmem:[#allocation3 + $0x140] sm:$0xff]
    %v201 = vld [vmem:[#allocation3 + $0x148] sm:$0xff]
    %v202 = vld [vmem:[#allocation3 + $0x150] sm:$0xff]
    %v203 = vld [vmem:[#allocation3 + $0x158] sm:$0xff]
    %v204 = vld [vmem:[#allocation3 + $0x160] sm:$0xff]
    %v205 = vld [vmem:[#allocation3 + $0x168] sm:$0xff]
    %v206 = vld [vmem:[#allocation3 + $0x170] sm:$0xff]
    %v207 = vld [vmem:[#allocation3 + $0x178] sm:$0xff]
    %v208 = vld [vmem:[#allocation3 + $0x180] sm:$0xff]
    %v209 = vld [vmem:[#allocation3 + $0x188] sm:$0xff]
    %v210 = vld [vmem:[#allocation3 + $0x190] sm:$0xff]
    %v211 = vld [vmem:[#allocation3 + $0x198] sm:$0xff]
    %v212 = vld [vmem:[#allocation3 + $0x1a0] sm:$0xff]
    %v213 = vld [vmem:[#allocation3 + $0x1a8] sm:$0xff]
    %v214 = vld [vmem:[#allocation3 + $0x1b0] sm:$0xff]
    %v215 = vld [vmem:[#allocation3 + $0x1b8] sm:$0xff]
    %v216 = vld [vmem:[#allocation3 + $0x1c0] sm:$0xff]
    %v217 = vld [vmem:[#allocation3 + $0x1c8] sm:$0xff]
    %v218 = vld [vmem:[#allocation3 + $0x1d0] sm:$0xff]
    %v219 = vld [vmem:[#allocation3 + $0x1d8] sm:$0xff]
    %v220 = vld [vmem:[#allocation3 + $0x1e0] sm:$0xff]
    %v221 = vld [vmem:[#allocation3 + $0x1e8] sm:$0xff]
    %v222 = vld [vmem:[#allocation3 + $0x1f0] sm:$0xff]
    %v223 = vld [vmem:[#allocation3 + $0x1f8] sm:$0xff]
    %v224 = vld [vmem:[#allocation3 + $0x200] sm:$0xff]
    %v225 = vld [vmem:[#allocation3 + $0x208] sm:$0xff]
    %v226 = vld [vmem:[#allocation3 + $0x210] sm:$0xff]
    %v227 = vld [vmem:[#allocation3 + $0x218] sm:$0xff]
    %v228 = vld [vmem:[#allocation3 + $0x220] sm:$0xff]
    %v229 = vld [vmem:[#allocation3 + $0x228] sm:$0xff]
    %v230 = vld [vmem:[#allocation3 + $0x230] sm:$0xff]
    %v231 = vld [vmem:[#allocation3 + $0x238] sm:$0xff]
    %v232 = vld [vmem:[#allocation3 + $0x240] sm:$0xff]
    %v233 = vld [vmem:[#allocation3 + $0x248] sm:$0xff]
    %v234 = vld [vmem:[#allocation3 + $0x250] sm:$0xff]
    %v235 = vld [vmem:[#allocation3 + $0x258] sm:$0xff]
    %v236 = vld [vmem:[#allocation3 + $0x260] sm:$0xff]
    %v237 = vld [vmem:[#allocation3 + $0x268] sm:$0xff]
    %v238 = vld [vmem:[#allocation3 + $0x270] sm:$0xff]
    %v239 = vld [vmem:[#allocation3 + $0x278] sm:$0xff]
    %v240 = vld [vmem:[#allocation3 + $0x280] sm:$0xff]
    %v241 = vld [vmem:[#allocation3 + $0x288] sm:$0xff]
    %v242 = vld [vmem:[#allocation3 + $0x290] sm:$0xff]
    %v243 = vld [vmem:[#allocation3 + $0x298] sm:$0xff]
    %v244 = vld [vmem:[#allocation3 + $0x2a0] sm:$0xff]
    %v245 = vld [vmem:[#allocation3 + $0x2a8] sm:$0xff]
    %v246 = vld [vmem:[#allocation3 + $0x2b0] sm:$0xff]
    %v247 = vld [vmem:[#allocation3 + $0x2b8] sm:$0xff]
    %v248 = vld [vmem:[#allocation3 + $0x2c0] sm:$0xff]
    %v249 = vld [vmem:[#allocation3 + $0x2c8] sm:$0xff]
    %v250 = vld [vmem:[#allocation3 + $0x2d0] sm:$0xff]
    %v251 = vld [vmem:[#allocation3 + $0x2d8] sm:$0xff]
    %v252 = vld [vmem:[#allocation3 + $0x2e0] sm:$0xff]
    %v253 = vld [vmem:[#allocation3 + $0x2e8] sm:$0xff]
    %v254 = vld [vmem:[#allocation3 + $0x2f0] sm:$0xff]
    %v255 = vld [vmem:[#allocation3 + $0x2f8] sm:$0xff]
    %v256 = vld [vmem:[#allocation3 + $0x300] sm:$0xff]
    %v257 = vld [vmem:[#allocation3 + $0x308] sm:$0xff]
    %v258 = vld [vmem:[#allocation3 + $0x310] sm:$0xff]
    %v259 = vld [vmem:[#allocation3 + $0x318] sm:$0xff]
    %v260 = vld [vmem:[#allocation3 + $0x320] sm:$0xff]
    %v261 = vld [vmem:[#allocation3 + $0x328] sm:$0xff]
    %v262 = vld [vmem:[#allocation3 + $0x330] sm:$0xff]
    %v263 = vld [vmem:[#allocation3 + $0x338] sm:$0xff]
    %v264 = vld [vmem:[#allocation3 + $0x340] sm:$0xff]
    %v265 = vld [vmem:[#allocation3 + $0x348] sm:$0xff]
    %v266 = vld [vmem:[#allocation3 + $0x350] sm:$0xff]
    %v267 = vld [vmem:[#allocation3 + $0x358] sm:$0xff]
    %v268 = vld [vmem:[#allocation3 + $0x360] sm:$0xff]
    %v269 = vld [vmem:[#allocation3 + $0x368] sm:$0xff]
    %v270 = vld [vmem:[#allocation3 + $0x370] sm:$0xff]
    %v271 = vld [vmem:[#allocation3 + $0x378] sm:$0xff]
    %v272 = vld [vmem:[#allocation3 + $0x380] sm:$0xff]
    %v273 = vld [vmem:[#allocation3 + $0x388] sm:$0xff]
    %v274 = vld [vmem:[#allocation3 + $0x390] sm:$0xff]
    %v275 = vld [vmem:[#allocation3 + $0x398] sm:$0xff]
    %v276 = vld [vmem:[#allocation3 + $0x3a0] sm:$0xff]
    %v277 = vld [vmem:[#allocation3 + $0x3a8] sm:$0xff]
    %v278 = vld [vmem:[#allocation3 + $0x3b0] sm:$0xff]
    %v279 = vld [vmem:[#allocation3 + $0x3b8] sm:$0xff]
    %v280 = vld [vmem:[#allocation3 + $0x3c0] sm:$0xff]
    %v281 = vld [vmem:[#allocation3 + $0x3c8] sm:$0xff]
    %v282 = vld [vmem:[#allocation3 + $0x3d0] sm:$0xff]
    %v283 = vld [vmem:[#allocation3 + $0x3d8] sm:$0xff]
    %v284 = vld [vmem:[#allocation3 + $0x3e0] sm:$0xff]
    %v285 = vld [vmem:[#allocation3 + $0x3e8] sm:$0xff]
    %v286 = vld [vmem:[#allocation3 + $0x3f0] sm:$0xff]
    %v287 = vld [vmem:[#allocation3 + $0x3f8] sm:$0xff]
    %v288 = vld [vmem:[#allocation3 + $0x400] sm:$0xff]
    %v289 = vld [vmem:[#allocation3 + $0x408] sm:$0xff]
    %v290 = vld [vmem:[#allocation3 + $0x410] sm:$0xff]
    %v291 = vld [vmem:[#allocation3 + $0x418] sm:$0xff]
    %v292 = vld [vmem:[#allocation3 + $0x420] sm:$0xff]
    %v293 = vld [vmem:[#allocation3 + $0x428] sm:$0xff]
    %v294 = vld [vmem:[#allocation3 + $0x430] sm:$0xff]
    %v295 = vld [vmem:[#allocation3 + $0x438] sm:$0xff]
    %v296 = vld [vmem:[#allocation3 + $0x440] sm:$0xff]
    %v297 = vld [vmem:[#allocation3 + $0x448] sm:$0xff]
    %v298 = vld [vmem:[#allocation3 + $0x450] sm:$0xff]
    %v299 = vld [vmem:[#allocation3 + $0x458] sm:$0xff]
    %v300 = vld [vmem:[#allocation3 + $0x460] sm:$0xff]
    %v301 = vld [vmem:[#allocation3 + $0x468] sm:$0xff]
    %v302 = vld [vmem:[#allocation3 + $0x470] sm:$0xff]
    %v303 = vld [vmem:[#allocation3 + $0x478] sm:$0xff]
    %v304 = vld [vmem:[#allocation3 + $0x480] sm:$0xff]
    %v305 = vld [vmem:[#allocation3 + $0x488] sm:$0xff]
    %v306 = vld [vmem:[#allocation3 + $0x490] sm:$0xff]
    %v307 = vld [vmem:[#allocation3 + $0x498] sm:$0xff]
    %v308 = vld [vmem:[#allocation3 + $0x4a0] sm:$0xff]
    %v309 = vld [vmem:[#allocation3 + $0x4a8] sm:$0xff]
    %v310 = vld [vmem:[#allocation3 + $0x4b0] sm:$0xff]
    %v311 = vld [vmem:[#allocation3 + $0x4b8] sm:$0xff]
    %v312 = vld [vmem:[#allocation3 + $0x4c0] sm:$0xff]
    %v313 = vld [vmem:[#allocation3 + $0x4c8] sm:$0xff]
    %v314 = vld [vmem:[#allocation3 + $0x4d0] sm:$0xff]
    %v315 = vld [vmem:[#allocation3 + $0x4d8] sm:$0xff]
    %v316 = vld [vmem:[#allocation3 + $0x4e0] sm:$0xff]
    %v317 = vld [vmem:[#allocation3 + $0x4e8] sm:$0xff]
    %v318 = vld [vmem:[#allocation3 + $0x4f0] sm:$0xff]
    %v319 = vld [vmem:[#allocation3 + $0x4f8] sm:$0xff]
    %v320 = vld [vmem:[#allocation3 + $0x500] sm:$0xff]
    %v321 = vld [vmem:[#allocation3 + $0x508] sm:$0xff]
    %v322 = vld [vmem:[#allocation3 + $0x510] sm:$0xff]
    %v323 = vld [vmem:[#allocation3 + $0x518] sm:$0xff]
    %v324 = vld [vmem:[#allocation3 + $0x520] sm:$0xff]
    %v325 = vld [vmem:[#allocation3 + $0x528] sm:$0xff]
    %v326 = vld [vmem:[#allocation3 + $0x530] sm:$0xff]
    %v327 = vld [vmem:[#allocation3 + $0x538] sm:$0xff]
    %v328 = vld [vmem:[#allocation3 + $0x540] sm:$0xff]
    %v329 = vld [vmem:[#allocation3 + $0x548] sm:$0xff]
    %v330 = vld [vmem:[#allocation3 + $0x550] sm:$0xff]
    %v331 = vld [vmem:[#allocation3 + $0x558] sm:$0xff]
    %v332 = vld [vmem:[#allocation3 + $0x560] sm:$0xff]
    %v333 = vld [vmem:[#allocation3 + $0x568] sm:$0xff]
    %v334 = vld [vmem:[#allocation3 + $0x570] sm:$0xff]
    %v335 = vld [vmem:[#allocation3 + $0x578] sm:$0xff]
    %v336 = vld [vmem:[#allocation3 + $0x580] sm:$0xff]
    %v337 = vld [vmem:[#allocation3 + $0x588] sm:$0xff]
    %v338 = vld [vmem:[#allocation3 + $0x590] sm:$0xff]
    %v339 = vld [vmem:[#allocation3 + $0x598] sm:$0xff]
    %v340 = vld [vmem:[#allocation3 + $0x5a0] sm:$0xff]
    %v341 = vld [vmem:[#allocation3 + $0x5a8] sm:$0xff]
    %v342 = vld [vmem:[#allocation3 + $0x5b0] sm:$0xff]
    %v343 = vld [vmem:[#allocation3 + $0x5b8] sm:$0xff]
    %v344 = vld [vmem:[#allocation3 + $0x5c0] sm:$0xff]
    %v345 = vld [vmem:[#allocation3 + $0x5c8] sm:$0xff]
    %v346 = vld [vmem:[#allocation3 + $0x5d0] sm:$0xff]
    %v347 = vld [vmem:[#allocation3 + $0x5d8] sm:$0xff]
    %v348 = vld [vmem:[#allocation3 + $0x5e0] sm:$0xff]
    %v349 = vld [vmem:[#allocation3 + $0x5e8] sm:$0xff]
    %v350 = vld [vmem:[#allocation3 + $0x5f0] sm:$0xff]
    %v351 = vld [vmem:[#allocation3 + $0x5f8] sm:$0xff]
    %v352 = vld [vmem:[#allocation3 + $0x600] sm:$0xff]
    %v353 = vld [vmem:[#allocation3 + $0x608] sm:$0xff]
    %v354 = vld [vmem:[#allocation3 + $0x610] sm:$0xff]
    %v355 = vld [vmem:[#allocation3 + $0x618] sm:$0xff]
    %v356 = vld [vmem:[#allocation3 + $0x620] sm:$0xff]
    %v357 = vld [vmem:[#allocation3 + $0x628] sm:$0xff]
    %v358 = vld [vmem:[#allocation3 + $0x630] sm:$0xff]
    %v359 = vld [vmem:[#allocation3 + $0x638] sm:$0xff]
    %v360 = vld [vmem:[#allocation3 + $0x640] sm:$0xff]
    %v361 = vld [vmem:[#allocation3 + $0x648] sm:$0xff]
    %v362 = vld [vmem:[#allocation3 + $0x650] sm:$0xff]
    %v363 = vld [vmem:[#allocation3 + $0x658] sm:$0xff]
    %v364 = vld [vmem:[#allocation3 + $0x660] sm:$0xff]
    %v365 = vld [vmem:[#allocation3 + $0x668] sm:$0xff]
    %v366 = vld [vmem:[#allocation3 + $0x670] sm:$0xff]
    %v367 = vld [vmem:[#allocation3 + $0x678] sm:$0xff]
    %v368 = vld [vmem:[#allocation3 + $0x680] sm:$0xff]
    %v369 = vld [vmem:[#allocation3 + $0x688] sm:$0xff]
    %v370 = vld [vmem:[#allocation3 + $0x690] sm:$0xff]
    %v371 = vld [vmem:[#allocation3 + $0x698] sm:$0xff]
    %v372 = vld [vmem:[#allocation3 + $0x6a0] sm:$0xff]
    %v373 = vld [vmem:[#allocation3 + $0x6a8] sm:$0xff]
    %v374 = vld [vmem:[#allocation3 + $0x6b0] sm:$0xff]
    %v375 = vld [vmem:[#allocation3 + $0x6b8] sm:$0xff]
    %v376 = vld [vmem:[#allocation3 + $0x6c0] sm:$0xff]
    %v377 = vld [vmem:[#allocation3 + $0x6c8] sm:$0xff]
    %v378 = vld [vmem:[#allocation3 + $0x6d0] sm:$0xff]
    %v379 = vld [vmem:[#allocation3 + $0x6d8] sm:$0xff]
    %v380 = vld [vmem:[#allocation3 + $0x6e0] sm:$0xff]
    %v381 = vld [vmem:[#allocation3 + $0x6e8] sm:$0xff]
    %v382 = vld [vmem:[#allocation3 + $0x6f0] sm:$0xff]
    %v383 = vld [vmem:[#allocation3 + $0x6f8] sm:$0xff]
    %v384 = vld [vmem:[#allocation3 + $0x700] sm:$0xff]
    %v385 = vld [vmem:[#allocation3 + $0x708] sm:$0xff]
    %v386 = vld [vmem:[#allocation3 + $0x710] sm:$0xff]
    %v387 = vld [vmem:[#allocation3 + $0x718] sm:$0xff]
    %v388 = vld [vmem:[#allocation3 + $0x720] sm:$0xff]
    %v389 = vld [vmem:[#allocation3 + $0x728] sm:$0xff]
    %v390 = vld [vmem:[#allocation3 + $0x730] sm:$0xff]
    %v391 = vld [vmem:[#allocation3 + $0x738] sm:$0xff]
    %v392 = vld [vmem:[#allocation3 + $0x740] sm:$0xff]
    %v393 = vld [vmem:[#allocation3 + $0x748] sm:$0xff]
    %v394 = vld [vmem:[#allocation3 + $0x750] sm:$0xff]
    %v395 = vld [vmem:[#allocation3 + $0x758] sm:$0xff]
    %v396 = vld [vmem:[#allocation3 + $0x760] sm:$0xff]
    %v397 = vld [vmem:[#allocation3 + $0x768] sm:$0xff]
    %v398 = vld [vmem:[#allocation3 + $0x770] sm:$0xff]
    %v399 = vld [vmem:[#allocation3 + $0x778] sm:$0xff]
    %v400 = vld [vmem:[#allocation3 + $0x780] sm:$0xff]
    %v401 = vld [vmem:[#allocation3 + $0x788] sm:$0xff]
    %v402 = vld [vmem:[#allocation3 + $0x790] sm:$0xff]
    %v403 = vld [vmem:[#allocation3 + $0x798] sm:$0xff]
    %v404 = vld [vmem:[#allocation3 + $0x7a0] sm:$0xff]
    %v405 = vld [vmem:[#allocation3 + $0x7a8] sm:$0xff]
    %v406 = vld [vmem:[#allocation3 + $0x7b0] sm:$0xff]
    %v407 = vld [vmem:[#allocation3 + $0x7b8] sm:$0xff]
    %v408 = vld [vmem:[#allocation3 + $0x7c0] sm:$0xff]
    %v409 = vld [vmem:[#allocation3 + $0x7c8] sm:$0xff]
    %v410 = vld [vmem:[#allocation3 + $0x7d0] sm:$0xff]
    %v411 = vld [vmem:[#allocation3 + $0x7d8] sm:$0xff]
    %v412 = vld [vmem:[#allocation3 + $0x7e0] sm:$0xff]
    %v413 = vld [vmem:[#allocation3 + $0x7e8] sm:$0xff]
    %v414 = vld [vmem:[#allocation3 + $0x7f0] sm:$0xff]
    %v415 = vld [vmem:[#allocation3 + $0x7f8] sm:$0xff]
    %v416 = vld [vmem:[%s6] sm:$0xf]
    %v418 = vlaneseq
    %v419 = vshrl.u32 %v418, 7
    %v420 = vsub.s32 0, %v419
    %v421 = vrot.slane %v416, %v420
    %v422 = vlaneseq
    %v423 = vshrl.u32 %v422, 7
    %v424 = vsub.s32 1, %v423
    %v425 = vrot.slane %v416, %v424
    %v426 = vlaneseq
    %v427 = vshrl.u32 %v426, 7
    %v428 = vsub.s32 2, %v427
    %v429 = vrot.slane %v416, %v428
    %v430 = vlaneseq
    %v431 = vshrl.u32 %v430, 7
    %v432 = vsub.s32 3, %v431
    %v433 = vrot.slane %v416, %v432
    %438 = vmatprep.subr.mxu0 %v161
    %439 = vmatpush1.xpose.msra.mxu0 %v160
    %440 = vmatprep.subr.mxu0 %v165
    %441 = vmatpush1.xpose.msra.mxu0 %v164
    %442 = vmatprep.subr.mxu0 %v169
    %443 = vmatpush1.xpose.msra.mxu0 %v168
    %444 = vmatprep.subr.mxu0 %v173
    %445 = vmatpush1.xpose.msra.mxu0 %v172
    %446 = vmatprep.subr.mxu0 %v177
    %447 = vmatpush1.xpose.msra.mxu0 %v176
    %448 = vmatprep.subr.mxu0 %v181
    %449 = vmatpush1.xpose.msra.mxu0 %v180
    %450 = vmatprep.subr.mxu0 %v185
    %451 = vmatpush1.xpose.msra.mxu0 %v184
    %452 = vmatprep.subr.mxu0 %v189
    %453 = vmatpush1.xpose.msra.mxu0 %v188
    %454 = vmatprep.subr.mxu0 %v193
    %455 = vmatpush1.xpose.msra.mxu0 %v192
    %456 = vmatprep.subr.mxu0 %v197
    %457 = vmatpush1.xpose.msra.mxu0 %v196
    %458 = vmatprep.subr.mxu0 %v201
    %459 = vmatpush1.xpose.msra.mxu0 %v200
    %460 = vmatprep.subr.mxu0 %v205
    %461 = vmatpush1.xpose.msra.mxu0 %v204
    %462 = vmatprep.subr.mxu0 %v209
    %463 = vmatpush1.xpose.msra.mxu0 %v208
    %464 = vmatprep.subr.mxu0 %v213
    %465 = vmatpush1.xpose.msra.mxu0 %v212
    %466 = vmatprep.subr.mxu0 %v217
    %467 = vmatpush1.xpose.msra.mxu0 %v216
    %468 = vmatprep.subr.mxu0 %v221
    %469 = vmatpush1.xpose.msra.mxu0 %v220
    %470 = vmatprep.subr.mxu0 %v225
    %471 = vmatpush1.xpose.msra.mxu0 %v224
    %472 = vmatprep.subr.mxu0 %v229
    %473 = vmatpush1.xpose.msra.mxu0 %v228
    %474 = vmatprep.subr.mxu0 %v233
    %475 = vmatpush1.xpose.msra.mxu0 %v232
    %476 = vmatprep.subr.mxu0 %v237
    %477 = vmatpush1.xpose.msra.mxu0 %v236
    %478 = vmatprep.subr.mxu0 %v241
    %479 = vmatpush1.xpose.msra.mxu0 %v240
    %480 = vmatprep.subr.mxu0 %v245
    %481 = vmatpush1.xpose.msra.mxu0 %v244
    %482 = vmatprep.subr.mxu0 %v249
    %483 = vmatpush1.xpose.msra.mxu0 %v248
    %484 = vmatprep.subr.mxu0 %v253
    %485 = vmatpush1.xpose.msra.mxu0 %v252
    %486 = vmatprep.subr.mxu0 %v257
    %487 = vmatpush1.xpose.msra.mxu0 %v256
    %488 = vmatprep.subr.mxu0 %v261
    %489 = vmatpush1.xpose.msra.mxu0 %v260
    %490 = vmatprep.subr.mxu0 %v265
    %491 = vmatpush1.xpose.msra.mxu0 %v264
    %492 = vmatprep.subr.mxu0 %v269
    %493 = vmatpush1.xpose.msra.mxu0 %v268
    %494 = vmatprep.subr.mxu0 %v273
    %495 = vmatpush1.xpose.msra.mxu0 %v272
    %496 = vmatprep.subr.mxu0 %v277
    %497 = vmatpush1.xpose.msra.mxu0 %v276
    %498 = vmatprep.subr.mxu0 %v281
    %499 = vmatpush1.xpose.msra.mxu0 %v280
    %500 = vmatprep.subr.mxu0 %v285
    %501 = vmatpush1.xpose.msra.mxu0 %v284
    %502 = vmatprep.mubr.f32.mxu0 %v153
    %503 = vmatmul.mubr.f32.gmra.mrb[0].mxu0 %v152
    %v504 = vpop.f32.mrb[0].mxu0
    %v505 = vadd.f32 %v421, %v504
    %v506 = vpop.f32.mrb[0].mxu0
    %v507 = vadd.f32 %v425, %v506
    %508 = vmatprep.mubr.f32.mxu0 %v157
    %509 = vmatmul.mubr.f32.gmra.mrb[0].mxu0 %v156
    %v510 = vpop.f32.mrb[0].mxu0
    %v511 = vadd.f32 %v421, %v510
    %v512 = vpop.f32.mrb[0].mxu0
    %v513 = vadd.f32 %v425, %v512
    %514 = vdwg.mxu0
    %515 = vmatprep.subr.mxu0 %v163
    %516 = vmatpush1.xpose.msra.mxu0 %v162
    %517 = vmatprep.subr.mxu0 %v167
    %518 = vmatpush1.xpose.msra.mxu0 %v166
    %519 = vmatprep.subr.mxu0 %v171
    %520 = vmatpush1.xpose.msra.mxu0 %v170
    %521 = vmatprep.subr.mxu0 %v175
    %522 = vmatpush1.xpose.msra.mxu0 %v174
    %523 = vmatprep.subr.mxu0 %v179
    %524 = vmatpush1.xpose.msra.mxu0 %v178
    %525 = vmatprep.subr.mxu0 %v183
    %526 = vmatpush1.xpose.msra.mxu0 %v182
    %527 = vmatprep.subr.mxu0 %v187
    %528 = vmatpush1.xpose.msra.mxu0 %v186
    %529 = vmatprep.subr.mxu0 %v191
    %530 = vmatpush1.xpose.msra.mxu0 %v190
    %531 = vmatprep.subr.mxu0 %v195
    %532 = vmatpush1.xpose.msra.mxu0 %v194
    %533 = vmatprep.subr.mxu0 %v199
    %534 = vmatpush1.xpose.msra.mxu0 %v198
    %535 = vmatprep.subr.mxu0 %v203
    %536 = vmatpush1.xpose.msra.mxu0 %v202
    %537 = vmatprep.subr.mxu0 %v207
    %538 = vmatpush1.xpose.msra.mxu0 %v206
    %539 = vmatprep.subr.mxu0 %v211
    %540 = vmatpush1.xpose.msra.mxu0 %v210
    %541 = vmatprep.subr.mxu0 %v215
    %542 = vmatpush1.xpose.msra.mxu0 %v214
    %543 = vmatprep.subr.mxu0 %v219
    %544 = vmatpush1.xpose.msra.mxu0 %v218
    %545 = vmatprep.subr.mxu0 %v223
    %546 = vmatpush1.xpose.msra.mxu0 %v222
    %547 = vmatprep.subr.mxu0 %v227
    %548 = vmatpush1.xpose.msra.mxu0 %v226
    %549 = vmatprep.subr.mxu0 %v231
    %550 = vmatpush1.xpose.msra.mxu0 %v230
    %551 = vmatprep.subr.mxu0 %v235
    %552 = vmatpush1.xpose.msra.mxu0 %v234
    %553 = vmatprep.subr.mxu0 %v239
    %554 = vmatpush1.xpose.msra.mxu0 %v238
    %555 = vmatprep.subr.mxu0 %v243
    %556 = vmatpush1.xpose.msra.mxu0 %v242
    %557 = vmatprep.subr.mxu0 %v247
    %558 = vmatpush1.xpose.msra.mxu0 %v246
    %559 = vmatprep.subr.mxu0 %v251
    %560 = vmatpush1.xpose.msra.mxu0 %v250
    %561 = vmatprep.subr.mxu0 %v255
    %562 = vmatpush1.xpose.msra.mxu0 %v254
    %563 = vmatprep.subr.mxu0 %v259
    %564 = vmatpush1.xpose.msra.mxu0 %v258
    %565 = vmatprep.subr.mxu0 %v263
    %566 = vmatpush1.xpose.msra.mxu0 %v262
    %567 = vmatprep.subr.mxu0 %v267
    %568 = vmatpush1.xpose.msra.mxu0 %v266
    %569 = vmatprep.subr.mxu0 %v271
    %570 = vmatpush1.xpose.msra.mxu0 %v270
    %571 = vmatprep.subr.mxu0 %v275
    %572 = vmatpush1.xpose.msra.mxu0 %v274
    %573 = vmatprep.subr.mxu0 %v279
    %574 = vmatpush1.xpose.msra.mxu0 %v278
    %575 = vmatprep.subr.mxu0 %v283
    %576 = vmatpush1.xpose.msra.mxu0 %v282
    %577 = vmatprep.subr.mxu0 %v287
    %578 = vmatpush1.xpose.msra.mxu0 %v286
    %579 = vmatprep.mubr.f32.mxu0 %v155
    %580 = vmatmul.mubr.f32.gmra.mrb[0].mxu0 %v154
    %v581 = vpop.f32.mrb[0].mxu0
    %v582 = vadd.f32 %v505, %v581
    %v583 = vpop.f32.mrb[0].mxu0
    %v584 = vadd.f32 %v507, %v583
    %585 = vmatprep.mubr.f32.mxu0 %v159
    %586 = vmatmul.mubr.f32.gmra.mrb[0].mxu0 %v158
    %v587 = vpop.f32.mrb[0].mxu0
    %v588 = vadd.f32 %v511, %v587
    %v589 = vpop.f32.mrb[0].mxu0
    %v590 = vadd.f32 %v513, %v589
    %591 = vdwg.mxu0
    %592 = vmatprep.subr.mxu0 %v289
    %593 = vmatpush1.xpose.msra.mxu0 %v288
    %594 = vmatprep.subr.mxu0 %v293
    %595 = vmatpush1.xpose.msra.mxu0 %v292
    %596 = vmatprep.subr.mxu0 %v297
    %597 = vmatpush1.xpose.msra.mxu0 %v296
    %598 = vmatprep.subr.mxu0 %v301
    %599 = vmatpush1.xpose.msra.mxu0 %v300
    %600 = vmatprep.subr.mxu0 %v305
    %601 = vmatpush1.xpose.msra.mxu0 %v304
    %602 = vmatprep.subr.mxu0 %v309
    %603 = vmatpush1.xpose.msra.mxu0 %v308
    %604 = vmatprep.subr.mxu0 %v313
    %605 = vmatpush1.xpose.msra.mxu0 %v312
    %606 = vmatprep.subr.mxu0 %v317
    %607 = vmatpush1.xpose.msra.mxu0 %v316
    %608 = vmatprep.subr.mxu0 %v321
    %609 = vmatpush1.xpose.msra.mxu0 %v320
    %610 = vmatprep.subr.mxu0 %v325
    %611 = vmatpush1.xpose.msra.mxu0 %v324
    %612 = vmatprep.subr.mxu0 %v329
    %613 = vmatpush1.xpose.msra.mxu0 %v328
    %614 = vmatprep.subr.mxu0 %v333
    %615 = vmatpush1.xpose.msra.mxu0 %v332
    %616 = vmatprep.subr.mxu0 %v337
    %617 = vmatpush1.xpose.msra.mxu0 %v336
    %618 = vmatprep.subr.mxu0 %v341
    %619 = vmatpush1.xpose.msra.mxu0 %v340
    %620 = vmatprep.subr.mxu0 %v345
    %621 = vmatpush1.xpose.msra.mxu0 %v344
    %622 = vmatprep.subr.mxu0 %v349
    %623 = vmatpush1.xpose.msra.mxu0 %v348
    %624 = vmatprep.subr.mxu0 %v353
    %625 = vmatpush1.xpose.msra.mxu0 %v352
    %626 = vmatprep.subr.mxu0 %v357
    %627 = vmatpush1.xpose.msra.mxu0 %v356
    %628 = vmatprep.subr.mxu0 %v361
    %629 = vmatpush1.xpose.msra.mxu0 %v360
    %630 = vmatprep.subr.mxu0 %v365
    %631 = vmatpush1.xpose.msra.mxu0 %v364
    %632 = vmatprep.subr.mxu0 %v369
    %633 = vmatpush1.xpose.msra.mxu0 %v368
    %634 = vmatprep.subr.mxu0 %v373
    %635 = vmatpush1.xpose.msra.mxu0 %v372
    %636 = vmatprep.subr.mxu0 %v377
    %637 = vmatpush1.xpose.msra.mxu0 %v376
    %638 = vmatprep.subr.mxu0 %v381
    %639 = vmatpush1.xpose.msra.mxu0 %v380
    %640 = vmatprep.subr.mxu0 %v385
    %641 = vmatpush1.xpose.msra.mxu0 %v384
    %642 = vmatprep.subr.mxu0 %v389
    %643 = vmatpush1.xpose.msra.mxu0 %v388
    %644 = vmatprep.subr.mxu0 %v393
    %645 = vmatpush1.xpose.msra.mxu0 %v392
    %646 = vmatprep.subr.mxu0 %v397
    %647 = vmatpush1.xpose.msra.mxu0 %v396
    %648 = vmatprep.subr.mxu0 %v401
    %649 = vmatpush1.xpose.msra.mxu0 %v400
    %650 = vmatprep.subr.mxu0 %v405
    %651 = vmatpush1.xpose.msra.mxu0 %v404
    %652 = vmatprep.subr.mxu0 %v409
    %653 = vmatpush1.xpose.msra.mxu0 %v408
    %654 = vmatprep.subr.mxu0 %v413
    %655 = vmatpush1.xpose.msra.mxu0 %v412
    %656 = vmatprep.mubr.f32.mxu0 %v153
    %657 = vmatmul.mubr.f32.gmra.mrb[0].mxu0 %v152
    %v658 = vpop.f32.mrb[0].mxu0
    %v659 = vadd.f32 %v429, %v658
    %v660 = vpop.f32.mrb[0].mxu0
    %v661 = vadd.f32 %v433, %v660
    %662 = vmatprep.mubr.f32.mxu0 %v157
    %663 = vmatmul.mubr.f32.gmra.mrb[0].mxu0 %v156
    %v664 = vpop.f32.mrb[0].mxu0
    %v665 = vadd.f32 %v429, %v664
    %v666 = vpop.f32.mrb[0].mxu0
    %v667 = vadd.f32 %v433, %v666
    %668 = vdwg.mxu0
    %669 = vmatprep.subr.mxu0 %v291
    %670 = vmatpush1.xpose.msra.mxu0 %v290
    %671 = vmatprep.subr.mxu0 %v295
    %672 = vmatpush1.xpose.msra.mxu0 %v294
    %673 = vmatprep.subr.mxu0 %v299
    %674 = vmatpush1.xpose.msra.mxu0 %v298
    %675 = vmatprep.subr.mxu0 %v303
    %676 = vmatpush1.xpose.msra.mxu0 %v302
    %677 = vmatprep.subr.mxu0 %v307
    %678 = vmatpush1.xpose.msra.mxu0 %v306
    %679 = vmatprep.subr.mxu0 %v311
    %680 = vmatpush1.xpose.msra.mxu0 %v310
    %681 = vmatprep.subr.mxu0 %v315
    %682 = vmatpush1.xpose.msra.mxu0 %v314
    %683 = vmatprep.subr.mxu0 %v319
    %684 = vmatpush1.xpose.msra.mxu0 %v318
    %685 = vmatprep.subr.mxu0 %v323
    %686 = vmatpush1.xpose.msra.mxu0 %v322
    %687 = vmatprep.subr.mxu0 %v327
    %688 = vmatpush1.xpose.msra.mxu0 %v326
    %689 = vmatprep.subr.mxu0 %v331
    %690 = vmatpush1.xpose.msra.mxu0 %v330
    %691 = vmatprep.subr.mxu0 %v335
    %692 = vmatpush1.xpose.msra.mxu0 %v334
    %693 = vmatprep.subr.mxu0 %v339
    %694 = vmatpush1.xpose.msra.mxu0 %v338
    %695 = vmatprep.subr.mxu0 %v343
    %696 = vmatpush1.xpose.msra.mxu0 %v342
    %697 = vmatprep.subr.mxu0 %v347
    %698 = vmatpush1.xpose.msra.mxu0 %v346
    %699 = vmatprep.subr.mxu0 %v351
    %700 = vmatpush1.xpose.msra.mxu0 %v350
    %701 = vmatprep.subr.mxu0 %v355
    %702 = vmatpush1.xpose.msra.mxu0 %v354
    %703 = vmatprep.subr.mxu0 %v359
    %704 = vmatpush1.xpose.msra.mxu0 %v358
    %705 = vmatprep.subr.mxu0 %v363
    %706 = vmatpush1.xpose.msra.mxu0 %v362
    %707 = vmatprep.subr.mxu0 %v367
    %708 = vmatpush1.xpose.msra.mxu0 %v366
    %709 = vmatprep.subr.mxu0 %v371
    %710 = vmatpush1.xpose.msra.mxu0 %v370
    %711 = vmatprep.subr.mxu0 %v375
    %712 = vmatpush1.xpose.msra.mxu0 %v374
    %713 = vmatprep.subr.mxu0 %v379
    %714 = vmatpush1.xpose.msra.mxu0 %v378
    %715 = vmatprep.subr.mxu0 %v383
    %716 = vmatpush1.xpose.msra.mxu0 %v382
    %717 = vmatprep.subr.mxu0 %v387
    %718 = vmatpush1.xpose.msra.mxu0 %v386
    %719 = vmatprep.subr.mxu0 %v391
    %720 = vmatpush1.xpose.msra.mxu0 %v390
    %721 = vmatprep.subr.mxu0 %v395
    %722 = vmatpush1.xpose.msra.mxu0 %v394
    %723 = vmatprep.subr.mxu0 %v399
    %724 = vmatpush1.xpose.msra.mxu0 %v398
    %725 = vmatprep.subr.mxu0 %v403
    %726 = vmatpush1.xpose.msra.mxu0 %v402
    %727 = vmatprep.subr.mxu0 %v407
    %728 = vmatpush1.xpose.msra.mxu0 %v406
    %729 = vmatprep.subr.mxu0 %v411
    %730 = vmatpush1.xpose.msra.mxu0 %v410
    %731 = vmatprep.subr.mxu0 %v415
    %732 = vmatpush1.xpose.msra.mxu0 %v414
    %733 = vmatprep.mubr.f32.mxu0 %v155
    %734 = vmatmul.mubr.f32.gmra.mrb[0].mxu0 %v154
    %v735 = vpop.f32.mrb[0].mxu0
    %v736 = vadd.f32 %v659, %v735
    %v737 = vpop.f32.mrb[0].mxu0
    %v738 = vadd.f32 %v661, %v737
    %739 = vmatprep.mubr.f32.mxu0 %v159
    %740 = vmatmul.mubr.f32.gmra.mrb[0].mxu0 %v158
    %v741 = vpop.f32.mrb[0].mxu0
    %v742 = vadd.f32 %v665, %v741
    %v743 = vpop.f32.mrb[0].mxu0
    %v744 = vadd.f32 %v667, %v743
    %745 = vdwg.mxu0
    %v746 = vld [vmem:[%s1] sm:$0xff]
    %v747 = vld [vmem:[%s1 + $0x8] sm:$0xff]
    %v748 = vld [vmem:[%s1 + $0x10] sm:$0xff]
    %v749 = vld [vmem:[%s1 + $0x18] sm:$0xff]
    %v750 = vld [vmem:[%s1 + $0x20] sm:$0xff]
    %v751 = vld [vmem:[%s1 + $0x28] sm:$0xff]
    %v752 = vld [vmem:[%s1 + $0x30] sm:$0xff]
    %v753 = vld [vmem:[%s1 + $0x38] sm:$0xff]
    %v754 = vld [vmem:[#allocation5] sm:$0xff]
    %v755 = vld [vmem:[#allocation5 + $0x8] sm:$0xff]
    %v756 = vld [vmem:[#allocation5 + $0x10] sm:$0xff]
    %v757 = vld [vmem:[#allocation5 + $0x18] sm:$0xff]
    %v758 = vld [vmem:[#allocation5 + $0x20] sm:$0xff]
    %v759 = vld [vmem:[#allocation5 + $0x28] sm:$0xff]
    %v760 = vld [vmem:[#allocation5 + $0x30] sm:$0xff]
    %v761 = vld [vmem:[#allocation5 + $0x38] sm:$0xff]
    %v762 = vld [vmem:[#allocation5 + $0x40] sm:$0xff]
    %v763 = vld [vmem:[#allocation5 + $0x48] sm:$0xff]
    %v764 = vld [vmem:[#allocation5 + $0x50] sm:$0xff]
    %v765 = vld [vmem:[#allocation5 + $0x58] sm:$0xff]
    %v766 = vld [vmem:[#allocation5 + $0x60] sm:$0xff]
    %v767 = vld [vmem:[#allocation5 + $0x68] sm:$0xff]
    %v768 = vld [vmem:[#allocation5 + $0x70] sm:$0xff]
    %v769 = vld [vmem:[#allocation5 + $0x78] sm:$0xff]
    %v770 = vld [vmem:[#allocation5 + $0x80] sm:$0xff]
    %v771 = vld [vmem:[#allocation5 + $0x88] sm:$0xff]
    %v772 = vld [vmem:[#allocation5 + $0x90] sm:$0xff]
    %v773 = vld [vmem:[#allocation5 + $0x98] sm:$0xff]
    %v774 = vld [vmem:[#allocation5 + $0xa0] sm:$0xff]
    %v775 = vld [vmem:[#allocation5 + $0xa8] sm:$0xff]
    %v776 = vld [vmem:[#allocation5 + $0xb0] sm:$0xff]
    %v777 = vld [vmem:[#allocation5 + $0xb8] sm:$0xff]
    %v778 = vld [vmem:[#allocation5 + $0xc0] sm:$0xff]
    %v779 = vld [vmem:[#allocation5 + $0xc8] sm:$0xff]
    %v780 = vld [vmem:[#allocation5 + $0xd0] sm:$0xff]
    %v781 = vld [vmem:[#allocation5 + $0xd8] sm:$0xff]
    %v782 = vld [vmem:[#allocation5 + $0xe0] sm:$0xff]
    %v783 = vld [vmem:[#allocation5 + $0xe8] sm:$0xff]
    %v784 = vld [vmem:[#allocation5 + $0xf0] sm:$0xff]
    %v785 = vld [vmem:[#allocation5 + $0xf8] sm:$0xff]
    %v786 = vld [vmem:[#allocation5 + $0x100] sm:$0xff]
    %v787 = vld [vmem:[#allocation5 + $0x108] sm:$0xff]
    %v788 = vld [vmem:[#allocation5 + $0x110] sm:$0xff]
    %v789 = vld [vmem:[#allocation5 + $0x118] sm:$0xff]
    %v790 = vld [vmem:[#allocation5 + $0x120] sm:$0xff]
    %v791 = vld [vmem:[#allocation5 + $0x128] sm:$0xff]
    %v792 = vld [vmem:[#allocation5 + $0x130] sm:$0xff]
    %v793 = vld [vmem:[#allocation5 + $0x138] sm:$0xff]
    %v794 = vld [vmem:[#allocation5 + $0x140] sm:$0xff]
    %v795 = vld [vmem:[#allocation5 + $0x148] sm:$0xff]
    %v796 = vld [vmem:[#allocation5 + $0x150] sm:$0xff]
    %v797 = vld [vmem:[#allocation5 + $0x158] sm:$0xff]
    %v798 = vld [vmem:[#allocation5 + $0x160] sm:$0xff]
    %v799 = vld [vmem:[#allocation5 + $0x168] sm:$0xff]
    %v800 = vld [vmem:[#allocation5 + $0x170] sm:$0xff]
    %v801 = vld [vmem:[#allocation5 + $0x178] sm:$0xff]
    %v802 = vld [vmem:[#allocation5 + $0x180] sm:$0xff]
    %v803 = vld [vmem:[#allocation5 + $0x188] sm:$0xff]
    %v804 = vld [vmem:[#allocation5 + $0x190] sm:$0xff]
    %v805 = vld [vmem:[#allocation5 + $0x198] sm:$0xff]
    %v806 = vld [vmem:[#allocation5 + $0x1a0] sm:$0xff]
    %v807 = vld [vmem:[#allocation5 + $0x1a8] sm:$0xff]
    %v808 = vld [vmem:[#allocation5 + $0x1b0] sm:$0xff]
    %v809 = vld [vmem:[#allocation5 + $0x1b8] sm:$0xff]
    %v810 = vld [vmem:[#allocation5 + $0x1c0] sm:$0xff]
    %v811 = vld [vmem:[#allocation5 + $0x1c8] sm:$0xff]
    %v812 = vld [vmem:[#allocation5 + $0x1d0] sm:$0xff]
    %v813 = vld [vmem:[#allocation5 + $0x1d8] sm:$0xff]
    %v814 = vld [vmem:[#allocation5 + $0x1e0] sm:$0xff]
    %v815 = vld [vmem:[#allocation5 + $0x1e8] sm:$0xff]
    %v816 = vld [vmem:[#allocation5 + $0x1f0] sm:$0xff]
    %v817 = vld [vmem:[#allocation5 + $0x1f8] sm:$0xff]
    %v818 = vld [vmem:[#allocation5 + $0x200] sm:$0xff]
    %v819 = vld [vmem:[#allocation5 + $0x208] sm:$0xff]
    %v820 = vld [vmem:[#allocation5 + $0x210] sm:$0xff]
    %v821 = vld [vmem:[#allocation5 + $0x218] sm:$0xff]
    %v822 = vld [vmem:[#allocation5 + $0x220] sm:$0xff]
    %v823 = vld [vmem:[#allocation5 + $0x228] sm:$0xff]
    %v824 = vld [vmem:[#allocation5 + $0x230] sm:$0xff]
    %v825 = vld [vmem:[#allocation5 + $0x238] sm:$0xff]
    %v826 = vld [vmem:[#allocation5 + $0x240] sm:$0xff]
    %v827 = vld [vmem:[#allocation5 + $0x248] sm:$0xff]
    %v828 = vld [vmem:[#allocation5 + $0x250] sm:$0xff]
    %v829 = vld [vmem:[#allocation5 + $0x258] sm:$0xff]
    %v830 = vld [vmem:[#allocation5 + $0x260] sm:$0xff]
    %v831 = vld [vmem:[#allocation5 + $0x268] sm:$0xff]
    %v832 = vld [vmem:[#allocation5 + $0x270] sm:$0xff]
    %v833 = vld [vmem:[#allocation5 + $0x278] sm:$0xff]
    %v834 = vld [vmem:[#allocation5 + $0x280] sm:$0xff]
    %v835 = vld [vmem:[#allocation5 + $0x288] sm:$0xff]
    %v836 = vld [vmem:[#allocation5 + $0x290] sm:$0xff]
    %v837 = vld [vmem:[#allocation5 + $0x298] sm:$0xff]
    %v838 = vld [vmem:[#allocation5 + $0x2a0] sm:$0xff]
    %v839 = vld [vmem:[#allocation5 + $0x2a8] sm:$0xff]
    %v840 = vld [vmem:[#allocation5 + $0x2b0] sm:$0xff]
    %v841 = vld [vmem:[#allocation5 + $0x2b8] sm:$0xff]
    %v842 = vld [vmem:[#allocation5 + $0x2c0] sm:$0xff]
    %v843 = vld [vmem:[#allocation5 + $0x2c8] sm:$0xff]
    %v844 = vld [vmem:[#allocation5 + $0x2d0] sm:$0xff]
    %v845 = vld [vmem:[#allocation5 + $0x2d8] sm:$0xff]
    %v846 = vld [vmem:[#allocation5 + $0x2e0] sm:$0xff]
    %v847 = vld [vmem:[#allocation5 + $0x2e8] sm:$0xff]
    %v848 = vld [vmem:[#allocation5 + $0x2f0] sm:$0xff]
    %v849 = vld [vmem:[#allocation5 + $0x2f8] sm:$0xff]
    %v850 = vld [vmem:[#allocation5 + $0x300] sm:$0xff]
    %v851 = vld [vmem:[#allocation5 + $0x308] sm:$0xff]
    %v852 = vld [vmem:[#allocation5 + $0x310] sm:$0xff]
    %v853 = vld [vmem:[#allocation5 + $0x318] sm:$0xff]
    %v854 = vld [vmem:[#allocation5 + $0x320] sm:$0xff]
    %v855 = vld [vmem:[#allocation5 + $0x328] sm:$0xff]
    %v856 = vld [vmem:[#allocation5 + $0x330] sm:$0xff]
    %v857 = vld [vmem:[#allocation5 + $0x338] sm:$0xff]
    %v858 = vld [vmem:[#allocation5 + $0x340] sm:$0xff]
    %v859 = vld [vmem:[#allocation5 + $0x348] sm:$0xff]
    %v860 = vld [vmem:[#allocation5 + $0x350] sm:$0xff]
    %v861 = vld [vmem:[#allocation5 + $0x358] sm:$0xff]
    %v862 = vld [vmem:[#allocation5 + $0x360] sm:$0xff]
    %v863 = vld [vmem:[#allocation5 + $0x368] sm:$0xff]
    %v864 = vld [vmem:[#allocation5 + $0x370] sm:$0xff]
    %v865 = vld [vmem:[#allocation5 + $0x378] sm:$0xff]
    %v866 = vld [vmem:[#allocation5 + $0x380] sm:$0xff]
    %v867 = vld [vmem:[#allocation5 + $0x388] sm:$0xff]
    %v868 = vld [vmem:[#allocation5 + $0x390] sm:$0xff]
    %v869 = vld [vmem:[#allocation5 + $0x398] sm:$0xff]
    %v870 = vld [vmem:[#allocation5 + $0x3a0] sm:$0xff]
    %v871 = vld [vmem:[#allocation5 + $0x3a8] sm:$0xff]
    %v872 = vld [vmem:[#allocation5 + $0x3b0] sm:$0xff]
    %v873 = vld [vmem:[#allocation5 + $0x3b8] sm:$0xff]
    %v874 = vld [vmem:[#allocation5 + $0x3c0] sm:$0xff]
    %v875 = vld [vmem:[#allocation5 + $0x3c8] sm:$0xff]
    %v876 = vld [vmem:[#allocation5 + $0x3d0] sm:$0xff]
    %v877 = vld [vmem:[#allocation5 + $0x3d8] sm:$0xff]
    %v878 = vld [vmem:[#allocation5 + $0x3e0] sm:$0xff]
    %v879 = vld [vmem:[#allocation5 + $0x3e8] sm:$0xff]
    %v880 = vld [vmem:[#allocation5 + $0x3f0] sm:$0xff]
    %v881 = vld [vmem:[#allocation5 + $0x3f8] sm:$0xff]
    %v882 = vld [vmem:[#allocation5 + $0x400] sm:$0xff]
    %v883 = vld [vmem:[#allocation5 + $0x408] sm:$0xff]
    %v884 = vld [vmem:[#allocation5 + $0x410] sm:$0xff]
    %v885 = vld [vmem:[#allocation5 + $0x418] sm:$0xff]
    %v886 = vld [vmem:[#allocation5 + $0x420] sm:$0xff]
    %v887 = vld [vmem:[#allocation5 + $0x428] sm:$0xff]
    %v888 = vld [vmem:[#allocation5 + $0x430] sm:$0xff]
    %v889 = vld [vmem:[#allocation5 + $0x438] sm:$0xff]
    %v890 = vld [vmem:[#allocation5 + $0x440] sm:$0xff]
    %v891 = vld [vmem:[#allocation5 + $0x448] sm:$0xff]
    %v892 = vld [vmem:[#allocation5 + $0x450] sm:$0xff]
    %v893 = vld [vmem:[#allocation5 + $0x458] sm:$0xff]
    %v894 = vld [vmem:[#allocation5 + $0x460] sm:$0xff]
    %v895 = vld [vmem:[#allocation5 + $0x468] sm:$0xff]
    %v896 = vld [vmem:[#allocation5 + $0x470] sm:$0xff]
    %v897 = vld [vmem:[#allocation5 + $0x478] sm:$0xff]
    %v898 = vld [vmem:[#allocation5 + $0x480] sm:$0xff]
    %v899 = vld [vmem:[#allocation5 + $0x488] sm:$0xff]
    %v900 = vld [vmem:[#allocation5 + $0x490] sm:$0xff]
    %v901 = vld [vmem:[#allocation5 + $0x498] sm:$0xff]
    %v902 = vld [vmem:[#allocation5 + $0x4a0] sm:$0xff]
    %v903 = vld [vmem:[#allocation5 + $0x4a8] sm:$0xff]
    %v904 = vld [vmem:[#allocation5 + $0x4b0] sm:$0xff]
    %v905 = vld [vmem:[#allocation5 + $0x4b8] sm:$0xff]
    %v906 = vld [vmem:[#allocation5 + $0x4c0] sm:$0xff]
    %v907 = vld [vmem:[#allocation5 + $0x4c8] sm:$0xff]
    %v908 = vld [vmem:[#allocation5 + $0x4d0] sm:$0xff]
    %v909 = vld [vmem:[#allocation5 + $0x4d8] sm:$0xff]
    %v910 = vld [vmem:[#allocation5 + $0x4e0] sm:$0xff]
    %v911 = vld [vmem:[#allocation5 + $0x4e8] sm:$0xff]
    %v912 = vld [vmem:[#allocation5 + $0x4f0] sm:$0xff]
    %v913 = vld [vmem:[#allocation5 + $0x4f8] sm:$0xff]
    %v914 = vld [vmem:[#allocation5 + $0x500] sm:$0xff]
    %v915 = vld [vmem:[#allocation5 + $0x508] sm:$0xff]
    %v916 = vld [vmem:[#allocation5 + $0x510] sm:$0xff]
    %v917 = vld [vmem:[#allocation5 + $0x518] sm:$0xff]
    %v918 = vld [vmem:[#allocation5 + $0x520] sm:$0xff]
    %v919 = vld [vmem:[#allocation5 + $0x528] sm:$0xff]
    %v920 = vld [vmem:[#allocation5 + $0x530] sm:$0xff]
    %v921 = vld [vmem:[#allocation5 + $0x538] sm:$0xff]
    %v922 = vld [vmem:[#allocation5 + $0x540] sm:$0xff]
    %v923 = vld [vmem:[#allocation5 + $0x548] sm:$0xff]
    %v924 = vld [vmem:[#allocation5 + $0x550] sm:$0xff]
    %v925 = vld [vmem:[#allocation5 + $0x558] sm:$0xff]
    %v926 = vld [vmem:[#allocation5 + $0x560] sm:$0xff]
    %v927 = vld [vmem:[#allocation5 + $0x568] sm:$0xff]
    %v928 = vld [vmem:[#allocation5 + $0x570] sm:$0xff]
    %v929 = vld [vmem:[#allocation5 + $0x578] sm:$0xff]
    %v930 = vld [vmem:[#allocation5 + $0x580] sm:$0xff]
    %v931 = vld [vmem:[#allocation5 + $0x588] sm:$0xff]
    %v932 = vld [vmem:[#allocation5 + $0x590] sm:$0xff]
    %v933 = vld [vmem:[#allocation5 + $0x598] sm:$0xff]
    %v934 = vld [vmem:[#allocation5 + $0x5a0] sm:$0xff]
    %v935 = vld [vmem:[#allocation5 + $0x5a8] sm:$0xff]
    %v936 = vld [vmem:[#allocation5 + $0x5b0] sm:$0xff]
    %v937 = vld [vmem:[#allocation5 + $0x5b8] sm:$0xff]
    %v938 = vld [vmem:[#allocation5 + $0x5c0] sm:$0xff]
    %v939 = vld [vmem:[#allocation5 + $0x5c8] sm:$0xff]
    %v940 = vld [vmem:[#allocation5 + $0x5d0] sm:$0xff]
    %v941 = vld [vmem:[#allocation5 + $0x5d8] sm:$0xff]
    %v942 = vld [vmem:[#allocation5 + $0x5e0] sm:$0xff]
    %v943 = vld [vmem:[#allocation5 + $0x5e8] sm:$0xff]
    %v944 = vld [vmem:[#allocation5 + $0x5f0] sm:$0xff]
    %v945 = vld [vmem:[#allocation5 + $0x5f8] sm:$0xff]
    %v946 = vld [vmem:[#allocation5 + $0x600] sm:$0xff]
    %v947 = vld [vmem:[#allocation5 + $0x608] sm:$0xff]
    %v948 = vld [vmem:[#allocation5 + $0x610] sm:$0xff]
    %v949 = vld [vmem:[#allocation5 + $0x618] sm:$0xff]
    %v950 = vld [vmem:[#allocation5 + $0x620] sm:$0xff]
    %v951 = vld [vmem:[#allocation5 + $0x628] sm:$0xff]
    %v952 = vld [vmem:[#allocation5 + $0x630] sm:$0xff]
    %v953 = vld [vmem:[#allocation5 + $0x638] sm:$0xff]
    %v954 = vld [vmem:[#allocation5 + $0x640] sm:$0xff]
    %v955 = vld [vmem:[#allocation5 + $0x648] sm:$0xff]
    %v956 = vld [vmem:[#allocation5 + $0x650] sm:$0xff]
    %v957 = vld [vmem:[#allocation5 + $0x658] sm:$0xff]
    %v958 = vld [vmem:[#allocation5 + $0x660] sm:$0xff]
    %v959 = vld [vmem:[#allocation5 + $0x668] sm:$0xff]
    %v960 = vld [vmem:[#allocation5 + $0x670] sm:$0xff]
    %v961 = vld [vmem:[#allocation5 + $0x678] sm:$0xff]
    %v962 = vld [vmem:[#allocation5 + $0x680] sm:$0xff]
    %v963 = vld [vmem:[#allocation5 + $0x688] sm:$0xff]
    %v964 = vld [vmem:[#allocation5 + $0x690] sm:$0xff]
    %v965 = vld [vmem:[#allocation5 + $0x698] sm:$0xff]
    %v966 = vld [vmem:[#allocation5 + $0x6a0] sm:$0xff]
    %v967 = vld [vmem:[#allocation5 + $0x6a8] sm:$0xff]
    %v968 = vld [vmem:[#allocation5 + $0x6b0] sm:$0xff]
    %v969 = vld [vmem:[#allocation5 + $0x6b8] sm:$0xff]
    %v970 = vld [vmem:[#allocation5 + $0x6c0] sm:$0xff]
    %v971 = vld [vmem:[#allocation5 + $0x6c8] sm:$0xff]
    %v972 = vld [vmem:[#allocation5 + $0x6d0] sm:$0xff]
    %v973 = vld [vmem:[#allocation5 + $0x6d8] sm:$0xff]
    %v974 = vld [vmem:[#allocation5 + $0x6e0] sm:$0xff]
    %v975 = vld [vmem:[#allocation5 + $0x6e8] sm:$0xff]
    %v976 = vld [vmem:[#allocation5 + $0x6f0] sm:$0xff]
    %v977 = vld [vmem:[#allocation5 + $0x6f8] sm:$0xff]
    %v978 = vld [vmem:[#allocation5 + $0x700] sm:$0xff]
    %v979 = vld [vmem:[#allocation5 + $0x708] sm:$0xff]
    %v980 = vld [vmem:[#allocation5 + $0x710] sm:$0xff]
    %v981 = vld [vmem:[#allocation5 + $0x718] sm:$0xff]
    %v982 = vld [vmem:[#allocation5 + $0x720] sm:$0xff]
    %v983 = vld [vmem:[#allocation5 + $0x728] sm:$0xff]
    %v984 = vld [vmem:[#allocation5 + $0x730] sm:$0xff]
    %v985 = vld [vmem:[#allocation5 + $0x738] sm:$0xff]
    %v986 = vld [vmem:[#allocation5 + $0x740] sm:$0xff]
    %v987 = vld [vmem:[#allocation5 + $0x748] sm:$0xff]
    %v988 = vld [vmem:[#allocation5 + $0x750] sm:$0xff]
    %v989 = vld [vmem:[#allocation5 + $0x758] sm:$0xff]
    %v990 = vld [vmem:[#allocation5 + $0x760] sm:$0xff]
    %v991 = vld [vmem:[#allocation5 + $0x768] sm:$0xff]
    %v992 = vld [vmem:[#allocation5 + $0x770] sm:$0xff]
    %v993 = vld [vmem:[#allocation5 + $0x778] sm:$0xff]
    %v994 = vld [vmem:[#allocation5 + $0x780] sm:$0xff]
    %v995 = vld [vmem:[#allocation5 + $0x788] sm:$0xff]
    %v996 = vld [vmem:[#allocation5 + $0x790] sm:$0xff]
    %v997 = vld [vmem:[#allocation5 + $0x798] sm:$0xff]
    %v998 = vld [vmem:[#allocation5 + $0x7a0] sm:$0xff]
    %v999 = vld [vmem:[#allocation5 + $0x7a8] sm:$0xff]
    %v1000 = vld [vmem:[#allocation5 + $0x7b0] sm:$0xff]
    %v1001 = vld [vmem:[#allocation5 + $0x7b8] sm:$0xff]
    %v1002 = vld [vmem:[#allocation5 + $0x7c0] sm:$0xff]
    %v1003 = vld [vmem:[#allocation5 + $0x7c8] sm:$0xff]
    %v1004 = vld [vmem:[#allocation5 + $0x7d0] sm:$0xff]
    %v1005 = vld [vmem:[#allocation5 + $0x7d8] sm:$0xff]
    %v1006 = vld [vmem:[#allocation5 + $0x7e0] sm:$0xff]
    %v1007 = vld [vmem:[#allocation5 + $0x7e8] sm:$0xff]
    %v1008 = vld [vmem:[#allocation5 + $0x7f0] sm:$0xff]
    %v1009 = vld [vmem:[#allocation5 + $0x7f8] sm:$0xff]
    %v1010 = vld [vmem:[%s144] sm:$0xf]
    %v1012 = vlaneseq
    %v1013 = vshrl.u32 %v1012, 7
    %v1014 = vsub.s32 0, %v1013
    %v1015 = vrot.slane %v1010, %v1014
    %v1016 = vlaneseq
    %v1017 = vshrl.u32 %v1016, 7
    %v1018 = vsub.s32 1, %v1017
    %v1019 = vrot.slane %v1010, %v1018
    %v1020 = vlaneseq
    %v1021 = vshrl.u32 %v1020, 7
    %v1022 = vsub.s32 2, %v1021
    %v1023 = vrot.slane %v1010, %v1022
    %v1024 = vlaneseq
    %v1025 = vshrl.u32 %v1024, 7
    %v1026 = vsub.s32 3, %v1025
    %v1027 = vrot.slane %v1010, %v1026
    %1032 = vmatprep.subr.mxu0 %v755
    %1033 = vmatpush1.xpose.msra.mxu0 %v754
    %1034 = vmatprep.subr.mxu0 %v759
    %1035 = vmatpush1.xpose.msra.mxu0 %v758
    %1036 = vmatprep.subr.mxu0 %v763
    %1037 = vmatpush1.xpose.msra.mxu0 %v762
    %1038 = vmatprep.subr.mxu0 %v767
    %1039 = vmatpush1.xpose.msra.mxu0 %v766
    %1040 = vmatprep.subr.mxu0 %v771
    %1041 = vmatpush1.xpose.msra.mxu0 %v770
    %1042 = vmatprep.subr.mxu0 %v775
    %1043 = vmatpush1.xpose.msra.mxu0 %v774
    %1044 = vmatprep.subr.mxu0 %v779
    %1045 = vmatpush1.xpose.msra.mxu0 %v778
    %1046 = vmatprep.subr.mxu0 %v783
    %1047 = vmatpush1.xpose.msra.mxu0 %v782
    %1048 = vmatprep.subr.mxu0 %v787
    %1049 = vmatpush1.xpose.msra.mxu0 %v786
    %1050 = vmatprep.subr.mxu0 %v791
    %1051 = vmatpush1.xpose.msra.mxu0 %v790
    %1052 = vmatprep.subr.mxu0 %v795
    %1053 = vmatpush1.xpose.msra.mxu0 %v794
    %1054 = vmatprep.subr.mxu0 %v799
    %1055 = vmatpush1.xpose.msra.mxu0 %v798
    %1056 = vmatprep.subr.mxu0 %v803
    %1057 = vmatpush1.xpose.msra.mxu0 %v802
    %1058 = vmatprep.subr.mxu0 %v807
    %1059 = vmatpush1.xpose.msra.mxu0 %v806
    %1060 = vmatprep.subr.mxu0 %v811
    %1061 = vmatpush1.xpose.msra.mxu0 %v810
    %1062 = vmatprep.subr.mxu0 %v815
    %1063 = vmatpush1.xpose.msra.mxu0 %v814
    %1064 = vmatprep.subr.mxu0 %v819
    %1065 = vmatpush1.xpose.msra.mxu0 %v818
    %1066 = vmatprep.subr.mxu0 %v823
    %1067 = vmatpush1.xpose.msra.mxu0 %v822
    %1068 = vmatprep.subr.mxu0 %v827
    %1069 = vmatpush1.xpose.msra.mxu0 %v826
    %1070 = vmatprep.subr.mxu0 %v831
    %1071 = vmatpush1.xpose.msra.mxu0 %v830
    %1072 = vmatprep.subr.mxu0 %v835
    %1073 = vmatpush1.xpose.msra.mxu0 %v834
    %1074 = vmatprep.subr.mxu0 %v839
    %1075 = vmatpush1.xpose.msra.mxu0 %v838
    %1076 = vmatprep.subr.mxu0 %v843
    %1077 = vmatpush1.xpose.msra.mxu0 %v842
    %1078 = vmatprep.subr.mxu0 %v847
    %1079 = vmatpush1.xpose.msra.mxu0 %v846
    %1080 = vmatprep.subr.mxu0 %v851
    %1081 = vmatpush1.xpose.msra.mxu0 %v850
    %1082 = vmatprep.subr.mxu0 %v855
    %1083 = vmatpush1.xpose.msra.mxu0 %v854
    %1084 = vmatprep.subr.mxu0 %v859
    %1085 = vmatpush1.xpose.msra.mxu0 %v858
    %1086 = vmatprep.subr.mxu0 %v863
    %1087 = vmatpush1.xpose.msra.mxu0 %v862
    %1088 = vmatprep.subr.mxu0 %v867
    %1089 = vmatpush1.xpose.msra.mxu0 %v866
    %1090 = vmatprep.subr.mxu0 %v871
    %1091 = vmatpush1.xpose.msra.mxu0 %v870
    %1092 = vmatprep.subr.mxu0 %v875
    %1093 = vmatpush1.xpose.msra.mxu0 %v874
    %1094 = vmatprep.subr.mxu0 %v879
    %1095 = vmatpush1.xpose.msra.mxu0 %v878
    %1096 = vmatprep.mubr.f32.mxu0 %v747
    %1097 = vmatmul.mubr.f32.gmra.mrb[0].mxu0 %v746
    %v1098 = vpop.f32.mrb[0].mxu0
    %v1099 = vadd.f32 %v1015, %v1098
    %v1100 = vpop.f32.mrb[0].mxu0
    %v1101 = vadd.f32 %v1019, %v1100
    %1102 = vmatprep.mubr.f32.mxu0 %v751
    %1103 = vmatmul.mubr.f32.gmra.mrb[0].mxu0 %v750
    %v1104 = vpop.f32.mrb[0].mxu0
    %v1105 = vadd.f32 %v1015, %v1104
    %v1106 = vpop.f32.mrb[0].mxu0
    %v1107 = vadd.f32 %v1019, %v1106
    %1108 = vdwg.mxu0
    %1109 = vmatprep.subr.mxu0 %v757
    %1110 = vmatpush1.xpose.msra.mxu0 %v756
    %1111 = vmatprep.subr.mxu0 %v761
    %1112 = vmatpush1.xpose.msra.mxu0 %v760
    %1113 = vmatprep.subr.mxu0 %v765
    %1114 = vmatpush1.xpose.msra.mxu0 %v764
    %1115 = vmatprep.subr.mxu0 %v769
    %1116 = vmatpush1.xpose.msra.mxu0 %v768
    %1117 = vmatprep.subr.mxu0 %v773
    %1118 = vmatpush1.xpose.msra.mxu0 %v772
    %1119 = vmatprep.subr.mxu0 %v777
    %1120 = vmatpush1.xpose.msra.mxu0 %v776
    %1121 = vmatprep.subr.mxu0 %v781
    %1122 = vmatpush1.xpose.msra.mxu0 %v780
    %1123 = vmatprep.subr.mxu0 %v785
    %1124 = vmatpush1.xpose.msra.mxu0 %v784
    %1125 = vmatprep.subr.mxu0 %v789
    %1126 = vmatpush1.xpose.msra.mxu0 %v788
    %1127 = vmatprep.subr.mxu0 %v793
    %1128 = vmatpush1.xpose.msra.mxu0 %v792
    %1129 = vmatprep.subr.mxu0 %v797
    %1130 = vmatpush1.xpose.msra.mxu0 %v796
    %1131 = vmatprep.subr.mxu0 %v801
    %1132 = vmatpush1.xpose.msra.mxu0 %v800
    %1133 = vmatprep.subr.mxu0 %v805
    %1134 = vmatpush1.xpose.msra.mxu0 %v804
    %1135 = vmatprep.subr.mxu0 %v809
    %1136 = vmatpush1.xpose.msra.mxu0 %v808
    %1137 = vmatprep.subr.mxu0 %v813
    %1138 = vmatpush1.xpose.msra.mxu0 %v812
    %1139 = vmatprep.subr.mxu0 %v817
    %1140 = vmatpush1.xpose.msra.mxu0 %v816
    %1141 = vmatprep.subr.mxu0 %v821
    %1142 = vmatpush1.xpose.msra.mxu0 %v820
    %1143 = vmatprep.subr.mxu0 %v825
    %1144 = vmatpush1.xpose.msra.mxu0 %v824
    %1145 = vmatprep.subr.mxu0 %v829
    %1146 = vmatpush1.xpose.msra.mxu0 %v828
    %1147 = vmatprep.subr.mxu0 %v833
    %1148 = vmatpush1.xpose.msra.mxu0 %v832
    %1149 = vmatprep.subr.mxu0 %v837
    %1150 = vmatpush1.xpose.msra.mxu0 %v836
    %1151 = vmatprep.subr.mxu0 %v841
    %1152 = vmatpush1.xpose.msra.mxu0 %v840
    %1153 = vmatprep.subr.mxu0 %v845
    %1154 = vmatpush1.xpose.msra.mxu0 %v844
    %1155 = vmatprep.subr.mxu0 %v849
    %1156 = vmatpush1.xpose.msra.mxu0 %v848
    %1157 = vmatprep.subr.mxu0 %v853
    %1158 = vmatpush1.xpose.msra.mxu0 %v852
    %1159 = vmatprep.subr.mxu0 %v857
    %1160 = vmatpush1.xpose.msra.mxu0 %v856
    %1161 = vmatprep.subr.mxu0 %v861
    %1162 = vmatpush1.xpose.msra.mxu0 %v860
    %1163 = vmatprep.subr.mxu0 %v865
    %1164 = vmatpush1.xpose.msra.mxu0 %v864
    %1165 = vmatprep.subr.mxu0 %v869
    %1166 = vmatpush1.xpose.msra.mxu0 %v868
    %1167 = vmatprep.subr.mxu0 %v873
    %1168 = vmatpush1.xpose.msra.mxu0 %v872
    %1169 = vmatprep.subr.mxu0 %v877
    %1170 = vmatpush1.xpose.msra.mxu0 %v876
    %1171 = vmatprep.subr.mxu0 %v881
    %1172 = vmatpush1.xpose.msra.mxu0 %v880
    %1173 = vmatprep.mubr.f32.mxu0 %v749
    %1174 = vmatmul.mubr.f32.gmra.mrb[0].mxu0 %v748
    %v1175 = vpop.f32.mrb[0].mxu0
    %v1176 = vadd.f32 %v1099, %v1175
    %v1177 = vpop.f32.mrb[0].mxu0
    %v1178 = vadd.f32 %v1101, %v1177
    %1179 = vmatprep.mubr.f32.mxu0 %v753
    %1180 = vmatmul.mubr.f32.gmra.mrb[0].mxu0 %v752
    %v1181 = vpop.f32.mrb[0].mxu0
    %v1182 = vadd.f32 %v1105, %v1181
    %v1183 = vpop.f32.mrb[0].mxu0
    %v1184 = vadd.f32 %v1107, %v1183
    %1185 = vdwg.mxu0
    %1186 = vmatprep.subr.mxu0 %v883
    %1187 = vmatpush1.xpose.msra.mxu0 %v882
    %1188 = vmatprep.subr.mxu0 %v887
    %1189 = vmatpush1.xpose.msra.mxu0 %v886
    %1190 = vmatprep.subr.mxu0 %v891
    %1191 = vmatpush1.xpose.msra.mxu0 %v890
    %1192 = vmatprep.subr.mxu0 %v895
    %1193 = vmatpush1.xpose.msra.mxu0 %v894
    %1194 = vmatprep.subr.mxu0 %v899
    %1195 = vmatpush1.xpose.msra.mxu0 %v898
    %1196 = vmatprep.subr.mxu0 %v903
    %1197 = vmatpush1.xpose.msra.mxu0 %v902
    %1198 = vmatprep.subr.mxu0 %v907
    %1199 = vmatpush1.xpose.msra.mxu0 %v906
    %1200 = vmatprep.subr.mxu0 %v911
    %1201 = vmatpush1.xpose.msra.mxu0 %v910
    %1202 = vmatprep.subr.mxu0 %v915
    %1203 = vmatpush1.xpose.msra.mxu0 %v914
    %1204 = vmatprep.subr.mxu0 %v919
    %1205 = vmatpush1.xpose.msra.mxu0 %v918
    %1206 = vmatprep.subr.mxu0 %v923
    %1207 = vmatpush1.xpose.msra.mxu0 %v922
    %1208 = vmatprep.subr.mxu0 %v927
    %1209 = vmatpush1.xpose.msra.mxu0 %v926
    %1210 = vmatprep.subr.mxu0 %v931
    %1211 = vmatpush1.xpose.msra.mxu0 %v930
    %1212 = vmatprep.subr.mxu0 %v935
    %1213 = vmatpush1.xpose.msra.mxu0 %v934
    %1214 = vmatprep.subr.mxu0 %v939
    %1215 = vmatpush1.xpose.msra.mxu0 %v938
    %1216 = vmatprep.subr.mxu0 %v943
    %1217 = vmatpush1.xpose.msra.mxu0 %v942
    %1218 = vmatprep.subr.mxu0 %v947
    %1219 = vmatpush1.xpose.msra.mxu0 %v946
    %1220 = vmatprep.subr.mxu0 %v951
    %1221 = vmatpush1.xpose.msra.mxu0 %v950
    %1222 = vmatprep.subr.mxu0 %v955
    %1223 = vmatpush1.xpose.msra.mxu0 %v954
    %1224 = vmatprep.subr.mxu0 %v959
    %1225 = vmatpush1.xpose.msra.mxu0 %v958
    %1226 = vmatprep.subr.mxu0 %v963
    %1227 = vmatpush1.xpose.msra.mxu0 %v962
    %1228 = vmatprep.subr.mxu0 %v967
    %1229 = vmatpush1.xpose.msra.mxu0 %v966
    %1230 = vmatprep.subr.mxu0 %v971
    %1231 = vmatpush1.xpose.msra.mxu0 %v970
    %1232 = vmatprep.subr.mxu0 %v975
    %1233 = vmatpush1.xpose.msra.mxu0 %v974
    %1234 = vmatprep.subr.mxu0 %v979
    %1235 = vmatpush1.xpose.msra.mxu0 %v978
    %1236 = vmatprep.subr.mxu0 %v983
    %1237 = vmatpush1.xpose.msra.mxu0 %v982
    %1238 = vmatprep.subr.mxu0 %v987
    %1239 = vmatpush1.xpose.msra.mxu0 %v986
    %1240 = vmatprep.subr.mxu0 %v991
    %1241 = vmatpush1.xpose.msra.mxu0 %v990
    %1242 = vmatprep.subr.mxu0 %v995
    %1243 = vmatpush1.xpose.msra.mxu0 %v994
    %1244 = vmatprep.subr.mxu0 %v999
    %1245 = vmatpush1.xpose.msra.mxu0 %v998
    %1246 = vmatprep.subr.mxu0 %v1003
    %1247 = vmatpush1.xpose.msra.mxu0 %v1002
    %1248 = vmatprep.subr.mxu0 %v1007
    %1249 = vmatpush1.xpose.msra.mxu0 %v1006
    %1250 = vmatprep.mubr.f32.mxu0 %v747
    %1251 = vmatmul.mubr.f32.gmra.mrb[0].mxu0 %v746
    %v1252 = vpop.f32.mrb[0].mxu0
    %v1253 = vadd.f32 %v1023, %v1252
    %v1254 = vpop.f32.mrb[0].mxu0
    %v1255 = vadd.f32 %v1027, %v1254
    %1256 = vmatprep.mubr.f32.mxu0 %v751
    %1257 = vmatmul.mubr.f32.gmra.mrb[0].mxu0 %v750
    %v1258 = vpop.f32.mrb[0].mxu0
    %v1259 = vadd.f32 %v1023, %v1258
    %v1260 = vpop.f32.mrb[0].mxu0
    %v1261 = vadd.f32 %v1027, %v1260
    %1262 = vdwg.mxu0
    %1263 = vmatprep.subr.mxu0 %v885
    %1264 = vmatpush1.xpose.msra.mxu0 %v884
    %1265 = vmatprep.subr.mxu0 %v889
    %1266 = vmatpush1.xpose.msra.mxu0 %v888
    %1267 = vmatprep.subr.mxu0 %v893
    %1268 = vmatpush1.xpose.msra.mxu0 %v892
    %1269 = vmatprep.subr.mxu0 %v897
    %1270 = vmatpush1.xpose.msra.mxu0 %v896
    %1271 = vmatprep.subr.mxu0 %v901
    %1272 = vmatpush1.xpose.msra.mxu0 %v900
    %1273 = vmatprep.subr.mxu0 %v905
    %1274 = vmatpush1.xpose.msra.mxu0 %v904
    %1275 = vmatprep.subr.mxu0 %v909
    %1276 = vmatpush1.xpose.msra.mxu0 %v908
    %1277 = vmatprep.subr.mxu0 %v913
    %1278 = vmatpush1.xpose.msra.mxu0 %v912
    %1279 = vmatprep.subr.mxu0 %v917
    %1280 = vmatpush1.xpose.msra.mxu0 %v916
    %1281 = vmatprep.subr.mxu0 %v921
    %1282 = vmatpush1.xpose.msra.mxu0 %v920
    %1283 = vmatprep.subr.mxu0 %v925
    %1284 = vmatpush1.xpose.msra.mxu0 %v924
    %1285 = vmatprep.subr.mxu0 %v929
    %1286 = vmatpush1.xpose.msra.mxu0 %v928
    %1287 = vmatprep.subr.mxu0 %v933
    %1288 = vmatpush1.xpose.msra.mxu0 %v932
    %1289 = vmatprep.subr.mxu0 %v937
    %1290 = vmatpush1.xpose.msra.mxu0 %v936
    %1291 = vmatprep.subr.mxu0 %v941
    %1292 = vmatpush1.xpose.msra.mxu0 %v940
    %1293 = vmatprep.subr.mxu0 %v945
    %1294 = vmatpush1.xpose.msra.mxu0 %v944
    %1295 = vmatprep.subr.mxu0 %v949
    %1296 = vmatpush1.xpose.msra.mxu0 %v948
    %1297 = vmatprep.subr.mxu0 %v953
    %1298 = vmatpush1.xpose.msra.mxu0 %v952
    %1299 = vmatprep.subr.mxu0 %v957
    %1300 = vmatpush1.xpose.msra.mxu0 %v956
    %1301 = vmatprep.subr.mxu0 %v961
    %1302 = vmatpush1.xpose.msra.mxu0 %v960
    %1303 = vmatprep.subr.mxu0 %v965
    %1304 = vmatpush1.xpose.msra.mxu0 %v964
    %1305 = vmatprep.subr.mxu0 %v969
    %1306 = vmatpush1.xpose.msra.mxu0 %v968
    %1307 = vmatprep.subr.mxu0 %v973
    %1308 = vmatpush1.xpose.msra.mxu0 %v972
    %1309 = vmatprep.subr.mxu0 %v977
    %1310 = vmatpush1.xpose.msra.mxu0 %v976
    %1311 = vmatprep.subr.mxu0 %v981
    %1312 = vmatpush1.xpose.msra.mxu0 %v980
    %1313 = vmatprep.subr.mxu0 %v985
    %1314 = vmatpush1.xpose.msra.mxu0 %v984
    %1315 = vmatprep.subr.mxu0 %v989
    %1316 = vmatpush1.xpose.msra.mxu0 %v988
    %1317 = vmatprep.subr.mxu0 %v993
    %1318 = vmatpush1.xpose.msra.mxu0 %v992
    %1319 = vmatprep.subr.mxu0 %v997
    %1320 = vmatpush1.xpose.msra.mxu0 %v996
    %1321 = vmatprep.subr.mxu0 %v1001
    %1322 = vmatpush1.xpose.msra.mxu0 %v1000
    %1323 = vmatprep.subr.mxu0 %v1005
    %1324 = vmatpush1.xpose.msra.mxu0 %v1004
    %1325 = vmatprep.subr.mxu0 %v1009
    %1326 = vmatpush1.xpose.msra.mxu0 %v1008
    %1327 = vmatprep.mubr.f32.mxu0 %v749
    %1328 = vmatmul.mubr.f32.gmra.mrb[0].mxu0 %v748
    %v1329 = vpop.f32.mrb[0].mxu0
    %v1330 = vadd.f32 %v1253, %v1329
    %v1331 = vpop.f32.mrb[0].mxu0
    %v1332 = vadd.f32 %v1255, %v1331
    %1333 = vmatprep.mubr.f32.mxu0 %v753
    %1334 = vmatmul.mubr.f32.gmra.mrb[0].mxu0 %v752
    %v1335 = vpop.f32.mrb[0].mxu0
    %v1336 = vadd.f32 %v1259, %v1335
    %v1337 = vpop.f32.mrb[0].mxu0
    %v1338 = vadd.f32 %v1261, %v1337
    %1339 = vdwg.mxu0
    %v1340 = vld [vmem:[%s2] sm:$0xff]
    %v1341 = vld [vmem:[%s2 + $0x8] sm:$0xff]
    %v1342 = vld [vmem:[%s2 + $0x10] sm:$0xff]
    %v1343 = vld [vmem:[%s2 + $0x18] sm:$0xff]
    %v1344 = vld [vmem:[%s2 + $0x20] sm:$0xff]
    %v1345 = vld [vmem:[%s2 + $0x28] sm:$0xff]
    %v1346 = vld [vmem:[%s2 + $0x30] sm:$0xff]
    %v1347 = vld [vmem:[%s2 + $0x38] sm:$0xff]
    %v1348 = vld [vmem:[#allocation7] sm:$0xff]
    %v1349 = vld [vmem:[#allocation7 + $0x8] sm:$0xff]
    %v1350 = vld [vmem:[#allocation7 + $0x10] sm:$0xff]
    %v1351 = vld [vmem:[#allocation7 + $0x18] sm:$0xff]
    %v1352 = vld [vmem:[#allocation7 + $0x20] sm:$0xff]
    %v1353 = vld [vmem:[#allocation7 + $0x28] sm:$0xff]
    %v1354 = vld [vmem:[#allocation7 + $0x30] sm:$0xff]
    %v1355 = vld [vmem:[#allocation7 + $0x38] sm:$0xff]
    %v1356 = vld [vmem:[#allocation7 + $0x40] sm:$0xff]
    %v1357 = vld [vmem:[#allocation7 + $0x48] sm:$0xff]
    %v1358 = vld [vmem:[#allocation7 + $0x50] sm:$0xff]
    %v1359 = vld [vmem:[#allocation7 + $0x58] sm:$0xff]
    %v1360 = vld [vmem:[#allocation7 + $0x60] sm:$0xff]
    %v1361 = vld [vmem:[#allocation7 + $0x68] sm:$0xff]
    %v1362 = vld [vmem:[#allocation7 + $0x70] sm:$0xff]
    %v1363 = vld [vmem:[#allocation7 + $0x78] sm:$0xff]
    %v1364 = vld [vmem:[#allocation7 + $0x80] sm:$0xff]
    %v1365 = vld [vmem:[#allocation7 + $0x88] sm:$0xff]
    %v1366 = vld [vmem:[#allocation7 + $0x90] sm:$0xff]
    %v1367 = vld [vmem:[#allocation7 + $0x98] sm:$0xff]
    %v1368 = vld [vmem:[#allocation7 + $0xa0] sm:$0xff]
    %v1369 = vld [vmem:[#allocation7 + $0xa8] sm:$0xff]
    %v1370 = vld [vmem:[#allocation7 + $0xb0] sm:$0xff]
    %v1371 = vld [vmem:[#allocation7 + $0xb8] sm:$0xff]
    %v1372 = vld [vmem:[#allocation7 + $0xc0] sm:$0xff]
    %v1373 = vld [vmem:[#allocation7 + $0xc8] sm:$0xff]
    %v1374 = vld [vmem:[#allocation7 + $0xd0] sm:$0xff]
    %v1375 = vld [vmem:[#allocation7 + $0xd8] sm:$0xff]
    %v1376 = vld [vmem:[#allocation7 + $0xe0] sm:$0xff]
    %v1377 = vld [vmem:[#allocation7 + $0xe8] sm:$0xff]
    %v1378 = vld [vmem:[#allocation7 + $0xf0] sm:$0xff]
    %v1379 = vld [vmem:[#allocation7 + $0xf8] sm:$0xff]
    %v1380 = vld [vmem:[#allocation7 + $0x100] sm:$0xff]
    %v1381 = vld [vmem:[#allocation7 + $0x108] sm:$0xff]
    %v1382 = vld [vmem:[#allocation7 + $0x110] sm:$0xff]
    %v1383 = vld [vmem:[#allocation7 + $0x118] sm:$0xff]
    %v1384 = vld [vmem:[#allocation7 + $0x120] sm:$0xff]
    %v1385 = vld [vmem:[#allocation7 + $0x128] sm:$0xff]
    %v1386 = vld [vmem:[#allocation7 + $0x130] sm:$0xff]
    %v1387 = vld [vmem:[#allocation7 + $0x138] sm:$0xff]
    %v1388 = vld [vmem:[#allocation7 + $0x140] sm:$0xff]
    %v1389 = vld [vmem:[#allocation7 + $0x148] sm:$0xff]
    %v1390 = vld [vmem:[#allocation7 + $0x150] sm:$0xff]
    %v1391 = vld [vmem:[#allocation7 + $0x158] sm:$0xff]
    %v1392 = vld [vmem:[#allocation7 + $0x160] sm:$0xff]
    %v1393 = vld [vmem:[#allocation7 + $0x168] sm:$0xff]
    %v1394 = vld [vmem:[#allocation7 + $0x170] sm:$0xff]
    %v1395 = vld [vmem:[#allocation7 + $0x178] sm:$0xff]
    %v1396 = vld [vmem:[#allocation7 + $0x180] sm:$0xff]
    %v1397 = vld [vmem:[#allocation7 + $0x188] sm:$0xff]
    %v1398 = vld [vmem:[#allocation7 + $0x190] sm:$0xff]
    %v1399 = vld [vmem:[#allocation7 + $0x198] sm:$0xff]
    %v1400 = vld [vmem:[#allocation7 + $0x1a0] sm:$0xff]
    %v1401 = vld [vmem:[#allocation7 + $0x1a8] sm:$0xff]
    %v1402 = vld [vmem:[#allocation7 + $0x1b0] sm:$0xff]
    %v1403 = vld [vmem:[#allocation7 + $0x1b8] sm:$0xff]
    %v1404 = vld [vmem:[#allocation7 + $0x1c0] sm:$0xff]
    %v1405 = vld [vmem:[#allocation7 + $0x1c8] sm:$0xff]
    %v1406 = vld [vmem:[#allocation7 + $0x1d0] sm:$0xff]
    %v1407 = vld [vmem:[#allocation7 + $0x1d8] sm:$0xff]
    %v1408 = vld [vmem:[#allocation7 + $0x1e0] sm:$0xff]
    %v1409 = vld [vmem:[#allocation7 + $0x1e8] sm:$0xff]
    %v1410 = vld [vmem:[#allocation7 + $0x1f0] sm:$0xff]
    %v1411 = vld [vmem:[#allocation7 + $0x1f8] sm:$0xff]
    %v1412 = vld [vmem:[#allocation7 + $0x200] sm:$0xff]
    %v1413 = vld [vmem:[#allocation7 + $0x208] sm:$0xff]
    %v1414 = vld [vmem:[#allocation7 + $0x210] sm:$0xff]
    %v1415 = vld [vmem:[#allocation7 + $0x218] sm:$0xff]
    %v1416 = vld [vmem:[#allocation7 + $0x220] sm:$0xff]
    %v1417 = vld [vmem:[#allocation7 + $0x228] sm:$0xff]
    %v1418 = vld [vmem:[#allocation7 + $0x230] sm:$0xff]
    %v1419 = vld [vmem:[#allocation7 + $0x238] sm:$0xff]
    %v1420 = vld [vmem:[#allocation7 + $0x240] sm:$0xff]
    %v1421 = vld [vmem:[#allocation7 + $0x248] sm:$0xff]
    %v1422 = vld [vmem:[#allocation7 + $0x250] sm:$0xff]
    %v1423 = vld [vmem:[#allocation7 + $0x258] sm:$0xff]
    %v1424 = vld [vmem:[#allocation7 + $0x260] sm:$0xff]
    %v1425 = vld [vmem:[#allocation7 + $0x268] sm:$0xff]
    %v1426 = vld [vmem:[#allocation7 + $0x270] sm:$0xff]
    %v1427 = vld [vmem:[#allocation7 + $0x278] sm:$0xff]
    %v1428 = vld [vmem:[#allocation7 + $0x280] sm:$0xff]
    %v1429 = vld [vmem:[#allocation7 + $0x288] sm:$0xff]
    %v1430 = vld [vmem:[#allocation7 + $0x290] sm:$0xff]
    %v1431 = vld [vmem:[#allocation7 + $0x298] sm:$0xff]
    %v1432 = vld [vmem:[#allocation7 + $0x2a0] sm:$0xff]
    %v1433 = vld [vmem:[#allocation7 + $0x2a8] sm:$0xff]
    %v1434 = vld [vmem:[#allocation7 + $0x2b0] sm:$0xff]
    %v1435 = vld [vmem:[#allocation7 + $0x2b8] sm:$0xff]
    %v1436 = vld [vmem:[#allocation7 + $0x2c0] sm:$0xff]
    %v1437 = vld [vmem:[#allocation7 + $0x2c8] sm:$0xff]
    %v1438 = vld [vmem:[#allocation7 + $0x2d0] sm:$0xff]
    %v1439 = vld [vmem:[#allocation7 + $0x2d8] sm:$0xff]
    %v1440 = vld [vmem:[#allocation7 + $0x2e0] sm:$0xff]
    %v1441 = vld [vmem:[#allocation7 + $0x2e8] sm:$0xff]
    %v1442 = vld [vmem:[#allocation7 + $0x2f0] sm:$0xff]
    %v1443 = vld [vmem:[#allocation7 + $0x2f8] sm:$0xff]
    %v1444 = vld [vmem:[#allocation7 + $0x300] sm:$0xff]
    %v1445 = vld [vmem:[#allocation7 + $0x308] sm:$0xff]
    %v1446 = vld [vmem:[#allocation7 + $0x310] sm:$0xff]
    %v1447 = vld [vmem:[#allocation7 + $0x318] sm:$0xff]
    %v1448 = vld [vmem:[#allocation7 + $0x320] sm:$0xff]
    %v1449 = vld [vmem:[#allocation7 + $0x328] sm:$0xff]
    %v1450 = vld [vmem:[#allocation7 + $0x330] sm:$0xff]
    %v1451 = vld [vmem:[#allocation7 + $0x338] sm:$0xff]
    %v1452 = vld [vmem:[#allocation7 + $0x340] sm:$0xff]
    %v1453 = vld [vmem:[#allocation7 + $0x348] sm:$0xff]
    %v1454 = vld [vmem:[#allocation7 + $0x350] sm:$0xff]
    %v1455 = vld [vmem:[#allocation7 + $0x358] sm:$0xff]
    %v1456 = vld [vmem:[#allocation7 + $0x360] sm:$0xff]
    %v1457 = vld [vmem:[#allocation7 + $0x368] sm:$0xff]
    %v1458 = vld [vmem:[#allocation7 + $0x370] sm:$0xff]
    %v1459 = vld [vmem:[#allocation7 + $0x378] sm:$0xff]
    %v1460 = vld [vmem:[#allocation7 + $0x380] sm:$0xff]
    %v1461 = vld [vmem:[#allocation7 + $0x388] sm:$0xff]
    %v1462 = vld [vmem:[#allocation7 + $0x390] sm:$0xff]
    %v1463 = vld [vmem:[#allocation7 + $0x398] sm:$0xff]
    %v1464 = vld [vmem:[#allocation7 + $0x3a0] sm:$0xff]
    %v1465 = vld [vmem:[#allocation7 + $0x3a8] sm:$0xff]
    %v1466 = vld [vmem:[#allocation7 + $0x3b0] sm:$0xff]
    %v1467 = vld [vmem:[#allocation7 + $0x3b8] sm:$0xff]
    %v1468 = vld [vmem:[#allocation7 + $0x3c0] sm:$0xff]
    %v1469 = vld [vmem:[#allocation7 + $0x3c8] sm:$0xff]
    %v1470 = vld [vmem:[#allocation7 + $0x3d0] sm:$0xff]
    %v1471 = vld [vmem:[#allocation7 + $0x3d8] sm:$0xff]
    %v1472 = vld [vmem:[#allocation7 + $0x3e0] sm:$0xff]
    %v1473 = vld [vmem:[#allocation7 + $0x3e8] sm:$0xff]
    %v1474 = vld [vmem:[#allocation7 + $0x3f0] sm:$0xff]
    %v1475 = vld [vmem:[#allocation7 + $0x3f8] sm:$0xff]
    %v1476 = vld [vmem:[#allocation7 + $0x400] sm:$0xff]
    %v1477 = vld [vmem:[#allocation7 + $0x408] sm:$0xff]
    %v1478 = vld [vmem:[#allocation7 + $0x410] sm:$0xff]
    %v1479 = vld [vmem:[#allocation7 + $0x418] sm:$0xff]
    %v1480 = vld [vmem:[#allocation7 + $0x420] sm:$0xff]
    %v1481 = vld [vmem:[#allocation7 + $0x428] sm:$0xff]
    %v1482 = vld [vmem:[#allocation7 + $0x430] sm:$0xff]
    %v1483 = vld [vmem:[#allocation7 + $0x438] sm:$0xff]
    %v1484 = vld [vmem:[#allocation7 + $0x440] sm:$0xff]
    %v1485 = vld [vmem:[#allocation7 + $0x448] sm:$0xff]
    %v1486 = vld [vmem:[#allocation7 + $0x450] sm:$0xff]
    %v1487 = vld [vmem:[#allocation7 + $0x458] sm:$0xff]
    %v1488 = vld [vmem:[#allocation7 + $0x460] sm:$0xff]
    %v1489 = vld [vmem:[#allocation7 + $0x468] sm:$0xff]
    %v1490 = vld [vmem:[#allocation7 + $0x470] sm:$0xff]
    %v1491 = vld [vmem:[#allocation7 + $0x478] sm:$0xff]
    %v1492 = vld [vmem:[#allocation7 + $0x480] sm:$0xff]
    %v1493 = vld [vmem:[#allocation7 + $0x488] sm:$0xff]
    %v1494 = vld [vmem:[#allocation7 + $0x490] sm:$0xff]
    %v1495 = vld [vmem:[#allocation7 + $0x498] sm:$0xff]
    %v1496 = vld [vmem:[#allocation7 + $0x4a0] sm:$0xff]
    %v1497 = vld [vmem:[#allocation7 + $0x4a8] sm:$0xff]
    %v1498 = vld [vmem:[#allocation7 + $0x4b0] sm:$0xff]
    %v1499 = vld [vmem:[#allocation7 + $0x4b8] sm:$0xff]
    %v1500 = vld [vmem:[#allocation7 + $0x4c0] sm:$0xff]
    %v1501 = vld [vmem:[#allocation7 + $0x4c8] sm:$0xff]
    %v1502 = vld [vmem:[#allocation7 + $0x4d0] sm:$0xff]
    %v1503 = vld [vmem:[#allocation7 + $0x4d8] sm:$0xff]
    %v1504 = vld [vmem:[#allocation7 + $0x4e0] sm:$0xff]
    %v1505 = vld [vmem:[#allocation7 + $0x4e8] sm:$0xff]
    %v1506 = vld [vmem:[#allocation7 + $0x4f0] sm:$0xff]
    %v1507 = vld [vmem:[#allocation7 + $0x4f8] sm:$0xff]
    %v1508 = vld [vmem:[#allocation7 + $0x500] sm:$0xff]
    %v1509 = vld [vmem:[#allocation7 + $0x508] sm:$0xff]
    %v1510 = vld [vmem:[#allocation7 + $0x510] sm:$0xff]
    %v1511 = vld [vmem:[#allocation7 + $0x518] sm:$0xff]
    %v1512 = vld [vmem:[#allocation7 + $0x520] sm:$0xff]
    %v1513 = vld [vmem:[#allocation7 + $0x528] sm:$0xff]
    %v1514 = vld [vmem:[#allocation7 + $0x530] sm:$0xff]
    %v1515 = vld [vmem:[#allocation7 + $0x538] sm:$0xff]
    %v1516 = vld [vmem:[#allocation7 + $0x540] sm:$0xff]
    %v1517 = vld [vmem:[#allocation7 + $0x548] sm:$0xff]
    %v1518 = vld [vmem:[#allocation7 + $0x550] sm:$0xff]
    %v1519 = vld [vmem:[#allocation7 + $0x558] sm:$0xff]
    %v1520 = vld [vmem:[#allocation7 + $0x560] sm:$0xff]
    %v1521 = vld [vmem:[#allocation7 + $0x568] sm:$0xff]
    %v1522 = vld [vmem:[#allocation7 + $0x570] sm:$0xff]
    %v1523 = vld [vmem:[#allocation7 + $0x578] sm:$0xff]
    %v1524 = vld [vmem:[#allocation7 + $0x580] sm:$0xff]
    %v1525 = vld [vmem:[#allocation7 + $0x588] sm:$0xff]
    %v1526 = vld [vmem:[#allocation7 + $0x590] sm:$0xff]
    %v1527 = vld [vmem:[#allocation7 + $0x598] sm:$0xff]
    %v1528 = vld [vmem:[#allocation7 + $0x5a0] sm:$0xff]
    %v1529 = vld [vmem:[#allocation7 + $0x5a8] sm:$0xff]
    %v1530 = vld [vmem:[#allocation7 + $0x5b0] sm:$0xff]
    %v1531 = vld [vmem:[#allocation7 + $0x5b8] sm:$0xff]
    %v1532 = vld [vmem:[#allocation7 + $0x5c0] sm:$0xff]
    %v1533 = vld [vmem:[#allocation7 + $0x5c8] sm:$0xff]
    %v1534 = vld [vmem:[#allocation7 + $0x5d0] sm:$0xff]
    %v1535 = vld [vmem:[#allocation7 + $0x5d8] sm:$0xff]
    %v1536 = vld [vmem:[#allocation7 + $0x5e0] sm:$0xff]
    %v1537 = vld [vmem:[#allocation7 + $0x5e8] sm:$0xff]
    %v1538 = vld [vmem:[#allocation7 + $0x5f0] sm:$0xff]
    %v1539 = vld [vmem:[#allocation7 + $0x5f8] sm:$0xff]
    %v1540 = vld [vmem:[#allocation7 + $0x600] sm:$0xff]
    %v1541 = vld [vmem:[#allocation7 + $0x608] sm:$0xff]
    %v1542 = vld [vmem:[#allocation7 + $0x610] sm:$0xff]
    %v1543 = vld [vmem:[#allocation7 + $0x618] sm:$0xff]
    %v1544 = vld [vmem:[#allocation7 + $0x620] sm:$0xff]
    %v1545 = vld [vmem:[#allocation7 + $0x628] sm:$0xff]
    %v1546 = vld [vmem:[#allocation7 + $0x630] sm:$0xff]
    %v1547 = vld [vmem:[#allocation7 + $0x638] sm:$0xff]
    %v1548 = vld [vmem:[#allocation7 + $0x640] sm:$0xff]
    %v1549 = vld [vmem:[#allocation7 + $0x648] sm:$0xff]
    %v1550 = vld [vmem:[#allocation7 + $0x650] sm:$0xff]
    %v1551 = vld [vmem:[#allocation7 + $0x658] sm:$0xff]
    %v1552 = vld [vmem:[#allocation7 + $0x660] sm:$0xff]
    %v1553 = vld [vmem:[#allocation7 + $0x668] sm:$0xff]
    %v1554 = vld [vmem:[#allocation7 + $0x670] sm:$0xff]
    %v1555 = vld [vmem:[#allocation7 + $0x678] sm:$0xff]
    %v1556 = vld [vmem:[#allocation7 + $0x680] sm:$0xff]
    %v1557 = vld [vmem:[#allocation7 + $0x688] sm:$0xff]
    %v1558 = vld [vmem:[#allocation7 + $0x690] sm:$0xff]
    %v1559 = vld [vmem:[#allocation7 + $0x698] sm:$0xff]
    %v1560 = vld [vmem:[#allocation7 + $0x6a0] sm:$0xff]
    %v1561 = vld [vmem:[#allocation7 + $0x6a8] sm:$0xff]
    %v1562 = vld [vmem:[#allocation7 + $0x6b0] sm:$0xff]
    %v1563 = vld [vmem:[#allocation7 + $0x6b8] sm:$0xff]
    %v1564 = vld [vmem:[#allocation7 + $0x6c0] sm:$0xff]
    %v1565 = vld [vmem:[#allocation7 + $0x6c8] sm:$0xff]
    %v1566 = vld [vmem:[#allocation7 + $0x6d0] sm:$0xff]
    %v1567 = vld [vmem:[#allocation7 + $0x6d8] sm:$0xff]
    %v1568 = vld [vmem:[#allocation7 + $0x6e0] sm:$0xff]
    %v1569 = vld [vmem:[#allocation7 + $0x6e8] sm:$0xff]
    %v1570 = vld [vmem:[#allocation7 + $0x6f0] sm:$0xff]
    %v1571 = vld [vmem:[#allocation7 + $0x6f8] sm:$0xff]
    %v1572 = vld [vmem:[#allocation7 + $0x700] sm:$0xff]
    %v1573 = vld [vmem:[#allocation7 + $0x708] sm:$0xff]
    %v1574 = vld [vmem:[#allocation7 + $0x710] sm:$0xff]
    %v1575 = vld [vmem:[#allocation7 + $0x718] sm:$0xff]
    %v1576 = vld [vmem:[#allocation7 + $0x720] sm:$0xff]
    %v1577 = vld [vmem:[#allocation7 + $0x728] sm:$0xff]
    %v1578 = vld [vmem:[#allocation7 + $0x730] sm:$0xff]
    %v1579 = vld [vmem:[#allocation7 + $0x738] sm:$0xff]
    %v1580 = vld [vmem:[#allocation7 + $0x740] sm:$0xff]
    %v1581 = vld [vmem:[#allocation7 + $0x748] sm:$0xff]
    %v1582 = vld [vmem:[#allocation7 + $0x750] sm:$0xff]
    %v1583 = vld [vmem:[#allocation7 + $0x758] sm:$0xff]
    %v1584 = vld [vmem:[#allocation7 + $0x760] sm:$0xff]
    %v1585 = vld [vmem:[#allocation7 + $0x768] sm:$0xff]
    %v1586 = vld [vmem:[#allocation7 + $0x770] sm:$0xff]
    %v1587 = vld [vmem:[#allocation7 + $0x778] sm:$0xff]
    %v1588 = vld [vmem:[#allocation7 + $0x780] sm:$0xff]
    %v1589 = vld [vmem:[#allocation7 + $0x788] sm:$0xff]
    %v1590 = vld [vmem:[#allocation7 + $0x790] sm:$0xff]
    %v1591 = vld [vmem:[#allocation7 + $0x798] sm:$0xff]
    %v1592 = vld [vmem:[#allocation7 + $0x7a0] sm:$0xff]
    %v1593 = vld [vmem:[#allocation7 + $0x7a8] sm:$0xff]
    %v1594 = vld [vmem:[#allocation7 + $0x7b0] sm:$0xff]
    %v1595 = vld [vmem:[#allocation7 + $0x7b8] sm:$0xff]
    %v1596 = vld [vmem:[#allocation7 + $0x7c0] sm:$0xff]
    %v1597 = vld [vmem:[#allocation7 + $0x7c8] sm:$0xff]
    %v1598 = vld [vmem:[#allocation7 + $0x7d0] sm:$0xff]
    %v1599 = vld [vmem:[#allocation7 + $0x7d8] sm:$0xff]
    %v1600 = vld [vmem:[#allocation7 + $0x7e0] sm:$0xff]
    %v1601 = vld [vmem:[#allocation7 + $0x7e8] sm:$0xff]
    %v1602 = vld [vmem:[#allocation7 + $0x7f0] sm:$0xff]
    %v1603 = vld [vmem:[#allocation7 + $0x7f8] sm:$0xff]
    %v1604 = vld [vmem:[%s150] sm:$0xf]
    %v1606 = vlaneseq
    %v1607 = vshrl.u32 %v1606, 7
    %v1608 = vsub.s32 0, %v1607
    %v1609 = vrot.slane %v1604, %v1608
    %v1610 = vlaneseq
    %v1611 = vshrl.u32 %v1610, 7
    %v1612 = vsub.s32 1, %v1611
    %v1613 = vrot.slane %v1604, %v1612
    %v1614 = vlaneseq
    %v1615 = vshrl.u32 %v1614, 7
    %v1616 = vsub.s32 2, %v1615
    %v1617 = vrot.slane %v1604, %v1616
    %v1618 = vlaneseq
    %v1619 = vshrl.u32 %v1618, 7
    %v1620 = vsub.s32 3, %v1619
    %v1621 = vrot.slane %v1604, %v1620
    %1626 = vmatprep.subr.mxu0 %v1349
    %1627 = vmatpush1.xpose.msra.mxu0 %v1348
    %1628 = vmatprep.subr.mxu0 %v1353
    %1629 = vmatpush1.xpose.msra.mxu0 %v1352
    %1630 = vmatprep.subr.mxu0 %v1357
    %1631 = vmatpush1.xpose.msra.mxu0 %v1356
    %1632 = vmatprep.subr.mxu0 %v1361
    %1633 = vmatpush1.xpose.msra.mxu0 %v1360
    %1634 = vmatprep.subr.mxu0 %v1365
    %1635 = vmatpush1.xpose.msra.mxu0 %v1364
    %1636 = vmatprep.subr.mxu0 %v1369
    %1637 = vmatpush1.xpose.msra.mxu0 %v1368
    %1638 = vmatprep.subr.mxu0 %v1373
    %1639 = vmatpush1.xpose.msra.mxu0 %v1372
    %1640 = vmatprep.subr.mxu0 %v1377
    %1641 = vmatpush1.xpose.msra.mxu0 %v1376
    %1642 = vmatprep.subr.mxu0 %v1381
    %1643 = vmatpush1.xpose.msra.mxu0 %v1380
    %1644 = vmatprep.subr.mxu0 %v1385
    %1645 = vmatpush1.xpose.msra.mxu0 %v1384
    %1646 = vmatprep.subr.mxu0 %v1389
    %1647 = vmatpush1.xpose.msra.mxu0 %v1388
    %1648 = vmatprep.subr.mxu0 %v1393
    %1649 = vmatpush1.xpose.msra.mxu0 %v1392
    %1650 = vmatprep.subr.mxu0 %v1397
    %1651 = vmatpush1.xpose.msra.mxu0 %v1396
    %1652 = vmatprep.subr.mxu0 %v1401
    %1653 = vmatpush1.xpose.msra.mxu0 %v1400
    %1654 = vmatprep.subr.mxu0 %v1405
    %1655 = vmatpush1.xpose.msra.mxu0 %v1404
    %1656 = vmatprep.subr.mxu0 %v1409
    %1657 = vmatpush1.xpose.msra.mxu0 %v1408
    %1658 = vmatprep.subr.mxu0 %v1413
    %1659 = vmatpush1.xpose.msra.mxu0 %v1412
    %1660 = vmatprep.subr.mxu0 %v1417
    %1661 = vmatpush1.xpose.msra.mxu0 %v1416
    %1662 = vmatprep.subr.mxu0 %v1421
    %1663 = vmatpush1.xpose.msra.mxu0 %v1420
    %1664 = vmatprep.subr.mxu0 %v1425
    %1665 = vmatpush1.xpose.msra.mxu0 %v1424
    %1666 = vmatprep.subr.mxu0 %v1429
    %1667 = vmatpush1.xpose.msra.mxu0 %v1428
    %1668 = vmatprep.subr.mxu0 %v1433
    %1669 = vmatpush1.xpose.msra.mxu0 %v1432
    %1670 = vmatprep.subr.mxu0 %v1437
    %1671 = vmatpush1.xpose.msra.mxu0 %v1436
    %1672 = vmatprep.subr.mxu0 %v1441
    %1673 = vmatpush1.xpose.msra.mxu0 %v1440
    %1674 = vmatprep.subr.mxu0 %v1445
    %1675 = vmatpush1.xpose.msra.mxu0 %v1444
    %1676 = vmatprep.subr.mxu0 %v1449
    %1677 = vmatpush1.xpose.msra.mxu0 %v1448
    %1678 = vmatprep.subr.mxu0 %v1453
    %1679 = vmatpush1.xpose.msra.mxu0 %v1452
    %1680 = vmatprep.subr.mxu0 %v1457
    %1681 = vmatpush1.xpose.msra.mxu0 %v1456
    %1682 = vmatprep.subr.mxu0 %v1461
    %1683 = vmatpush1.xpose.msra.mxu0 %v1460
    %1684 = vmatprep.subr.mxu0 %v1465
    %1685 = vmatpush1.xpose.msra.mxu0 %v1464
    %1686 = vmatprep.subr.mxu0 %v1469
    %1687 = vmatpush1.xpose.msra.mxu0 %v1468
    %1688 = vmatprep.subr.mxu0 %v1473
    %1689 = vmatpush1.xpose.msra.mxu0 %v1472
    %1690 = vmatprep.mubr.f32.mxu0 %v1341
    %1691 = vmatmul.mubr.f32.gmra.mrb[0].mxu0 %v1340
    %v1692 = vpop.f32.mrb[0].mxu0
    %v1693 = vadd.f32 %v1609, %v1692
    %v1694 = vpop.f32.mrb[0].mxu0
    %v1695 = vadd.f32 %v1613, %v1694
    %1696 = vmatprep.mubr.f32.mxu0 %v1345
    %1697 = vmatmul.mubr.f32.gmra.mrb[0].mxu0 %v1344
    %v1698 = vpop.f32.mrb[0].mxu0
    %v1699 = vadd.f32 %v1609, %v1698
    %v1700 = vpop.f32.mrb[0].mxu0
    %v1701 = vadd.f32 %v1613, %v1700
    %1702 = vdwg.mxu0
    %1703 = vmatprep.subr.mxu0 %v1351
    %1704 = vmatpush1.xpose.msra.mxu0 %v1350
    %1705 = vmatprep.subr.mxu0 %v1355
    %1706 = vmatpush1.xpose.msra.mxu0 %v1354
    %1707 = vmatprep.subr.mxu0 %v1359
    %1708 = vmatpush1.xpose.msra.mxu0 %v1358
    %1709 = vmatprep.subr.mxu0 %v1363
    %1710 = vmatpush1.xpose.msra.mxu0 %v1362
    %1711 = vmatprep.subr.mxu0 %v1367
    %1712 = vmatpush1.xpose.msra.mxu0 %v1366
    %1713 = vmatprep.subr.mxu0 %v1371
    %1714 = vmatpush1.xpose.msra.mxu0 %v1370
    %1715 = vmatprep.subr.mxu0 %v1375
    %1716 = vmatpush1.xpose.msra.mxu0 %v1374
    %1717 = vmatprep.subr.mxu0 %v1379
    %1718 = vmatpush1.xpose.msra.mxu0 %v1378
    %1719 = vmatprep.subr.mxu0 %v1383
    %1720 = vmatpush1.xpose.msra.mxu0 %v1382
    %1721 = vmatprep.subr.mxu0 %v1387
    %1722 = vmatpush1.xpose.msra.mxu0 %v1386
    %1723 = vmatprep.subr.mxu0 %v1391
    %1724 = vmatpush1.xpose.msra.mxu0 %v1390
    %1725 = vmatprep.subr.mxu0 %v1395
    %1726 = vmatpush1.xpose.msra.mxu0 %v1394
    %1727 = vmatprep.subr.mxu0 %v1399
    %1728 = vmatpush1.xpose.msra.mxu0 %v1398
    %1729 = vmatprep.subr.mxu0 %v1403
    %1730 = vmatpush1.xpose.msra.mxu0 %v1402
    %1731 = vmatprep.subr.mxu0 %v1407
    %1732 = vmatpush1.xpose.msra.mxu0 %v1406
    %1733 = vmatprep.subr.mxu0 %v1411
    %1734 = vmatpush1.xpose.msra.mxu0 %v1410
    %1735 = vmatprep.subr.mxu0 %v1415
    %1736 = vmatpush1.xpose.msra.mxu0 %v1414
    %1737 = vmatprep.subr.mxu0 %v1419
    %1738 = vmatpush1.xpose.msra.mxu0 %v1418
    %1739 = vmatprep.subr.mxu0 %v1423
    %1740 = vmatpush1.xpose.msra.mxu0 %v1422
    %1741 = vmatprep.subr.mxu0 %v1427
    %1742 = vmatpush1.xpose.msra.mxu0 %v1426
    %1743 = vmatprep.subr.mxu0 %v1431
    %1744 = vmatpush1.xpose.msra.mxu0 %v1430
    %1745 = vmatprep.subr.mxu0 %v1435
    %1746 = vmatpush1.xpose.msra.mxu0 %v1434
    %1747 = vmatprep.subr.mxu0 %v1439
    %1748 = vmatpush1.xpose.msra.mxu0 %v1438
    %1749 = vmatprep.subr.mxu0 %v1443
    %1750 = vmatpush1.xpose.msra.mxu0 %v1442
    %1751 = vmatprep.subr.mxu0 %v1447
    %1752 = vmatpush1.xpose.msra.mxu0 %v1446
    %1753 = vmatprep.subr.mxu0 %v1451
    %1754 = vmatpush1.xpose.msra.mxu0 %v1450
    %1755 = vmatprep.subr.mxu0 %v1455
    %1756 = vmatpush1.xpose.msra.mxu0 %v1454
    %1757 = vmatprep.subr.mxu0 %v1459
    %1758 = vmatpush1.xpose.msra.mxu0 %v1458
    %1759 = vmatprep.subr.mxu0 %v1463
    %1760 = vmatpush1.xpose.msra.mxu0 %v1462
    %1761 = vmatprep.subr.mxu0 %v1467
    %1762 = vmatpush1.xpose.msra.mxu0 %v1466
    %1763 = vmatprep.subr.mxu0 %v1471
    %1764 = vmatpush1.xpose.msra.mxu0 %v1470
    %1765 = vmatprep.subr.mxu0 %v1475
    %1766 = vmatpush1.xpose.msra.mxu0 %v1474
    %1767 = vmatprep.mubr.f32.mxu0 %v1343
    %1768 = vmatmul.mubr.f32.gmra.mrb[0].mxu0 %v1342
    %v1769 = vpop.f32.mrb[0].mxu0
    %v1770 = vadd.f32 %v1693, %v1769
    %v1771 = vpop.f32.mrb[0].mxu0
    %v1772 = vadd.f32 %v1695, %v1771
    %1773 = vmatprep.mubr.f32.mxu0 %v1347
    %1774 = vmatmul.mubr.f32.gmra.mrb[0].mxu0 %v1346
    %v1775 = vpop.f32.mrb[0].mxu0
    %v1776 = vadd.f32 %v1699, %v1775
    %v1777 = vpop.f32.mrb[0].mxu0
    %v1778 = vadd.f32 %v1701, %v1777
    %1779 = vdwg.mxu0
    %1780 = vmatprep.subr.mxu0 %v1477
    %1781 = vmatpush1.xpose.msra.mxu0 %v1476
    %1782 = vmatprep.subr.mxu0 %v1481
    %1783 = vmatpush1.xpose.msra.mxu0 %v1480
    %1784 = vmatprep.subr.mxu0 %v1485
    %1785 = vmatpush1.xpose.msra.mxu0 %v1484
    %1786 = vmatprep.subr.mxu0 %v1489
    %1787 = vmatpush1.xpose.msra.mxu0 %v1488
    %1788 = vmatprep.subr.mxu0 %v1493
    %1789 = vmatpush1.xpose.msra.mxu0 %v1492
    %1790 = vmatprep.subr.mxu0 %v1497
    %1791 = vmatpush1.xpose.msra.mxu0 %v1496
    %1792 = vmatprep.subr.mxu0 %v1501
    %1793 = vmatpush1.xpose.msra.mxu0 %v1500
    %1794 = vmatprep.subr.mxu0 %v1505
    %1795 = vmatpush1.xpose.msra.mxu0 %v1504
    %1796 = vmatprep.subr.mxu0 %v1509
    %1797 = vmatpush1.xpose.msra.mxu0 %v1508
    %1798 = vmatprep.subr.mxu0 %v1513
    %1799 = vmatpush1.xpose.msra.mxu0 %v1512
    %1800 = vmatprep.subr.mxu0 %v1517
    %1801 = vmatpush1.xpose.msra.mxu0 %v1516
    %1802 = vmatprep.subr.mxu0 %v1521
    %1803 = vmatpush1.xpose.msra.mxu0 %v1520
    %1804 = vmatprep.subr.mxu0 %v1525
    %1805 = vmatpush1.xpose.msra.mxu0 %v1524
    %1806 = vmatprep.subr.mxu0 %v1529
    %1807 = vmatpush1.xpose.msra.mxu0 %v1528
    %1808 = vmatprep.subr.mxu0 %v1533
    %1809 = vmatpush1.xpose.msra.mxu0 %v1532
    %1810 = vmatprep.subr.mxu0 %v1537
    %1811 = vmatpush1.xpose.msra.mxu0 %v1536
    %1812 = vmatprep.subr.mxu0 %v1541
    %1813 = vmatpush1.xpose.msra.mxu0 %v1540
    %1814 = vmatprep.subr.mxu0 %v1545
    %1815 = vmatpush1.xpose.msra.mxu0 %v1544
    %1816 = vmatprep.subr.mxu0 %v1549
    %1817 = vmatpush1.xpose.msra.mxu0 %v1548
    %1818 = vmatprep.subr.mxu0 %v1553
    %1819 = vmatpush1.xpose.msra.mxu0 %v1552
    %1820 = vmatprep.subr.mxu0 %v1557
    %1821 = vmatpush1.xpose.msra.mxu0 %v1556
    %1822 = vmatprep.subr.mxu0 %v1561
    %1823 = vmatpush1.xpose.msra.mxu0 %v1560
    %1824 = vmatprep.subr.mxu0 %v1565
    %1825 = vmatpush1.xpose.msra.mxu0 %v1564
    %1826 = vmatprep.subr.mxu0 %v1569
    %1827 = vmatpush1.xpose.msra.mxu0 %v1568
    %1828 = vmatprep.subr.mxu0 %v1573
    %1829 = vmatpush1.xpose.msra.mxu0 %v1572
    %1830 = vmatprep.subr.mxu0 %v1577
    %1831 = vmatpush1.xpose.msra.mxu0 %v1576
    %1832 = vmatprep.subr.mxu0 %v1581
    %1833 = vmatpush1.xpose.msra.mxu0 %v1580
    %1834 = vmatprep.subr.mxu0 %v1585
    %1835 = vmatpush1.xpose.msra.mxu0 %v1584
    %1836 = vmatprep.subr.mxu0 %v1589
    %1837 = vmatpush1.xpose.msra.mxu0 %v1588
    %1838 = vmatprep.subr.mxu0 %v1593
    %1839 = vmatpush1.xpose.msra.mxu0 %v1592
    %1840 = vmatprep.subr.mxu0 %v1597
    %1841 = vmatpush1.xpose.msra.mxu0 %v1596
    %1842 = vmatprep.subr.mxu0 %v1601
    %1843 = vmatpush1.xpose.msra.mxu0 %v1600
    %1844 = vmatprep.mubr.f32.mxu0 %v1341
    %1845 = vmatmul.mubr.f32.gmra.mrb[0].mxu0 %v1340
    %v1846 = vpop.f32.mrb[0].mxu0
    %v1847 = vadd.f32 %v1617, %v1846
    %v1848 = vpop.f32.mrb[0].mxu0
    %v1849 = vadd.f32 %v1621, %v1848
    %1850 = vmatprep.mubr.f32.mxu0 %v1345
    %1851 = vmatmul.mubr.f32.gmra.mrb[0].mxu0 %v1344
    %v1852 = vpop.f32.mrb[0].mxu0
    %v1853 = vadd.f32 %v1617, %v1852
    %v1854 = vpop.f32.mrb[0].mxu0
    %v1855 = vadd.f32 %v1621, %v1854
    %1856 = vdwg.mxu0
    %1857 = vmatprep.subr.mxu0 %v1479
    %1858 = vmatpush1.xpose.msra.mxu0 %v1478
    %1859 = vmatprep.subr.mxu0 %v1483
    %1860 = vmatpush1.xpose.msra.mxu0 %v1482
    %1861 = vmatprep.subr.mxu0 %v1487
    %1862 = vmatpush1.xpose.msra.mxu0 %v1486
    %1863 = vmatprep.subr.mxu0 %v1491
    %1864 = vmatpush1.xpose.msra.mxu0 %v1490
    %1865 = vmatprep.subr.mxu0 %v1495
    %1866 = vmatpush1.xpose.msra.mxu0 %v1494
    %1867 = vmatprep.subr.mxu0 %v1499
    %1868 = vmatpush1.xpose.msra.mxu0 %v1498
    %1869 = vmatprep.subr.mxu0 %v1503
    %1870 = vmatpush1.xpose.msra.mxu0 %v1502
    %1871 = vmatprep.subr.mxu0 %v1507
    %1872 = vmatpush1.xpose.msra.mxu0 %v1506
    %1873 = vmatprep.subr.mxu0 %v1511
    %1874 = vmatpush1.xpose.msra.mxu0 %v1510
    %1875 = vmatprep.subr.mxu0 %v1515
    %1876 = vmatpush1.xpose.msra.mxu0 %v1514
    %1877 = vmatprep.subr.mxu0 %v1519
    %1878 = vmatpush1.xpose.msra.mxu0 %v1518
    %1879 = vmatprep.subr.mxu0 %v1523
    %1880 = vmatpush1.xpose.msra.mxu0 %v1522
    %1881 = vmatprep.subr.mxu0 %v1527
    %1882 = vmatpush1.xpose.msra.mxu0 %v1526
    %1883 = vmatprep.subr.mxu0 %v1531
    %1884 = vmatpush1.xpose.msra.mxu0 %v1530
    %1885 = vmatprep.subr.mxu0 %v1535
    %1886 = vmatpush1.xpose.msra.mxu0 %v1534
    %1887 = vmatprep.subr.mxu0 %v1539
    %1888 = vmatpush1.xpose.msra.mxu0 %v1538
    %1889 = vmatprep.subr.mxu0 %v1543
    %1890 = vmatpush1.xpose.msra.mxu0 %v1542
    %1891 = vmatprep.subr.mxu0 %v1547
    %1892 = vmatpush1.xpose.msra.mxu0 %v1546
    %1893 = vmatprep.subr.mxu0 %v1551
    %1894 = vmatpush1.xpose.msra.mxu0 %v1550
    %1895 = vmatprep.subr.mxu0 %v1555
    %1896 = vmatpush1.xpose.msra.mxu0 %v1554
    %1897 = vmatprep.subr.mxu0 %v1559
    %1898 = vmatpush1.xpose.msra.mxu0 %v1558
    %1899 = vmatprep.subr.mxu0 %v1563
    %1900 = vmatpush1.xpose.msra.mxu0 %v1562
    %1901 = vmatprep.subr.mxu0 %v1567
    %1902 = vmatpush1.xpose.msra.mxu0 %v1566
    %1903 = vmatprep.subr.mxu0 %v1571
    %1904 = vmatpush1.xpose.msra.mxu0 %v1570
    %1905 = vmatprep.subr.mxu0 %v1575
    %1906 = vmatpush1.xpose.msra.mxu0 %v1574
    %1907 = vmatprep.subr.mxu0 %v1579
    %1908 = vmatpush1.xpose.msra.mxu0 %v1578
    %1909 = vmatprep.subr.mxu0 %v1583
    %1910 = vmatpush1.xpose.msra.mxu0 %v1582
    %1911 = vmatprep.subr.mxu0 %v1587
    %1912 = vmatpush1.xpose.msra.mxu0 %v1586
    %1913 = vmatprep.subr.mxu0 %v1591
    %1914 = vmatpush1.xpose.msra.mxu0 %v1590
    %1915 = vmatprep.subr.mxu0 %v1595
    %1916 = vmatpush1.xpose.msra.mxu0 %v1594
    %1917 = vmatprep.subr.mxu0 %v1599
    %1918 = vmatpush1.xpose.msra.mxu0 %v1598
    %1919 = vmatprep.subr.mxu0 %v1603
    %1920 = vmatpush1.xpose.msra.mxu0 %v1602
    %1921 = vmatprep.mubr.f32.mxu0 %v1343
    %1922 = vmatmul.mubr.f32.gmra.mrb[0].mxu0 %v1342
    %v1923 = vpop.f32.mrb[0].mxu0
    %v1924 = vadd.f32 %v1847, %v1923
    %v1925 = vpop.f32.mrb[0].mxu0
    %v1926 = vadd.f32 %v1849, %v1925
    %1927 = vmatprep.mubr.f32.mxu0 %v1347
    %1928 = vmatmul.mubr.f32.gmra.mrb[0].mxu0 %v1346
    %v1929 = vpop.f32.mrb[0].mxu0
    %v1930 = vadd.f32 %v1853, %v1929
    %v1931 = vpop.f32.mrb[0].mxu0
    %v1932 = vadd.f32 %v1855, %v1931
    %1933 = vdwg.mxu0
    %v1934 = vmul.f32 %v582, 0.125
    %v1935 = vmul.f32 %v588, 0.125
    %vm1936 = vcmask 523264
    %v1938 = vsel %vm1936, %v1934, 0
    %v1941 = vsel %vm1936, %v1176, 0
    %1943 = vmatprep.subr.mxu0 0.0
    %1944 = vmatpush1.xpose.msra.mxu0 %v1941
    %1945 = vmatprep.subr.mxu0 0.0
    %1946 = vmatpush1.xpose.msra.mxu0 0.0
    %1947 = vmatprep.subr.mxu0 0.0
    %1948 = vmatpush1.xpose.msra.mxu0 0.0
    %1949 = vmatprep.subr.mxu0 0.0
    %1950 = vmatpush1.xpose.msra.mxu0 0.0
    %1951 = vmatprep.subr.mxu0 0.0
    %1952 = vmatpush1.xpose.msra.mxu0 0.0
    %1953 = vmatprep.subr.mxu0 0.0
    %1954 = vmatpush1.xpose.msra.mxu0 0.0
    %1955 = vmatprep.subr.mxu0 0.0
    %1956 = vmatpush1.xpose.msra.mxu0 0.0
    %1957 = vmatprep.subr.mxu0 0.0
    %1958 = vmatpush1.xpose.msra.mxu0 0.0
    %1959 = vmatprep.subr.mxu0 0.0
    %1960 = vmatpush1.xpose.msra.mxu0 0.0
    %1961 = vmatprep.subr.mxu0 0.0
    %1962 = vmatpush1.xpose.msra.mxu0 0.0
    %1963 = vmatprep.subr.mxu0 0.0
    %1964 = vmatpush1.xpose.msra.mxu0 0.0
    %1965 = vmatprep.subr.mxu0 0.0
    %1966 = vmatpush1.xpose.msra.mxu0 0.0
    %1967 = vmatprep.subr.mxu0 0.0
    %1968 = vmatpush1.xpose.msra.mxu0 0.0
    %1969 = vmatprep.subr.mxu0 0.0
    %1970 = vmatpush1.xpose.msra.mxu0 0.0
    %1971 = vmatprep.subr.mxu0 0.0
    %1972 = vmatpush1.xpose.msra.mxu0 0.0
    %1973 = vmatprep.subr.mxu0 0.0
    %1974 = vmatpush1.xpose.msra.mxu0 0.0
    %1975 = vmatprep.subr.mxu0 0.0
    %1976 = vmatpush1.xpose.msra.mxu0 0.0
    %1977 = vmatprep.subr.mxu0 0.0
    %1978 = vmatpush1.xpose.msra.mxu0 0.0
    %1979 = vmatprep.subr.mxu0 0.0
    %1980 = vmatpush1.xpose.msra.mxu0 0.0
    %1981 = vmatprep.subr.mxu0 0.0
    %1982 = vmatpush1.xpose.msra.mxu0 0.0
    %1983 = vmatprep.subr.mxu0 0.0
    %1984 = vmatpush1.xpose.msra.mxu0 0.0
    %1985 = vmatprep.subr.mxu0 0.0
    %1986 = vmatpush1.xpose.msra.mxu0 0.0
    %1987 = vmatprep.subr.mxu0 0.0
    %1988 = vmatpush1.xpose.msra.mxu0 0.0
    %1989 = vmatprep.subr.mxu0 0.0
    %1990 = vmatpush1.xpose.msra.mxu0 0.0
    %1991 = vmatprep.subr.mxu0 0.0
    %1992 = vmatpush1.xpose.msra.mxu0 0.0
    %1993 = vmatprep.subr.mxu0 0.0
    %1994 = vmatpush1.xpose.msra.mxu0 0.0
    %1995 = vmatprep.subr.mxu0 0.0
    %1996 = vmatpush1.xpose.msra.mxu0 0.0
    %1997 = vmatprep.subr.mxu0 0.0
    %1998 = vmatpush1.xpose.msra.mxu0 0.0
    %1999 = vmatprep.subr.mxu0 0.0
    %2000 = vmatpush1.xpose.msra.mxu0 0.0
    %2001 = vmatprep.subr.mxu0 0.0
    %2002 = vmatpush1.xpose.msra.mxu0 0.0
    %2003 = vmatprep.subr.mxu0 0.0
    %2004 = vmatpush1.xpose.msra.mxu0 0.0
    %2005 = vmatprep.subr.mxu0 0.0
    %2006 = vmatpush1.xpose.msra.mxu0 0.0
    %2007 = vmatprep.mubr.f32.mxu0 0.0
    %2008 = vmatmul.mubr.f32.gmra.mrb[0].mxu0 %v1938
    %v2009 = vpop.f32.mrb[0].mxu0
    %v2010 = vadd.f32 0.0, %v2009
    %v2011 = vpop.f32.mrb[0].mxu0
    %2012 = vdwg.mxu0
    %v2014 = vsel %vm1936, %v1935, 0
    %v2017 = vsel %vm1936, %v1182, 0
    %2019 = vmatprep.subr.mxu0 0.0
    %2020 = vmatpush1.xpose.msra.mxu0 %v2017
    %2021 = vmatprep.subr.mxu0 0.0
    %2022 = vmatpush1.xpose.msra.mxu0 0.0
    %2023 = vmatprep.subr.mxu0 0.0
    %2024 = vmatpush1.xpose.msra.mxu0 0.0
    %2025 = vmatprep.subr.mxu0 0.0
    %2026 = vmatpush1.xpose.msra.mxu0 0.0
    %2027 = vmatprep.subr.mxu0 0.0
    %2028 = vmatpush1.xpose.msra.mxu0 0.0
    %2029 = vmatprep.subr.mxu0 0.0
    %2030 = vmatpush1.xpose.msra.mxu0 0.0
    %2031 = vmatprep.subr.mxu0 0.0
    %2032 = vmatpush1.xpose.msra.mxu0 0.0
    %2033 = vmatprep.subr.mxu0 0.0
    %2034 = vmatpush1.xpose.msra.mxu0 0.0
    %2035 = vmatprep.subr.mxu0 0.0
    %2036 = vmatpush1.xpose.msra.mxu0 0.0
    %2037 = vmatprep.subr.mxu0 0.0
    %2038 = vmatpush1.xpose.msra.mxu0 0.0
    %2039 = vmatprep.subr.mxu0 0.0
    %2040 = vmatpush1.xpose.msra.mxu0 0.0
    %2041 = vmatprep.subr.mxu0 0.0
    %2042 = vmatpush1.xpose.msra.mxu0 0.0
    %2043 = vmatprep.subr.mxu0 0.0
    %2044 = vmatpush1.xpose.msra.mxu0 0.0
    %2045 = vmatprep.subr.mxu0 0.0
    %2046 = vmatpush1.xpose.msra.mxu0 0.0
    %2047 = vmatprep.subr.mxu0 0.0
    %2048 = vmatpush1.xpose.msra.mxu0 0.0
    %2049 = vmatprep.subr.mxu0 0.0
    %2050 = vmatpush1.xpose.msra.mxu0 0.0
    %2051 = vmatprep.subr.mxu0 0.0
    %2052 = vmatpush1.xpose.msra.mxu0 0.0
    %2053 = vmatprep.subr.mxu0 0.0
    %2054 = vmatpush1.xpose.msra.mxu0 0.0
    %2055 = vmatprep.subr.mxu0 0.0
    %2056 = vmatpush1.xpose.msra.mxu0 0.0
    %2057 = vmatprep.subr.mxu0 0.0
    %2058 = vmatpush1.xpose.msra.mxu0 0.0
    %2059 = vmatprep.subr.mxu0 0.0
    %2060 = vmatpush1.xpose.msra.mxu0 0.0
    %2061 = vmatprep.subr.mxu0 0.0
    %2062 = vmatpush1.xpose.msra.mxu0 0.0
    %2063 = vmatprep.subr.mxu0 0.0
    %2064 = vmatpush1.xpose.msra.mxu0 0.0
    %2065 = vmatprep.subr.mxu0 0.0
    %2066 = vmatpush1.xpose.msra.mxu0 0.0
    %2067 = vmatprep.subr.mxu0 0.0
    %2068 = vmatpush1.xpose.msra.mxu0 0.0
    %2069 = vmatprep.subr.mxu0 0.0
    %2070 = vmatpush1.xpose.msra.mxu0 0.0
    %2071 = vmatprep.subr.mxu0 0.0
    %2072 = vmatpush1.xpose.msra.mxu0 0.0
    %2073 = vmatprep.subr.mxu0 0.0
    %2074 = vmatpush1.xpose.msra.mxu0 0.0
    %2075 = vmatprep.subr.mxu0 0.0
    %2076 = vmatpush1.xpose.msra.mxu0 0.0
    %2077 = vmatprep.subr.mxu0 0.0
    %2078 = vmatpush1.xpose.msra.mxu0 0.0
    %2079 = vmatprep.subr.mxu0 0.0
    %2080 = vmatpush1.xpose.msra.mxu0 0.0
    %2081 = vmatprep.subr.mxu0 0.0
    %2082 = vmatpush1.xpose.msra.mxu0 0.0
    %2083 = vmatprep.mubr.f32.mxu0 0.0
    %2084 = vmatmul.mubr.f32.gmra.mrb[0].mxu0 %v2014
    %v2085 = vpop.f32.mrb[0].mxu0
    %v2086 = vadd.f32 0.0, %v2085
    %v2087 = vpop.f32.mrb[0].mxu0
    %2088 = vdwg.mxu0
    %vm2089 = vcmask 64512
    %v2090 = vsel %vm2089, %v2010, -inf
    %2091 = vmax.xlane.f32.xlu0 %v2090
    %v2092 = vpop.xlane.xlu0 %2091
    %v2093 = vsel %vm2089, %v2086, -inf
    %2094 = vmax.xlane.f32.xlu0 %v2093
    %v2095 = vpop.xlane.xlu0 %2094
    %v2096 = vsub.f32 %v2010, %v2092
    %v2097 = vsub.f32 %v2086, %v2095
    %v2098 = vmul.f32 %v2096, 1.442695
    %v2099 = vpow.pop %v2098
    %v2100 = vmul.f32 %v2097, 1.442695
    %v2101 = vpow.pop %v2100
    %v2102 = vsel %vm2089, %v2099, 0.0
    %2103 = vadd.xlane.f32.xlu0 %v2102
    %v2104 = vpop.xlane.xlu0 %2103
    %v2105 = vsel %vm2089, %v2101, 0.0
    %2106 = vadd.xlane.f32.xlu0 %v2105
    %v2107 = vpop.xlane.xlu0 %2106
    %v2108 = vrcp.pop %v2104
    %v2109 = vmul.f32 %v2099, %v2108
    %v2110 = vrcp.pop %v2107
    %v2111 = vmul.f32 %v2101, %v2110
    %v2113 = vsel %vm2089, %v2109, 0
    %2115 = vmatprep.subr.mxu0 0.0
    %2116 = vmatpush1.msra.mxu0 %v1770
    %2117 = vmatprep.subr.mxu0 0.0
    %2118 = vmatpush1.msra.mxu0 0.0
    %2119 = vmatprep.subr.mxu0 0.0
    %2120 = vmatpush1.msra.mxu0 0.0
    %2121 = vmatprep.subr.mxu0 0.0
    %2122 = vmatpush1.msra.mxu0 0.0
    %2123 = vmatprep.subr.mxu0 0.0
    %2124 = vmatpush1.msra.mxu0 0.0
    %2125 = vmatprep.subr.mxu0 0.0
    %2126 = vmatpush1.msra.mxu0 0.0
    %2127 = vmatprep.subr.mxu0 0.0
    %2128 = vmatpush1.msra.mxu0 0.0
    %2129 = vmatprep.subr.mxu0 0.0
    %2130 = vmatpush1.msra.mxu0 0.0
    %2131 = vmatprep.subr.mxu0 0.0
    %2132 = vmatpush1.msra.mxu0 0.0
    %2133 = vmatprep.subr.mxu0 0.0
    %2134 = vmatpush1.msra.mxu0 0.0
    %2135 = vmatprep.subr.mxu0 0.0
    %2136 = vmatpush1.msra.mxu0 0.0
    %2137 = vmatprep.subr.mxu0 0.0
    %2138 = vmatpush1.msra.mxu0 0.0
    %2139 = vmatprep.subr.mxu0 0.0
    %2140 = vmatpush1.msra.mxu0 0.0
    %2141 = vmatprep.subr.mxu0 0.0
    %2142 = vmatpush1.msra.mxu0 0.0
    %2143 = vmatprep.subr.mxu0 0.0
    %2144 = vmatpush1.msra.mxu0 0.0
    %2145 = vmatprep.subr.mxu0 0.0
    %2146 = vmatpush1.msra.mxu0 0.0
    %2147 = vmatprep.subr.mxu0 0.0
    %2148 = vmatpush1.msra.mxu0 0.0
    %2149 = vmatprep.subr.mxu0 0.0
    %2150 = vmatpush1.msra.mxu0 0.0
    %2151 = vmatprep.subr.mxu0 0.0
    %2152 = vmatpush1.msra.mxu0 0.0
    %2153 = vmatprep.subr.mxu0 0.0
    %2154 = vmatpush1.msra.mxu0 0.0
    %2155 = vmatprep.subr.mxu0 0.0
    %2156 = vmatpush1.msra.mxu0 0.0
    %2157 = vmatprep.subr.mxu0 0.0
    %2158 = vmatpush1.msra.mxu0 0.0
    %2159 = vmatprep.subr.mxu0 0.0
    %2160 = vmatpush1.msra.mxu0 0.0
    %2161 = vmatprep.subr.mxu0 0.0
    %2162 = vmatpush1.msra.mxu0 0.0
    %2163 = vmatprep.subr.mxu0 0.0
    %2164 = vmatpush1.msra.mxu0 0.0
    %2165 = vmatprep.subr.mxu0 0.0
    %2166 = vmatpush1.msra.mxu0 0.0
    %2167 = vmatprep.subr.mxu0 0.0
    %2168 = vmatpush1.msra.mxu0 0.0
    %2169 = vmatprep.subr.mxu0 0.0
    %2170 = vmatpush1.msra.mxu0 0.0
    %2171 = vmatprep.subr.mxu0 0.0
    %2172 = vmatpush1.msra.mxu0 0.0
    %2173 = vmatprep.subr.mxu0 0.0
    %2174 = vmatpush1.msra.mxu0 0.0
    %2175 = vmatprep.subr.mxu0 0.0
    %2176 = vmatpush1.msra.mxu0 0.0
    %2177 = vmatprep.subr.mxu0 0.0
    %2178 = vmatpush1.msra.mxu0 0.0
    %2179 = vmatprep.mubr.f32.mxu0 0.0
    %2180 = vmatmul.mubr.f32.gmra.mrb[0].mxu0 %v2113
    %v2181 = vpop.f32.mrb[0].mxu0
    %v2182 = vadd.f32 0.0, %v2181
    %v2183 = vpop.f32.mrb[0].mxu0
    %2184 = vdwg.mxu0
    %v2186 = vsel %vm2089, %v2111, 0
    %2188 = vmatprep.subr.mxu0 0.0
    %2189 = vmatpush1.msra.mxu0 %v1776
    %2190 = vmatprep.subr.mxu0 0.0
    %2191 = vmatpush1.msra.mxu0 0.0
    %2192 = vmatprep.subr.mxu0 0.0
    %2193 = vmatpush1.msra.mxu0 0.0
    %2194 = vmatprep.subr.mxu0 0.0
    %2195 = vmatpush1.msra.mxu0 0.0
    %2196 = vmatprep.subr.mxu0 0.0
    %2197 = vmatpush1.msra.mxu0 0.0
    %2198 = vmatprep.subr.mxu0 0.0
    %2199 = vmatpush1.msra.mxu0 0.0
    %2200 = vmatprep.subr.mxu0 0.0
    %2201 = vmatpush1.msra.mxu0 0.0
    %2202 = vmatprep.subr.mxu0 0.0
    %2203 = vmatpush1.msra.mxu0 0.0
    %2204 = vmatprep.subr.mxu0 0.0
    %2205 = vmatpush1.msra.mxu0 0.0
    %2206 = vmatprep.subr.mxu0 0.0
    %2207 = vmatpush1.msra.mxu0 0.0
    %2208 = vmatprep.subr.mxu0 0.0
    %2209 = vmatpush1.msra.mxu0 0.0
    %2210 = vmatprep.subr.mxu0 0.0
    %2211 = vmatpush1.msra.mxu0 0.0
    %2212 = vmatprep.subr.mxu0 0.0
    %2213 = vmatpush1.msra.mxu0 0.0
    %2214 = vmatprep.subr.mxu0 0.0
    %2215 = vmatpush1.msra.mxu0 0.0
    %2216 = vmatprep.subr.mxu0 0.0
    %2217 = vmatpush1.msra.mxu0 0.0
    %2218 = vmatprep.subr.mxu0 0.0
    %2219 = vmatpush1.msra.mxu0 0.0
    %2220 = vmatprep.subr.mxu0 0.0
    %2221 = vmatpush1.msra.mxu0 0.0
    %2222 = vmatprep.subr.mxu0 0.0
    %2223 = vmatpush1.msra.mxu0 0.0
    %2224 = vmatprep.subr.mxu0 0.0
    %2225 = vmatpush1.msra.mxu0 0.0
    %2226 = vmatprep.subr.mxu0 0.0
    %2227 = vmatpush1.msra.mxu0 0.0
    %2228 = vmatprep.subr.mxu0 0.0
    %2229 = vmatpush1.msra.mxu0 0.0
    %2230 = vmatprep.subr.mxu0 0.0
    %2231 = vmatpush1.msra.mxu0 0.0
    %2232 = vmatprep.subr.mxu0 0.0
    %2233 = vmatpush1.msra.mxu0 0.0
    %2234 = vmatprep.subr.mxu0 0.0
    %2235 = vmatpush1.msra.mxu0 0.0
    %2236 = vmatprep.subr.mxu0 0.0
    %2237 = vmatpush1.msra.mxu0 0.0
    %2238 = vmatprep.subr.mxu0 0.0
    %2239 = vmatpush1.msra.mxu0 0.0
    %2240 = vmatprep.subr.mxu0 0.0
    %2241 = vmatpush1.msra.mxu0 0.0
    %2242 = vmatprep.subr.mxu0 0.0
    %2243 = vmatpush1.msra.mxu0 0.0
    %2244 = vmatprep.subr.mxu0 0.0
    %2245 = vmatpush1.msra.mxu0 0.0
    %2246 = vmatprep.subr.mxu0 0.0
    %2247 = vmatpush1.msra.mxu0 0.0
    %2248 = vmatprep.subr.mxu0 0.0
    %2249 = vmatpush1.msra.mxu0 0.0
    %2250 = vmatprep.subr.mxu0 0.0
    %2251 = vmatpush1.msra.mxu0 0.0
    %2252 = vmatprep.mubr.f32.mxu0 0.0
    %2253 = vmatmul.mubr.f32.gmra.mrb[0].mxu0 %v2186
    %v2254 = vpop.f32.mrb[0].mxu0
    %v2255 = vadd.f32 0.0, %v2254
    %v2256 = vpop.f32.mrb[0].mxu0
    %2257 = vdwg.mxu0
    %2258 = vst.msk [vmem:[#allocation2] sm:$0xff] %vm1936, %v2182
    %2259 = vst.msk [vmem:[#allocation2 + $0x20] sm:$0xff] %vm1936, %v2255
    %2260 = vrot.lane.b32.xlu0 %v1934, 64
    %v2261 = vpop.permute.xlu0 %2260
    %2262 = vrot.lane.b32.xlu0 %v1176, 64
    %v2263 = vpop.permute.xlu0 %2262
    %v2264 = vsel %vm1936, %v2261, 0
    %v2266 = vsel %vm1936, %v2263, 0
    %2268 = vmatprep.subr.mxu0 0.0
    %2269 = vmatpush1.xpose.msra.mxu0 %v2266
    %2270 = vmatprep.subr.mxu0 0.0
    %2271 = vmatpush1.xpose.msra.mxu0 0.0
    %2272 = vmatprep.subr.mxu0 0.0
    %2273 = vmatpush1.xpose.msra.mxu0 0.0
    %2274 = vmatprep.subr.mxu0 0.0
    %2275 = vmatpush1.xpose.msra.mxu0 0.0
    %2276 = vmatprep.subr.mxu0 0.0
    %2277 = vmatpush1.xpose.msra.mxu0 0.0
    %2278 = vmatprep.subr.mxu0 0.0
    %2279 = vmatpush1.xpose.msra.mxu0 0.0
    %2280 = vmatprep.subr.mxu0 0.0
    %2281 = vmatpush1.xpose.msra.mxu0 0.0
    %2282 = vmatprep.subr.mxu0 0.0
    %2283 = vmatpush1.xpose.msra.mxu0 0.0
    %2284 = vmatprep.subr.mxu0 0.0
    %2285 = vmatpush1.xpose.msra.mxu0 0.0
    %2286 = vmatprep.subr.mxu0 0.0
    %2287 = vmatpush1.xpose.msra.mxu0 0.0
    %2288 = vmatprep.subr.mxu0 0.0
    %2289 = vmatpush1.xpose.msra.mxu0 0.0
    %2290 = vmatprep.subr.mxu0 0.0
    %2291 = vmatpush1.xpose.msra.mxu0 0.0
    %2292 = vmatprep.subr.mxu0 0.0
    %2293 = vmatpush1.xpose.msra.mxu0 0.0
    %2294 = vmatprep.subr.mxu0 0.0
    %2295 = vmatpush1.xpose.msra.mxu0 0.0
    %2296 = vmatprep.subr.mxu0 0.0
    %2297 = vmatpush1.xpose.msra.mxu0 0.0
    %2298 = vmatprep.subr.mxu0 0.0
    %2299 = vmatpush1.xpose.msra.mxu0 0.0
    %2300 = vmatprep.subr.mxu0 0.0
    %2301 = vmatpush1.xpose.msra.mxu0 0.0
    %2302 = vmatprep.subr.mxu0 0.0
    %2303 = vmatpush1.xpose.msra.mxu0 0.0
    %2304 = vmatprep.subr.mxu0 0.0
    %2305 = vmatpush1.xpose.msra.mxu0 0.0
    %2306 = vmatprep.subr.mxu0 0.0
    %2307 = vmatpush1.xpose.msra.mxu0 0.0
    %2308 = vmatprep.subr.mxu0 0.0
    %2309 = vmatpush1.xpose.msra.mxu0 0.0
    %2310 = vmatprep.subr.mxu0 0.0
    %2311 = vmatpush1.xpose.msra.mxu0 0.0
    %2312 = vmatprep.subr.mxu0 0.0
    %2313 = vmatpush1.xpose.msra.mxu0 0.0
    %2314 = vmatprep.subr.mxu0 0.0
    %2315 = vmatpush1.xpose.msra.mxu0 0.0
    %2316 = vmatprep.subr.mxu0 0.0
    %2317 = vmatpush1.xpose.msra.mxu0 0.0
    %2318 = vmatprep.subr.mxu0 0.0
    %2319 = vmatpush1.xpose.msra.mxu0 0.0
    %2320 = vmatprep.subr.mxu0 0.0
    %2321 = vmatpush1.xpose.msra.mxu0 0.0
    %2322 = vmatprep.subr.mxu0 0.0
    %2323 = vmatpush1.xpose.msra.mxu0 0.0
    %2324 = vmatprep.subr.mxu0 0.0
    %2325 = vmatpush1.xpose.msra.mxu0 0.0
    %2326 = vmatprep.subr.mxu0 0.0
    %2327 = vmatpush1.xpose.msra.mxu0 0.0
    %2328 = vmatprep.subr.mxu0 0.0
    %2329 = vmatpush1.xpose.msra.mxu0 0.0
    %2330 = vmatprep.subr.mxu0 0.0
    %2331 = vmatpush1.xpose.msra.mxu0 0.0
    %2332 = vmatprep.mubr.f32.mxu0 0.0
    %2333 = vmatmul.mubr.f32.gmra.mrb[0].mxu0 %v2264
    %v2334 = vpop.f32.mrb[0].mxu0
    %v2335 = vadd.f32 0.0, %v2334
    %v2336 = vpop.f32.mrb[0].mxu0
    %2337 = vdwg.mxu0
    %2338 = vrot.lane.b32.xlu0 %v1935, 64
    %v2339 = vpop.permute.xlu0 %2338
    %2340 = vrot.lane.b32.xlu0 %v1182, 64
    %v2341 = vpop.permute.xlu0 %2340
    %v2342 = vsel %vm1936, %v2339, 0
    %v2344 = vsel %vm1936, %v2341, 0
    %2346 = vmatprep.subr.mxu0 0.0
    %2347 = vmatpush1.xpose.msra.mxu0 %v2344
    %2348 = vmatprep.subr.mxu0 0.0
    %2349 = vmatpush1.xpose.msra.mxu0 0.0
    %2350 = vmatprep.subr.mxu0 0.0
    %2351 = vmatpush1.xpose.msra.mxu0 0.0
    %2352 = vmatprep.subr.mxu0 0.0
    %2353 = vmatpush1.xpose.msra.mxu0 0.0
    %2354 = vmatprep.subr.mxu0 0.0
    %2355 = vmatpush1.xpose.msra.mxu0 0.0
    %2356 = vmatprep.subr.mxu0 0.0
    %2357 = vmatpush1.xpose.msra.mxu0 0.0
    %2358 = vmatprep.subr.mxu0 0.0
    %2359 = vmatpush1.xpose.msra.mxu0 0.0
    %2360 = vmatprep.subr.mxu0 0.0
    %2361 = vmatpush1.xpose.msra.mxu0 0.0
    %2362 = vmatprep.subr.mxu0 0.0
    %2363 = vmatpush1.xpose.msra.mxu0 0.0
    %2364 = vmatprep.subr.mxu0 0.0
    %2365 = vmatpush1.xpose.msra.mxu0 0.0
    %2366 = vmatprep.subr.mxu0 0.0
    %2367 = vmatpush1.xpose.msra.mxu0 0.0
    %2368 = vmatprep.subr.mxu0 0.0
    %2369 = vmatpush1.xpose.msra.mxu0 0.0
    %2370 = vmatprep.subr.mxu0 0.0
    %2371 = vmatpush1.xpose.msra.mxu0 0.0
    %2372 = vmatprep.subr.mxu0 0.0
    %2373 = vmatpush1.xpose.msra.mxu0 0.0
    %2374 = vmatprep.subr.mxu0 0.0
    %2375 = vmatpush1.xpose.msra.mxu0 0.0
    %2376 = vmatprep.subr.mxu0 0.0
    %2377 = vmatpush1.xpose.msra.mxu0 0.0
    %2378 = vmatprep.subr.mxu0 0.0
    %2379 = vmatpush1.xpose.msra.mxu0 0.0
    %2380 = vmatprep.subr.mxu0 0.0
    %2381 = vmatpush1.xpose.msra.mxu0 0.0
    %2382 = vmatprep.subr.mxu0 0.0
    %2383 = vmatpush1.xpose.msra.mxu0 0.0
    %2384 = vmatprep.subr.mxu0 0.0
    %2385 = vmatpush1.xpose.msra.mxu0 0.0
    %2386 = vmatprep.subr.mxu0 0.0
    %2387 = vmatpush1.xpose.msra.mxu0 0.0
    %2388 = vmatprep.subr.mxu0 0.0
    %2389 = vmatpush1.xpose.msra.mxu0 0.0
    %2390 = vmatprep.subr.mxu0 0.0
    %2391 = vmatpush1.xpose.msra.mxu0 0.0
    %2392 = vmatprep.subr.mxu0 0.0
    %2393 = vmatpush1.xpose.msra.mxu0 0.0
    %2394 = vmatprep.subr.mxu0 0.0
    %2395 = vmatpush1.xpose.msra.mxu0 0.0
    %2396 = vmatprep.subr.mxu0 0.0
    %2397 = vmatpush1.xpose.msra.mxu0 0.0
    %2398 = vmatprep.subr.mxu0 0.0
    %2399 = vmatpush1.xpose.msra.mxu0 0.0
    %2400 = vmatprep.subr.mxu0 0.0
    %2401 = vmatpush1.xpose.msra.mxu0 0.0
    %2402 = vmatprep.subr.mxu0 0.0
    %2403 = vmatpush1.xpose.msra.mxu0 0.0
    %2404 = vmatprep.subr.mxu0 0.0
    %2405 = vmatpush1.xpose.msra.mxu0 0.0
    %2406 = vmatprep.subr.mxu0 0.0
    %2407 = vmatpush1.xpose.msra.mxu0 0.0
    %2408 = vmatprep.subr.mxu0 0.0
    %2409 = vmatpush1.xpose.msra.mxu0 0.0
    %2410 = vmatprep.mubr.f32.mxu0 0.0
    %2411 = vmatmul.mubr.f32.gmra.mrb[0].mxu0 %v2342
    %v2412 = vpop.f32.mrb[0].mxu0
    %v2413 = vadd.f32 0.0, %v2412
    %v2414 = vpop.f32.mrb[0].mxu0
    %2415 = vdwg.mxu0
    %v2416 = vsel %vm2089, %v2335, -inf
    %2417 = vmax.xlane.f32.xlu0 %v2416
    %v2418 = vpop.xlane.xlu0 %2417
    %v2419 = vsel %vm2089, %v2413, -inf
    %2420 = vmax.xlane.f32.xlu0 %v2419
    %v2421 = vpop.xlane.xlu0 %2420
    %v2422 = vsub.f32 %v2335, %v2418
    %v2423 = vsub.f32 %v2413, %v2421
    %v2424 = vmul.f32 %v2422, 1.442695
    %v2425 = vpow.pop %v2424
    %v2426 = vmul.f32 %v2423, 1.442695
    %v2427 = vpow.pop %v2426
    %v2428 = vsel %vm2089, %v2425, 0.0
    %2429 = vadd.xlane.f32.xlu0 %v2428
    %v2430 = vpop.xlane.xlu0 %2429
    %v2431 = vsel %vm2089, %v2427, 0.0
    %2432 = vadd.xlane.f32.xlu0 %v2431
    %v2433 = vpop.xlane.xlu0 %2432
    %v2434 = vrcp.pop %v2430
    %v2435 = vmul.f32 %v2425, %v2434
    %v2436 = vrcp.pop %v2433
    %v2437 = vmul.f32 %v2427, %v2436
    %2439 = vrot.lane.b32.xlu0 %v1770, 64
    %v2440 = vpop.permute.xlu0 %2439
    %v2443 = vsel %vm2089, %v2435, 0
    %2445 = vmatprep.subr.mxu0 0.0
    %2446 = vmatpush1.msra.mxu0 %v2440
    %2447 = vmatprep.subr.mxu0 0.0
    %2448 = vmatpush1.msra.mxu0 0.0
    %2449 = vmatprep.subr.mxu0 0.0
    %2450 = vmatpush1.msra.mxu0 0.0
    %2451 = vmatprep.subr.mxu0 0.0
    %2452 = vmatpush1.msra.mxu0 0.0
    %2453 = vmatprep.subr.mxu0 0.0
    %2454 = vmatpush1.msra.mxu0 0.0
    %2455 = vmatprep.subr.mxu0 0.0
    %2456 = vmatpush1.msra.mxu0 0.0
    %2457 = vmatprep.subr.mxu0 0.0
    %2458 = vmatpush1.msra.mxu0 0.0
    %2459 = vmatprep.subr.mxu0 0.0
    %2460 = vmatpush1.msra.mxu0 0.0
    %2461 = vmatprep.subr.mxu0 0.0
    %2462 = vmatpush1.msra.mxu0 0.0
    %2463 = vmatprep.subr.mxu0 0.0
    %2464 = vmatpush1.msra.mxu0 0.0
    %2465 = vmatprep.subr.mxu0 0.0
    %2466 = vmatpush1.msra.mxu0 0.0
    %2467 = vmatprep.subr.mxu0 0.0
    %2468 = vmatpush1.msra.mxu0 0.0
    %2469 = vmatprep.subr.mxu0 0.0
    %2470 = vmatpush1.msra.mxu0 0.0
    %2471 = vmatprep.subr.mxu0 0.0
    %2472 = vmatpush1.msra.mxu0 0.0
    %2473 = vmatprep.subr.mxu0 0.0
    %2474 = vmatpush1.msra.mxu0 0.0
    %2475 = vmatprep.subr.mxu0 0.0
    %2476 = vmatpush1.msra.mxu0 0.0
    %2477 = vmatprep.subr.mxu0 0.0
    %2478 = vmatpush1.msra.mxu0 0.0
    %2479 = vmatprep.subr.mxu0 0.0
    %2480 = vmatpush1.msra.mxu0 0.0
    %2481 = vmatprep.subr.mxu0 0.0
    %2482 = vmatpush1.msra.mxu0 0.0
    %2483 = vmatprep.subr.mxu0 0.0
    %2484 = vmatpush1.msra.mxu0 0.0
    %2485 = vmatprep.subr.mxu0 0.0
    %2486 = vmatpush1.msra.mxu0 0.0
    %2487 = vmatprep.subr.mxu0 0.0
    %2488 = vmatpush1.msra.mxu0 0.0
    %2489 = vmatprep.subr.mxu0 0.0
    %2490 = vmatpush1.msra.mxu0 0.0
    %2491 = vmatprep.subr.mxu0 0.0
    %2492 = vmatpush1.msra.mxu0 0.0
    %2493 = vmatprep.subr.mxu0 0.0
    %2494 = vmatpush1.msra.mxu0 0.0
    %2495 = vmatprep.subr.mxu0 0.0
    %2496 = vmatpush1.msra.mxu0 0.0
    %2497 = vmatprep.subr.mxu0 0.0
    %2498 = vmatpush1.msra.mxu0 0.0
    %2499 = vmatprep.subr.mxu0 0.0
    %2500 = vmatpush1.msra.mxu0 0.0
    %2501 = vmatprep.subr.mxu0 0.0
    %2502 = vmatpush1.msra.mxu0 0.0
    %2503 = vmatprep.subr.mxu0 0.0
    %2504 = vmatpush1.msra.mxu0 0.0
    %2505 = vmatprep.subr.mxu0 0.0
    %2506 = vmatpush1.msra.mxu0 0.0
    %2507 = vmatprep.subr.mxu0 0.0
    %2508 = vmatpush1.msra.mxu0 0.0
    %2509 = vmatprep.mubr.f32.mxu0 0.0
    %2510 = vmatmul.mubr.f32.gmra.mrb[0].mxu0 %v2443
    %v2511 = vpop.f32.mrb[0].mxu0
    %v2512 = vadd.f32 0.0, %v2511
    %v2513 = vpop.f32.mrb[0].mxu0
    %2514 = vdwg.mxu0
    %2516 = vrot.lane.b32.xlu0 %v1776, 64
    %v2517 = vpop.permute.xlu0 %2516
    %v2520 = vsel %vm2089, %v2437, 0
    %2522 = vmatprep.subr.mxu0 0.0
    %2523 = vmatpush1.msra.mxu0 %v2517
    %2524 = vmatprep.subr.mxu0 0.0
    %2525 = vmatpush1.msra.mxu0 0.0
    %2526 = vmatprep.subr.mxu0 0.0
    %2527 = vmatpush1.msra.mxu0 0.0
    %2528 = vmatprep.subr.mxu0 0.0
    %2529 = vmatpush1.msra.mxu0 0.0
    %2530 = vmatprep.subr.mxu0 0.0
    %2531 = vmatpush1.msra.mxu0 0.0
    %2532 = vmatprep.subr.mxu0 0.0
    %2533 = vmatpush1.msra.mxu0 0.0
    %2534 = vmatprep.subr.mxu0 0.0
    %2535 = vmatpush1.msra.mxu0 0.0
    %2536 = vmatprep.subr.mxu0 0.0
    %2537 = vmatpush1.msra.mxu0 0.0
    %2538 = vmatprep.subr.mxu0 0.0
    %2539 = vmatpush1.msra.mxu0 0.0
    %2540 = vmatprep.subr.mxu0 0.0
    %2541 = vmatpush1.msra.mxu0 0.0
    %2542 = vmatprep.subr.mxu0 0.0
    %2543 = vmatpush1.msra.mxu0 0.0
    %2544 = vmatprep.subr.mxu0 0.0
    %2545 = vmatpush1.msra.mxu0 0.0
    %2546 = vmatprep.subr.mxu0 0.0
    %2547 = vmatpush1.msra.mxu0 0.0
    %2548 = vmatprep.subr.mxu0 0.0
    %2549 = vmatpush1.msra.mxu0 0.0
    %2550 = vmatprep.subr.mxu0 0.0
    %2551 = vmatpush1.msra.mxu0 0.0
    %2552 = vmatprep.subr.mxu0 0.0
    %2553 = vmatpush1.msra.mxu0 0.0
    %2554 = vmatprep.subr.mxu0 0.0
    %2555 = vmatpush1.msra.mxu0 0.0
    %2556 = vmatprep.subr.mxu0 0.0
    %2557 = vmatpush1.msra.mxu0 0.0
    %2558 = vmatprep.subr.mxu0 0.0
    %2559 = vmatpush1.msra.mxu0 0.0
    %2560 = vmatprep.subr.mxu0 0.0
    %2561 = vmatpush1.msra.mxu0 0.0
    %2562 = vmatprep.subr.mxu0 0.0
    %2563 = vmatpush1.msra.mxu0 0.0
    %2564 = vmatprep.subr.mxu0 0.0
    %2565 = vmatpush1.msra.mxu0 0.0
    %2566 = vmatprep.subr.mxu0 0.0
    %2567 = vmatpush1.msra.mxu0 0.0
    %2568 = vmatprep.subr.mxu0 0.0
    %2569 = vmatpush1.msra.mxu0 0.0
    %2570 = vmatprep.subr.mxu0 0.0
    %2571 = vmatpush1.msra.mxu0 0.0
    %2572 = vmatprep.subr.mxu0 0.0
    %2573 = vmatpush1.msra.mxu0 0.0
    %2574 = vmatprep.subr.mxu0 0.0
    %2575 = vmatpush1.msra.mxu0 0.0
    %2576 = vmatprep.subr.mxu0 0.0
    %2577 = vmatpush1.msra.mxu0 0.0
    %2578 = vmatprep.subr.mxu0 0.0
    %2579 = vmatpush1.msra.mxu0 0.0
    %2580 = vmatprep.subr.mxu0 0.0
    %2581 = vmatpush1.msra.mxu0 0.0
    %2582 = vmatprep.subr.mxu0 0.0
    %2583 = vmatpush1.msra.mxu0 0.0
    %2584 = vmatprep.subr.mxu0 0.0
    %2585 = vmatpush1.msra.mxu0 0.0
    %2586 = vmatprep.mubr.f32.mxu0 0.0
    %2587 = vmatmul.mubr.f32.gmra.mrb[0].mxu0 %v2520
    %v2588 = vpop.f32.mrb[0].mxu0
    %v2589 = vadd.f32 0.0, %v2588
    %v2590 = vpop.f32.mrb[0].mxu0
    %2591 = vdwg.mxu0
    %2594 = vrot.lane.b32.xlu0 %v2512, 64
    %v2595 = vpop.permute.xlu0 %2594
    %2596 = vrot.lane.b32.xlu0 %v2589, 64
    %v2597 = vpop.permute.xlu0 %2596
    %vm2600 = vcmask 1048064
    %2601 = vst.msk [vmem:[#allocation2] sm:$0xff] %vm2600, %v2595
    %2602 = vst.msk [vmem:[#allocation2 + $0x20] sm:$0xff] %vm2600, %v2597
    %v2603 = vmul.f32 %v584, 0.125
    %v2604 = vmul.f32 %v590, 0.125
    %v2606 = vsel %vm1936, %v2603, 0
    %v2609 = vsel %vm1936, %v1178, 0
    %2611 = vmatprep.subr.mxu0 0.0
    %2612 = vmatpush1.xpose.msra.mxu0 %v2609
    %2613 = vmatprep.subr.mxu0 0.0
    %2614 = vmatpush1.xpose.msra.mxu0 0.0
    %2615 = vmatprep.subr.mxu0 0.0
    %2616 = vmatpush1.xpose.msra.mxu0 0.0
    %2617 = vmatprep.subr.mxu0 0.0
    %2618 = vmatpush1.xpose.msra.mxu0 0.0
    %2619 = vmatprep.subr.mxu0 0.0
    %2620 = vmatpush1.xpose.msra.mxu0 0.0
    %2621 = vmatprep.subr.mxu0 0.0
    %2622 = vmatpush1.xpose.msra.mxu0 0.0
    %2623 = vmatprep.subr.mxu0 0.0
    %2624 = vmatpush1.xpose.msra.mxu0 0.0
    %2625 = vmatprep.subr.mxu0 0.0
    %2626 = vmatpush1.xpose.msra.mxu0 0.0
    %2627 = vmatprep.subr.mxu0 0.0
    %2628 = vmatpush1.xpose.msra.mxu0 0.0
    %2629 = vmatprep.subr.mxu0 0.0
    %2630 = vmatpush1.xpose.msra.mxu0 0.0
    %2631 = vmatprep.subr.mxu0 0.0
    %2632 = vmatpush1.xpose.msra.mxu0 0.0
    %2633 = vmatprep.subr.mxu0 0.0
    %2634 = vmatpush1.xpose.msra.mxu0 0.0
    %2635 = vmatprep.subr.mxu0 0.0
    %2636 = vmatpush1.xpose.msra.mxu0 0.0
    %2637 = vmatprep.subr.mxu0 0.0
    %2638 = vmatpush1.xpose.msra.mxu0 0.0
    %2639 = vmatprep.subr.mxu0 0.0
    %2640 = vmatpush1.xpose.msra.mxu0 0.0
    %2641 = vmatprep.subr.mxu0 0.0
    %2642 = vmatpush1.xpose.msra.mxu0 0.0
    %2643 = vmatprep.subr.mxu0 0.0
    %2644 = vmatpush1.xpose.msra.mxu0 0.0
    %2645 = vmatprep.subr.mxu0 0.0
    %2646 = vmatpush1.xpose.msra.mxu0 0.0
    %2647 = vmatprep.subr.mxu0 0.0
    %2648 = vmatpush1.xpose.msra.mxu0 0.0
    %2649 = vmatprep.subr.mxu0 0.0
    %2650 = vmatpush1.xpose.msra.mxu0 0.0
    %2651 = vmatprep.subr.mxu0 0.0
    %2652 = vmatpush1.xpose.msra.mxu0 0.0
    %2653 = vmatprep.subr.mxu0 0.0
    %2654 = vmatpush1.xpose.msra.mxu0 0.0
    %2655 = vmatprep.subr.mxu0 0.0
    %2656 = vmatpush1.xpose.msra.mxu0 0.0
    %2657 = vmatprep.subr.mxu0 0.0
    %2658 = vmatpush1.xpose.msra.mxu0 0.0
    %2659 = vmatprep.subr.mxu0 0.0
    %2660 = vmatpush1.xpose.msra.mxu0 0.0
    %2661 = vmatprep.subr.mxu0 0.0
    %2662 = vmatpush1.xpose.msra.mxu0 0.0
    %2663 = vmatprep.subr.mxu0 0.0
    %2664 = vmatpush1.xpose.msra.mxu0 0.0
    %2665 = vmatprep.subr.mxu0 0.0
    %2666 = vmatpush1.xpose.msra.mxu0 0.0
    %2667 = vmatprep.subr.mxu0 0.0
    %2668 = vmatpush1.xpose.msra.mxu0 0.0
    %2669 = vmatprep.subr.mxu0 0.0
    %2670 = vmatpush1.xpose.msra.mxu0 0.0
    %2671 = vmatprep.subr.mxu0 0.0
    %2672 = vmatpush1.xpose.msra.mxu0 0.0
    %2673 = vmatprep.subr.mxu0 0.0
    %2674 = vmatpush1.xpose.msra.mxu0 0.0
    %2675 = vmatprep.mubr.f32.mxu0 0.0
    %2676 = vmatmul.mubr.f32.gmra.mrb[0].mxu0 %v2606
    %v2677 = vpop.f32.mrb[0].mxu0
    %v2678 = vadd.f32 0.0, %v2677
    %v2679 = vpop.f32.mrb[0].mxu0
    %2680 = vdwg.mxu0
    %v2682 = vsel %vm1936, %v2604, 0
    %v2685 = vsel %vm1936, %v1184, 0
    %2687 = vmatprep.subr.mxu0 0.0
    %2688 = vmatpush1.xpose.msra.mxu0 %v2685
    %2689 = vmatprep.subr.mxu0 0.0
    %2690 = vmatpush1.xpose.msra.mxu0 0.0
    %2691 = vmatprep.subr.mxu0 0.0
    %2692 = vmatpush1.xpose.msra.mxu0 0.0
    %2693 = vmatprep.subr.mxu0 0.0
    %2694 = vmatpush1.xpose.msra.mxu0 0.0
    %2695 = vmatprep.subr.mxu0 0.0
    %2696 = vmatpush1.xpose.msra.mxu0 0.0
    %2697 = vmatprep.subr.mxu0 0.0
    %2698 = vmatpush1.xpose.msra.mxu0 0.0
    %2699 = vmatprep.subr.mxu0 0.0
    %2700 = vmatpush1.xpose.msra.mxu0 0.0
    %2701 = vmatprep.subr.mxu0 0.0
    %2702 = vmatpush1.xpose.msra.mxu0 0.0
    %2703 = vmatprep.subr.mxu0 0.0
    %2704 = vmatpush1.xpose.msra.mxu0 0.0
    %2705 = vmatprep.subr.mxu0 0.0
    %2706 = vmatpush1.xpose.msra.mxu0 0.0
    %2707 = vmatprep.subr.mxu0 0.0
    %2708 = vmatpush1.xpose.msra.mxu0 0.0
    %2709 = vmatprep.subr.mxu0 0.0
    %2710 = vmatpush1.xpose.msra.mxu0 0.0
    %2711 = vmatprep.subr.mxu0 0.0
    %2712 = vmatpush1.xpose.msra.mxu0 0.0
    %2713 = vmatprep.subr.mxu0 0.0
    %2714 = vmatpush1.xpose.msra.mxu0 0.0
    %2715 = vmatprep.subr.mxu0 0.0
    %2716 = vmatpush1.xpose.msra.mxu0 0.0
    %2717 = vmatprep.subr.mxu0 0.0
    %2718 = vmatpush1.xpose.msra.mxu0 0.0
    %2719 = vmatprep.subr.mxu0 0.0
    %2720 = vmatpush1.xpose.msra.mxu0 0.0
    %2721 = vmatprep.subr.mxu0 0.0
    %2722 = vmatpush1.xpose.msra.mxu0 0.0
    %2723 = vmatprep.subr.mxu0 0.0
    %2724 = vmatpush1.xpose.msra.mxu0 0.0
    %2725 = vmatprep.subr.mxu0 0.0
    %2726 = vmatpush1.xpose.msra.mxu0 0.0
    %2727 = vmatprep.subr.mxu0 0.0
    %2728 = vmatpush1.xpose.msra.mxu0 0.0
    %2729 = vmatprep.subr.mxu0 0.0
    %2730 = vmatpush1.xpose.msra.mxu0 0.0
    %2731 = vmatprep.subr.mxu0 0.0
    %2732 = vmatpush1.xpose.msra.mxu0 0.0
    %2733 = vmatprep.subr.mxu0 0.0
    %2734 = vmatpush1.xpose.msra.mxu0 0.0
    %2735 = vmatprep.subr.mxu0 0.0
    %2736 = vmatpush1.xpose.msra.mxu0 0.0
    %2737 = vmatprep.subr.mxu0 0.0
    %2738 = vmatpush1.xpose.msra.mxu0 0.0
    %2739 = vmatprep.subr.mxu0 0.0
    %2740 = vmatpush1.xpose.msra.mxu0 0.0
    %2741 = vmatprep.subr.mxu0 0.0
    %2742 = vmatpush1.xpose.msra.mxu0 0.0
    %2743 = vmatprep.subr.mxu0 0.0
    %2744 = vmatpush1.xpose.msra.mxu0 0.0
    %2745 = vmatprep.subr.mxu0 0.0
    %2746 = vmatpush1.xpose.msra.mxu0 0.0
    %2747 = vmatprep.subr.mxu0 0.0
    %2748 = vmatpush1.xpose.msra.mxu0 0.0
    %2749 = vmatprep.subr.mxu0 0.0
    %2750 = vmatpush1.xpose.msra.mxu0 0.0
    %2751 = vmatprep.mubr.f32.mxu0 0.0
    %2752 = vmatmul.mubr.f32.gmra.mrb[0].mxu0 %v2682
    %v2753 = vpop.f32.mrb[0].mxu0
    %v2754 = vadd.f32 0.0, %v2753
    %v2755 = vpop.f32.mrb[0].mxu0
    %2756 = vdwg.mxu0
    %v2757 = vsel %vm2089, %v2678, -inf
    %2758 = vmax.xlane.f32.xlu0 %v2757
    %v2759 = vpop.xlane.xlu0 %2758
    %v2760 = vsel %vm2089, %v2754, -inf
    %2761 = vmax.xlane.f32.xlu0 %v2760
    %v2762 = vpop.xlane.xlu0 %2761
    %v2763 = vsub.f32 %v2678, %v2759
    %v2764 = vsub.f32 %v2754, %v2762
    %v2765 = vmul.f32 %v2763, 1.442695
    %v2766 = vpow.pop %v2765
    %v2767 = vmul.f32 %v2764, 1.442695
    %v2768 = vpow.pop %v2767
    %v2769 = vsel %vm2089, %v2766, 0.0
    %2770 = vadd.xlane.f32.xlu0 %v2769
    %v2771 = vpop.xlane.xlu0 %2770
    %v2772 = vsel %vm2089, %v2768, 0.0
    %2773 = vadd.xlane.f32.xlu0 %v2772
    %v2774 = vpop.xlane.xlu0 %2773
    %v2775 = vrcp.pop %v2771
    %v2776 = vmul.f32 %v2766, %v2775
    %v2777 = vrcp.pop %v2774
    %v2778 = vmul.f32 %v2768, %v2777
    %v2780 = vsel %vm2089, %v2776, 0
    %2782 = vmatprep.subr.mxu0 0.0
    %2783 = vmatpush1.msra.mxu0 %v1772
    %2784 = vmatprep.subr.mxu0 0.0
    %2785 = vmatpush1.msra.mxu0 0.0
    %2786 = vmatprep.subr.mxu0 0.0
    %2787 = vmatpush1.msra.mxu0 0.0
    %2788 = vmatprep.subr.mxu0 0.0
    %2789 = vmatpush1.msra.mxu0 0.0
    %2790 = vmatprep.subr.mxu0 0.0
    %2791 = vmatpush1.msra.mxu0 0.0
    %2792 = vmatprep.subr.mxu0 0.0
    %2793 = vmatpush1.msra.mxu0 0.0
    %2794 = vmatprep.subr.mxu0 0.0
    %2795 = vmatpush1.msra.mxu0 0.0
    %2796 = vmatprep.subr.mxu0 0.0
    %2797 = vmatpush1.msra.mxu0 0.0
    %2798 = vmatprep.subr.mxu0 0.0
    %2799 = vmatpush1.msra.mxu0 0.0
    %2800 = vmatprep.subr.mxu0 0.0
    %2801 = vmatpush1.msra.mxu0 0.0
    %2802 = vmatprep.subr.mxu0 0.0
    %2803 = vmatpush1.msra.mxu0 0.0
    %2804 = vmatprep.subr.mxu0 0.0
    %2805 = vmatpush1.msra.mxu0 0.0
    %2806 = vmatprep.subr.mxu0 0.0
    %2807 = vmatpush1.msra.mxu0 0.0
    %2808 = vmatprep.subr.mxu0 0.0
    %2809 = vmatpush1.msra.mxu0 0.0
    %2810 = vmatprep.subr.mxu0 0.0
    %2811 = vmatpush1.msra.mxu0 0.0
    %2812 = vmatprep.subr.mxu0 0.0
    %2813 = vmatpush1.msra.mxu0 0.0
    %2814 = vmatprep.subr.mxu0 0.0
    %2815 = vmatpush1.msra.mxu0 0.0
    %2816 = vmatprep.subr.mxu0 0.0
    %2817 = vmatpush1.msra.mxu0 0.0
    %2818 = vmatprep.subr.mxu0 0.0
    %2819 = vmatpush1.msra.mxu0 0.0
    %2820 = vmatprep.subr.mxu0 0.0
    %2821 = vmatpush1.msra.mxu0 0.0
    %2822 = vmatprep.subr.mxu0 0.0
    %2823 = vmatpush1.msra.mxu0 0.0
    %2824 = vmatprep.subr.mxu0 0.0
    %2825 = vmatpush1.msra.mxu0 0.0
    %2826 = vmatprep.subr.mxu0 0.0
    %2827 = vmatpush1.msra.mxu0 0.0
    %2828 = vmatprep.subr.mxu0 0.0
    %2829 = vmatpush1.msra.mxu0 0.0
    %2830 = vmatprep.subr.mxu0 0.0
    %2831 = vmatpush1.msra.mxu0 0.0
    %2832 = vmatprep.subr.mxu0 0.0
    %2833 = vmatpush1.msra.mxu0 0.0
    %2834 = vmatprep.subr.mxu0 0.0
    %2835 = vmatpush1.msra.mxu0 0.0
    %2836 = vmatprep.subr.mxu0 0.0
    %2837 = vmatpush1.msra.mxu0 0.0
    %2838 = vmatprep.subr.mxu0 0.0
    %2839 = vmatpush1.msra.mxu0 0.0
    %2840 = vmatprep.subr.mxu0 0.0
    %2841 = vmatpush1.msra.mxu0 0.0
    %2842 = vmatprep.subr.mxu0 0.0
    %2843 = vmatpush1.msra.mxu0 0.0
    %2844 = vmatprep.subr.mxu0 0.0
    %2845 = vmatpush1.msra.mxu0 0.0
    %2846 = vmatprep.mubr.f32.mxu0 0.0
    %2847 = vmatmul.mubr.f32.gmra.mrb[0].mxu0 %v2780
    %v2848 = vpop.f32.mrb[0].mxu0
    %v2849 = vadd.f32 0.0, %v2848
    %v2850 = vpop.f32.mrb[0].mxu0
    %2851 = vdwg.mxu0
    %v2853 = vsel %vm2089, %v2778, 0
    %2855 = vmatprep.subr.mxu0 0.0
    %2856 = vmatpush1.msra.mxu0 %v1778
    %2857 = vmatprep.subr.mxu0 0.0
    %2858 = vmatpush1.msra.mxu0 0.0
    %2859 = vmatprep.subr.mxu0 0.0
    %2860 = vmatpush1.msra.mxu0 0.0
    %2861 = vmatprep.subr.mxu0 0.0
    %2862 = vmatpush1.msra.mxu0 0.0
    %2863 = vmatprep.subr.mxu0 0.0
    %2864 = vmatpush1.msra.mxu0 0.0
    %2865 = vmatprep.subr.mxu0 0.0
    %2866 = vmatpush1.msra.mxu0 0.0
    %2867 = vmatprep.subr.mxu0 0.0
    %2868 = vmatpush1.msra.mxu0 0.0
    %2869 = vmatprep.subr.mxu0 0.0
    %2870 = vmatpush1.msra.mxu0 0.0
    %2871 = vmatprep.subr.mxu0 0.0
    %2872 = vmatpush1.msra.mxu0 0.0
    %2873 = vmatprep.subr.mxu0 0.0
    %2874 = vmatpush1.msra.mxu0 0.0
    %2875 = vmatprep.subr.mxu0 0.0
    %2876 = vmatpush1.msra.mxu0 0.0
    %2877 = vmatprep.subr.mxu0 0.0
    %2878 = vmatpush1.msra.mxu0 0.0
    %2879 = vmatprep.subr.mxu0 0.0
    %2880 = vmatpush1.msra.mxu0 0.0
    %2881 = vmatprep.subr.mxu0 0.0
    %2882 = vmatpush1.msra.mxu0 0.0
    %2883 = vmatprep.subr.mxu0 0.0
    %2884 = vmatpush1.msra.mxu0 0.0
    %2885 = vmatprep.subr.mxu0 0.0
    %2886 = vmatpush1.msra.mxu0 0.0
    %2887 = vmatprep.subr.mxu0 0.0
    %2888 = vmatpush1.msra.mxu0 0.0
    %2889 = vmatprep.subr.mxu0 0.0
    %2890 = vmatpush1.msra.mxu0 0.0
    %2891 = vmatprep.subr.mxu0 0.0
    %2892 = vmatpush1.msra.mxu0 0.0
    %2893 = vmatprep.subr.mxu0 0.0
    %2894 = vmatpush1.msra.mxu0 0.0
    %2895 = vmatprep.subr.mxu0 0.0
    %2896 = vmatpush1.msra.mxu0 0.0
    %2897 = vmatprep.subr.mxu0 0.0
    %2898 = vmatpush1.msra.mxu0 0.0
    %2899 = vmatprep.subr.mxu0 0.0
    %2900 = vmatpush1.msra.mxu0 0.0
    %2901 = vmatprep.subr.mxu0 0.0
    %2902 = vmatpush1.msra.mxu0 0.0
    %2903 = vmatprep.subr.mxu0 0.0
    %2904 = vmatpush1.msra.mxu0 0.0
    %2905 = vmatprep.subr.mxu0 0.0
    %2906 = vmatpush1.msra.mxu0 0.0
    %2907 = vmatprep.subr.mxu0 0.0
    %2908 = vmatpush1.msra.mxu0 0.0
    %2909 = vmatprep.subr.mxu0 0.0
    %2910 = vmatpush1.msra.mxu0 0.0
    %2911 = vmatprep.subr.mxu0 0.0
    %2912 = vmatpush1.msra.mxu0 0.0
    %2913 = vmatprep.subr.mxu0 0.0
    %2914 = vmatpush1.msra.mxu0 0.0
    %2915 = vmatprep.subr.mxu0 0.0
    %2916 = vmatpush1.msra.mxu0 0.0
    %2917 = vmatprep.subr.mxu0 0.0
    %2918 = vmatpush1.msra.mxu0 0.0
    %2919 = vmatprep.mubr.f32.mxu0 0.0
    %2920 = vmatmul.mubr.f32.gmra.mrb[0].mxu0 %v2853
    %v2921 = vpop.f32.mrb[0].mxu0
    %v2922 = vadd.f32 0.0, %v2921
    %v2923 = vpop.f32.mrb[0].mxu0
    %2924 = vdwg.mxu0
    %2925 = vst.msk [vmem:[#allocation2 + $0x8] sm:$0xff] %vm1936, %v2849
    %2926 = vst.msk [vmem:[#allocation2 + $0x28] sm:$0xff] %vm1936, %v2922
    %2927 = vrot.lane.b32.xlu0 %v2603, 64
    %v2928 = vpop.permute.xlu0 %2927
    %2929 = vrot.lane.b32.xlu0 %v1178, 64
    %v2930 = vpop.permute.xlu0 %2929
    %v2931 = vsel %vm1936, %v2928, 0
    %v2933 = vsel %vm1936, %v2930, 0
    %2935 = vmatprep.subr.mxu0 0.0
    %2936 = vmatpush1.xpose.msra.mxu0 %v2933
    %2937 = vmatprep.subr.mxu0 0.0
    %2938 = vmatpush1.xpose.msra.mxu0 0.0
    %2939 = vmatprep.subr.mxu0 0.0
    %2940 = vmatpush1.xpose.msra.mxu0 0.0
    %2941 = vmatprep.subr.mxu0 0.0
    %2942 = vmatpush1.xpose.msra.mxu0 0.0
    %2943 = vmatprep.subr.mxu0 0.0
    %2944 = vmatpush1.xpose.msra.mxu0 0.0
    %2945 = vmatprep.subr.mxu0 0.0
    %2946 = vmatpush1.xpose.msra.mxu0 0.0
    %2947 = vmatprep.subr.mxu0 0.0
    %2948 = vmatpush1.xpose.msra.mxu0 0.0
    %2949 = vmatprep.subr.mxu0 0.0
    %2950 = vmatpush1.xpose.msra.mxu0 0.0
    %2951 = vmatprep.subr.mxu0 0.0
    %2952 = vmatpush1.xpose.msra.mxu0 0.0
    %2953 = vmatprep.subr.mxu0 0.0
    %2954 = vmatpush1.xpose.msra.mxu0 0.0
    %2955 = vmatprep.subr.mxu0 0.0
    %2956 = vmatpush1.xpose.msra.mxu0 0.0
    %2957 = vmatprep.subr.mxu0 0.0
    %2958 = vmatpush1.xpose.msra.mxu0 0.0
    %2959 = vmatprep.subr.mxu0 0.0
    %2960 = vmatpush1.xpose.msra.mxu0 0.0
    %2961 = vmatprep.subr.mxu0 0.0
    %2962 = vmatpush1.xpose.msra.mxu0 0.0
    %2963 = vmatprep.subr.mxu0 0.0
    %2964 = vmatpush1.xpose.msra.mxu0 0.0
    %2965 = vmatprep.subr.mxu0 0.0
    %2966 = vmatpush1.xpose.msra.mxu0 0.0
    %2967 = vmatprep.subr.mxu0 0.0
    %2968 = vmatpush1.xpose.msra.mxu0 0.0
    %2969 = vmatprep.subr.mxu0 0.0
    %2970 = vmatpush1.xpose.msra.mxu0 0.0
    %2971 = vmatprep.subr.mxu0 0.0
    %2972 = vmatpush1.xpose.msra.mxu0 0.0
    %2973 = vmatprep.subr.mxu0 0.0
    %2974 = vmatpush1.xpose.msra.mxu0 0.0
    %2975 = vmatprep.subr.mxu0 0.0
    %2976 = vmatpush1.xpose.msra.mxu0 0.0
    %2977 = vmatprep.subr.mxu0 0.0
    %2978 = vmatpush1.xpose.msra.mxu0 0.0
    %2979 = vmatprep.subr.mxu0 0.0
    %2980 = vmatpush1.xpose.msra.mxu0 0.0
    %2981 = vmatprep.subr.mxu0 0.0
    %2982 = vmatpush1.xpose.msra.mxu0 0.0
    %2983 = vmatprep.subr.mxu0 0.0
    %2984 = vmatpush1.xpose.msra.mxu0 0.0
    %2985 = vmatprep.subr.mxu0 0.0
    %2986 = vmatpush1.xpose.msra.mxu0 0.0
    %2987 = vmatprep.subr.mxu0 0.0
    %2988 = vmatpush1.xpose.msra.mxu0 0.0
    %2989 = vmatprep.subr.mxu0 0.0
    %2990 = vmatpush1.xpose.msra.mxu0 0.0
    %2991 = vmatprep.subr.mxu0 0.0
    %2992 = vmatpush1.xpose.msra.mxu0 0.0
    %2993 = vmatprep.subr.mxu0 0.0
    %2994 = vmatpush1.xpose.msra.mxu0 0.0
    %2995 = vmatprep.subr.mxu0 0.0
    %2996 = vmatpush1.xpose.msra.mxu0 0.0
    %2997 = vmatprep.subr.mxu0 0.0
    %2998 = vmatpush1.xpose.msra.mxu0 0.0
    %2999 = vmatprep.mubr.f32.mxu0 0.0
    %3000 = vmatmul.mubr.f32.gmra.mrb[0].mxu0 %v2931
    %v3001 = vpop.f32.mrb[0].mxu0
    %v3002 = vadd.f32 0.0, %v3001
    %v3003 = vpop.f32.mrb[0].mxu0
    %3004 = vdwg.mxu0
    %3005 = vrot.lane.b32.xlu0 %v2604, 64
    %v3006 = vpop.permute.xlu0 %3005
    %3007 = vrot.lane.b32.xlu0 %v1184, 64
    %v3008 = vpop.permute.xlu0 %3007
    %v3009 = vsel %vm1936, %v3006, 0
    %v3011 = vsel %vm1936, %v3008, 0
    %3013 = vmatprep.subr.mxu0 0.0
    %3014 = vmatpush1.xpose.msra.mxu0 %v3011
    %3015 = vmatprep.subr.mxu0 0.0
    %3016 = vmatpush1.xpose.msra.mxu0 0.0
    %3017 = vmatprep.subr.mxu0 0.0
    %3018 = vmatpush1.xpose.msra.mxu0 0.0
    %3019 = vmatprep.subr.mxu0 0.0
    %3020 = vmatpush1.xpose.msra.mxu0 0.0
    %3021 = vmatprep.subr.mxu0 0.0
    %3022 = vmatpush1.xpose.msra.mxu0 0.0
    %3023 = vmatprep.subr.mxu0 0.0
    %3024 = vmatpush1.xpose.msra.mxu0 0.0
    %3025 = vmatprep.subr.mxu0 0.0
    %3026 = vmatpush1.xpose.msra.mxu0 0.0
    %3027 = vmatprep.subr.mxu0 0.0
    %3028 = vmatpush1.xpose.msra.mxu0 0.0
    %3029 = vmatprep.subr.mxu0 0.0
    %3030 = vmatpush1.xpose.msra.mxu0 0.0
    %3031 = vmatprep.subr.mxu0 0.0
    %3032 = vmatpush1.xpose.msra.mxu0 0.0
    %3033 = vmatprep.subr.mxu0 0.0
    %3034 = vmatpush1.xpose.msra.mxu0 0.0
    %3035 = vmatprep.subr.mxu0 0.0
    %3036 = vmatpush1.xpose.msra.mxu0 0.0
    %3037 = vmatprep.subr.mxu0 0.0
    %3038 = vmatpush1.xpose.msra.mxu0 0.0
    %3039 = vmatprep.subr.mxu0 0.0
    %3040 = vmatpush1.xpose.msra.mxu0 0.0
    %3041 = vmatprep.subr.mxu0 0.0
    %3042 = vmatpush1.xpose.msra.mxu0 0.0
    %3043 = vmatprep.subr.mxu0 0.0
    %3044 = vmatpush1.xpose.msra.mxu0 0.0
    %3045 = vmatprep.subr.mxu0 0.0
    %3046 = vmatpush1.xpose.msra.mxu0 0.0
    %3047 = vmatprep.subr.mxu0 0.0
    %3048 = vmatpush1.xpose.msra.mxu0 0.0
    %3049 = vmatprep.subr.mxu0 0.0
    %3050 = vmatpush1.xpose.msra.mxu0 0.0
    %3051 = vmatprep.subr.mxu0 0.0
    %3052 = vmatpush1.xpose.msra.mxu0 0.0
    %3053 = vmatprep.subr.mxu0 0.0
    %3054 = vmatpush1.xpose.msra.mxu0 0.0
    %3055 = vmatprep.subr.mxu0 0.0
    %3056 = vmatpush1.xpose.msra.mxu0 0.0
    %3057 = vmatprep.subr.mxu0 0.0
    %3058 = vmatpush1.xpose.msra.mxu0 0.0
    %3059 = vmatprep.subr.mxu0 0.0
    %3060 = vmatpush1.xpose.msra.mxu0 0.0
    %3061 = vmatprep.subr.mxu0 0.0
    %3062 = vmatpush1.xpose.msra.mxu0 0.0
    %3063 = vmatprep.subr.mxu0 0.0
    %3064 = vmatpush1.xpose.msra.mxu0 0.0
    %3065 = vmatprep.subr.mxu0 0.0
    %3066 = vmatpush1.xpose.msra.mxu0 0.0
    %3067 = vmatprep.subr.mxu0 0.0
    %3068 = vmatpush1.xpose.msra.mxu0 0.0
    %3069 = vmatprep.subr.mxu0 0.0
    %3070 = vmatpush1.xpose.msra.mxu0 0.0
    %3071 = vmatprep.subr.mxu0 0.0
    %3072 = vmatpush1.xpose.msra.mxu0 0.0
    %3073 = vmatprep.subr.mxu0 0.0
    %3074 = vmatpush1.xpose.msra.mxu0 0.0
    %3075 = vmatprep.subr.mxu0 0.0
    %3076 = vmatpush1.xpose.msra.mxu0 0.0
    %3077 = vmatprep.mubr.f32.mxu0 0.0
    %3078 = vmatmul.mubr.f32.gmra.mrb[0].mxu0 %v3009
    %v3079 = vpop.f32.mrb[0].mxu0
    %v3080 = vadd.f32 0.0, %v3079
    %v3081 = vpop.f32.mrb[0].mxu0
    %3082 = vdwg.mxu0
    %v3083 = vsel %vm2089, %v3002, -inf
    %3084 = vmax.xlane.f32.xlu0 %v3083
    %v3085 = vpop.xlane.xlu0 %3084
    %v3086 = vsel %vm2089, %v3080, -inf
    %3087 = vmax.xlane.f32.xlu0 %v3086
    %v3088 = vpop.xlane.xlu0 %3087
    %v3089 = vsub.f32 %v3002, %v3085
    %v3090 = vsub.f32 %v3080, %v3088
    %v3091 = vmul.f32 %v3089, 1.442695
    %v3092 = vpow.pop %v3091
    %v3093 = vmul.f32 %v3090, 1.442695
    %v3094 = vpow.pop %v3093
    %v3095 = vsel %vm2089, %v3092, 0.0
    %3096 = vadd.xlane.f32.xlu0 %v3095
    %v3097 = vpop.xlane.xlu0 %3096
    %v3098 = vsel %vm2089, %v3094, 0.0
    %3099 = vadd.xlane.f32.xlu0 %v3098
    %v3100 = vpop.xlane.xlu0 %3099
    %v3101 = vrcp.pop %v3097
    %v3102 = vmul.f32 %v3092, %v3101
    %v3103 = vrcp.pop %v3100
    %v3104 = vmul.f32 %v3094, %v3103
    %3106 = vrot.lane.b32.xlu0 %v1772, 64
    %v3107 = vpop.permute.xlu0 %3106
    %v3110 = vsel %vm2089, %v3102, 0
    %3112 = vmatprep.subr.mxu0 0.0
    %3113 = vmatpush1.msra.mxu0 %v3107
    %3114 = vmatprep.subr.mxu0 0.0
    %3115 = vmatpush1.msra.mxu0 0.0
    %3116 = vmatprep.subr.mxu0 0.0
    %3117 = vmatpush1.msra.mxu0 0.0
    %3118 = vmatprep.subr.mxu0 0.0
    %3119 = vmatpush1.msra.mxu0 0.0
    %3120 = vmatprep.subr.mxu0 0.0
    %3121 = vmatpush1.msra.mxu0 0.0
    %3122 = vmatprep.subr.mxu0 0.0
    %3123 = vmatpush1.msra.mxu0 0.0
    %3124 = vmatprep.subr.mxu0 0.0
    %3125 = vmatpush1.msra.mxu0 0.0
    %3126 = vmatprep.subr.mxu0 0.0
    %3127 = vmatpush1.msra.mxu0 0.0
    %3128 = vmatprep.subr.mxu0 0.0
    %3129 = vmatpush1.msra.mxu0 0.0
    %3130 = vmatprep.subr.mxu0 0.0
    %3131 = vmatpush1.msra.mxu0 0.0
    %3132 = vmatprep.subr.mxu0 0.0
    %3133 = vmatpush1.msra.mxu0 0.0
    %3134 = vmatprep.subr.mxu0 0.0
    %3135 = vmatpush1.msra.mxu0 0.0
    %3136 = vmatprep.subr.mxu0 0.0
    %3137 = vmatpush1.msra.mxu0 0.0
    %3138 = vmatprep.subr.mxu0 0.0
    %3139 = vmatpush1.msra.mxu0 0.0
    %3140 = vmatprep.subr.mxu0 0.0
    %3141 = vmatpush1.msra.mxu0 0.0
    %3142 = vmatprep.subr.mxu0 0.0
    %3143 = vmatpush1.msra.mxu0 0.0
    %3144 = vmatprep.subr.mxu0 0.0
    %3145 = vmatpush1.msra.mxu0 0.0
    %3146 = vmatprep.subr.mxu0 0.0
    %3147 = vmatpush1.msra.mxu0 0.0
    %3148 = vmatprep.subr.mxu0 0.0
    %3149 = vmatpush1.msra.mxu0 0.0
    %3150 = vmatprep.subr.mxu0 0.0
    %3151 = vmatpush1.msra.mxu0 0.0
    %3152 = vmatprep.subr.mxu0 0.0
    %3153 = vmatpush1.msra.mxu0 0.0
    %3154 = vmatprep.subr.mxu0 0.0
    %3155 = vmatpush1.msra.mxu0 0.0
    %3156 = vmatprep.subr.mxu0 0.0
    %3157 = vmatpush1.msra.mxu0 0.0
    %3158 = vmatprep.subr.mxu0 0.0
    %3159 = vmatpush1.msra.mxu0 0.0
    %3160 = vmatprep.subr.mxu0 0.0
    %3161 = vmatpush1.msra.mxu0 0.0
    %3162 = vmatprep.subr.mxu0 0.0
    %3163 = vmatpush1.msra.mxu0 0.0
    %3164 = vmatprep.subr.mxu0 0.0
    %3165 = vmatpush1.msra.mxu0 0.0
    %3166 = vmatprep.subr.mxu0 0.0
    %3167 = vmatpush1.msra.mxu0 0.0
    %3168 = vmatprep.subr.mxu0 0.0
    %3169 = vmatpush1.msra.mxu0 0.0
    %3170 = vmatprep.subr.mxu0 0.0
    %3171 = vmatpush1.msra.mxu0 0.0
    %3172 = vmatprep.subr.mxu0 0.0
    %3173 = vmatpush1.msra.mxu0 0.0
    %3174 = vmatprep.subr.mxu0 0.0
    %3175 = vmatpush1.msra.mxu0 0.0
    %3176 = vmatprep.mubr.f32.mxu0 0.0
    %3177 = vmatmul.mubr.f32.gmra.mrb[0].mxu0 %v3110
    %v3178 = vpop.f32.mrb[0].mxu0
    %v3179 = vadd.f32 0.0, %v3178
    %v3180 = vpop.f32.mrb[0].mxu0
    %3181 = vdwg.mxu0
    %3183 = vrot.lane.b32.xlu0 %v1778, 64
    %v3184 = vpop.permute.xlu0 %3183
    %v3187 = vsel %vm2089, %v3104, 0
    %3189 = vmatprep.subr.mxu0 0.0
    %3190 = vmatpush1.msra.mxu0 %v3184
    %3191 = vmatprep.subr.mxu0 0.0
    %3192 = vmatpush1.msra.mxu0 0.0
    %3193 = vmatprep.subr.mxu0 0.0
    %3194 = vmatpush1.msra.mxu0 0.0
    %3195 = vmatprep.subr.mxu0 0.0
    %3196 = vmatpush1.msra.mxu0 0.0
    %3197 = vmatprep.subr.mxu0 0.0
    %3198 = vmatpush1.msra.mxu0 0.0
    %3199 = vmatprep.subr.mxu0 0.0
    %3200 = vmatpush1.msra.mxu0 0.0
    %3201 = vmatprep.subr.mxu0 0.0
    %3202 = vmatpush1.msra.mxu0 0.0
    %3203 = vmatprep.subr.mxu0 0.0
    %3204 = vmatpush1.msra.mxu0 0.0
    %3205 = vmatprep.subr.mxu0 0.0
    %3206 = vmatpush1.msra.mxu0 0.0
    %3207 = vmatprep.subr.mxu0 0.0
    %3208 = vmatpush1.msra.mxu0 0.0
    %3209 = vmatprep.subr.mxu0 0.0
    %3210 = vmatpush1.msra.mxu0 0.0
    %3211 = vmatprep.subr.mxu0 0.0
    %3212 = vmatpush1.msra.mxu0 0.0
    %3213 = vmatprep.subr.mxu0 0.0
    %3214 = vmatpush1.msra.mxu0 0.0
    %3215 = vmatprep.subr.mxu0 0.0
    %3216 = vmatpush1.msra.mxu0 0.0
    %3217 = vmatprep.subr.mxu0 0.0
    %3218 = vmatpush1.msra.mxu0 0.0
    %3219 = vmatprep.subr.mxu0 0.0
    %3220 = vmatpush1.msra.mxu0 0.0
    %3221 = vmatprep.subr.mxu0 0.0
    %3222 = vmatpush1.msra.mxu0 0.0
    %3223 = vmatprep.subr.mxu0 0.0
    %3224 = vmatpush1.msra.mxu0 0.0
    %3225 = vmatprep.subr.mxu0 0.0
    %3226 = vmatpush1.msra.mxu0 0.0
    %3227 = vmatprep.subr.mxu0 0.0
    %3228 = vmatpush1.msra.mxu0 0.0
    %3229 = vmatprep.subr.mxu0 0.0
    %3230 = vmatpush1.msra.mxu0 0.0
    %3231 = vmatprep.subr.mxu0 0.0
    %3232 = vmatpush1.msra.mxu0 0.0
    %3233 = vmatprep.subr.mxu0 0.0
    %3234 = vmatpush1.msra.mxu0 0.0
    %3235 = vmatprep.subr.mxu0 0.0
    %3236 = vmatpush1.msra.mxu0 0.0
    %3237 = vmatprep.subr.mxu0 0.0
    %3238 = vmatpush1.msra.mxu0 0.0
    %3239 = vmatprep.subr.mxu0 0.0
    %3240 = vmatpush1.msra.mxu0 0.0
    %3241 = vmatprep.subr.mxu0 0.0
    %3242 = vmatpush1.msra.mxu0 0.0
    %3243 = vmatprep.subr.mxu0 0.0
    %3244 = vmatpush1.msra.mxu0 0.0
    %3245 = vmatprep.subr.mxu0 0.0
    %3246 = vmatpush1.msra.mxu0 0.0
    %3247 = vmatprep.subr.mxu0 0.0
    %3248 = vmatpush1.msra.mxu0 0.0
    %3249 = vmatprep.subr.mxu0 0.0
    %3250 = vmatpush1.msra.mxu0 0.0
    %3251 = vmatprep.subr.mxu0 0.0
    %3252 = vmatpush1.msra.mxu0 0.0
    %3253 = vmatprep.mubr.f32.mxu0 0.0
    %3254 = vmatmul.mubr.f32.gmra.mrb[0].mxu0 %v3187
    %v3255 = vpop.f32.mrb[0].mxu0
    %v3256 = vadd.f32 0.0, %v3255
    %v3257 = vpop.f32.mrb[0].mxu0
    %3258 = vdwg.mxu0
    %3261 = vrot.lane.b32.xlu0 %v3179, 64
    %v3262 = vpop.permute.xlu0 %3261
    %3263 = vrot.lane.b32.xlu0 %v3256, 64
    %v3264 = vpop.permute.xlu0 %3263
    %3267 = vst.msk [vmem:[#allocation2 + $0x8] sm:$0xff] %vm2600, %v3262
    %3268 = vst.msk [vmem:[#allocation2 + $0x28] sm:$0xff] %vm2600, %v3264
    %v3269 = vmul.f32 %v736, 0.125
    %v3270 = vmul.f32 %v742, 0.125
    %v3272 = vsel %vm1936, %v3269, 0
    %v3275 = vsel %vm1936, %v1330, 0
    %3277 = vmatprep.subr.mxu0 0.0
    %3278 = vmatpush1.xpose.msra.mxu0 %v3275
    %3279 = vmatprep.subr.mxu0 0.0
    %3280 = vmatpush1.xpose.msra.mxu0 0.0
    %3281 = vmatprep.subr.mxu0 0.0
    %3282 = vmatpush1.xpose.msra.mxu0 0.0
    %3283 = vmatprep.subr.mxu0 0.0
    %3284 = vmatpush1.xpose.msra.mxu0 0.0
    %3285 = vmatprep.subr.mxu0 0.0
    %3286 = vmatpush1.xpose.msra.mxu0 0.0
    %3287 = vmatprep.subr.mxu0 0.0
    %3288 = vmatpush1.xpose.msra.mxu0 0.0
    %3289 = vmatprep.subr.mxu0 0.0
    %3290 = vmatpush1.xpose.msra.mxu0 0.0
    %3291 = vmatprep.subr.mxu0 0.0
    %3292 = vmatpush1.xpose.msra.mxu0 0.0
    %3293 = vmatprep.subr.mxu0 0.0
    %3294 = vmatpush1.xpose.msra.mxu0 0.0
    %3295 = vmatprep.subr.mxu0 0.0
    %3296 = vmatpush1.xpose.msra.mxu0 0.0
    %3297 = vmatprep.subr.mxu0 0.0
    %3298 = vmatpush1.xpose.msra.mxu0 0.0
    %3299 = vmatprep.subr.mxu0 0.0
    %3300 = vmatpush1.xpose.msra.mxu0 0.0
    %3301 = vmatprep.subr.mxu0 0.0
    %3302 = vmatpush1.xpose.msra.mxu0 0.0
    %3303 = vmatprep.subr.mxu0 0.0
    %3304 = vmatpush1.xpose.msra.mxu0 0.0
    %3305 = vmatprep.subr.mxu0 0.0
    %3306 = vmatpush1.xpose.msra.mxu0 0.0
    %3307 = vmatprep.subr.mxu0 0.0
    %3308 = vmatpush1.xpose.msra.mxu0 0.0
    %3309 = vmatprep.subr.mxu0 0.0
    %3310 = vmatpush1.xpose.msra.mxu0 0.0
    %3311 = vmatprep.subr.mxu0 0.0
    %3312 = vmatpush1.xpose.msra.mxu0 0.0
    %3313 = vmatprep.subr.mxu0 0.0
    %3314 = vmatpush1.xpose.msra.mxu0 0.0
    %3315 = vmatprep.subr.mxu0 0.0
    %3316 = vmatpush1.xpose.msra.mxu0 0.0
    %3317 = vmatprep.subr.mxu0 0.0
    %3318 = vmatpush1.xpose.msra.mxu0 0.0
    %3319 = vmatprep.subr.mxu0 0.0
    %3320 = vmatpush1.xpose.msra.mxu0 0.0
    %3321 = vmatprep.subr.mxu0 0.0
    %3322 = vmatpush1.xpose.msra.mxu0 0.0
    %3323 = vmatprep.subr.mxu0 0.0
    %3324 = vmatpush1.xpose.msra.mxu0 0.0
    %3325 = vmatprep.subr.mxu0 0.0
    %3326 = vmatpush1.xpose.msra.mxu0 0.0
    %3327 = vmatprep.subr.mxu0 0.0
    %3328 = vmatpush1.xpose.msra.mxu0 0.0
    %3329 = vmatprep.subr.mxu0 0.0
    %3330 = vmatpush1.xpose.msra.mxu0 0.0
    %3331 = vmatprep.subr.mxu0 0.0
    %3332 = vmatpush1.xpose.msra.mxu0 0.0
    %3333 = vmatprep.subr.mxu0 0.0
    %3334 = vmatpush1.xpose.msra.mxu0 0.0
    %3335 = vmatprep.subr.mxu0 0.0
    %3336 = vmatpush1.xpose.msra.mxu0 0.0
    %3337 = vmatprep.subr.mxu0 0.0
    %3338 = vmatpush1.xpose.msra.mxu0 0.0
    %3339 = vmatprep.subr.mxu0 0.0
    %3340 = vmatpush1.xpose.msra.mxu0 0.0
    %3341 = vmatprep.mubr.f32.mxu0 0.0
    %3342 = vmatmul.mubr.f32.gmra.mrb[0].mxu0 %v3272
    %v3343 = vpop.f32.mrb[0].mxu0
    %v3344 = vadd.f32 0.0, %v3343
    %v3345 = vpop.f32.mrb[0].mxu0
    %3346 = vdwg.mxu0
    %v3348 = vsel %vm1936, %v3270, 0
    %v3351 = vsel %vm1936, %v1336, 0
    %3353 = vmatprep.subr.mxu0 0.0
    %3354 = vmatpush1.xpose.msra.mxu0 %v3351
    %3355 = vmatprep.subr.mxu0 0.0
    %3356 = vmatpush1.xpose.msra.mxu0 0.0
    %3357 = vmatprep.subr.mxu0 0.0
    %3358 = vmatpush1.xpose.msra.mxu0 0.0
    %3359 = vmatprep.subr.mxu0 0.0
    %3360 = vmatpush1.xpose.msra.mxu0 0.0
    %3361 = vmatprep.subr.mxu0 0.0
    %3362 = vmatpush1.xpose.msra.mxu0 0.0
    %3363 = vmatprep.subr.mxu0 0.0
    %3364 = vmatpush1.xpose.msra.mxu0 0.0
    %3365 = vmatprep.subr.mxu0 0.0
    %3366 = vmatpush1.xpose.msra.mxu0 0.0
    %3367 = vmatprep.subr.mxu0 0.0
    %3368 = vmatpush1.xpose.msra.mxu0 0.0
    %3369 = vmatprep.subr.mxu0 0.0
    %3370 = vmatpush1.xpose.msra.mxu0 0.0
    %3371 = vmatprep.subr.mxu0 0.0
    %3372 = vmatpush1.xpose.msra.mxu0 0.0
    %3373 = vmatprep.subr.mxu0 0.0
    %3374 = vmatpush1.xpose.msra.mxu0 0.0
    %3375 = vmatprep.subr.mxu0 0.0
    %3376 = vmatpush1.xpose.msra.mxu0 0.0
    %3377 = vmatprep.subr.mxu0 0.0
    %3378 = vmatpush1.xpose.msra.mxu0 0.0
    %3379 = vmatprep.subr.mxu0 0.0
    %3380 = vmatpush1.xpose.msra.mxu0 0.0
    %3381 = vmatprep.subr.mxu0 0.0
    %3382 = vmatpush1.xpose.msra.mxu0 0.0
    %3383 = vmatprep.subr.mxu0 0.0
    %3384 = vmatpush1.xpose.msra.mxu0 0.0
    %3385 = vmatprep.subr.mxu0 0.0
    %3386 = vmatpush1.xpose.msra.mxu0 0.0
    %3387 = vmatprep.subr.mxu0 0.0
    %3388 = vmatpush1.xpose.msra.mxu0 0.0
    %3389 = vmatprep.subr.mxu0 0.0
    %3390 = vmatpush1.xpose.msra.mxu0 0.0
    %3391 = vmatprep.subr.mxu0 0.0
    %3392 = vmatpush1.xpose.msra.mxu0 0.0
    %3393 = vmatprep.subr.mxu0 0.0
    %3394 = vmatpush1.xpose.msra.mxu0 0.0
    %3395 = vmatprep.subr.mxu0 0.0
    %3396 = vmatpush1.xpose.msra.mxu0 0.0
    %3397 = vmatprep.subr.mxu0 0.0
    %3398 = vmatpush1.xpose.msra.mxu0 0.0
    %3399 = vmatprep.subr.mxu0 0.0
    %3400 = vmatpush1.xpose.msra.mxu0 0.0
    %3401 = vmatprep.subr.mxu0 0.0
    %3402 = vmatpush1.xpose.msra.mxu0 0.0
    %3403 = vmatprep.subr.mxu0 0.0
    %3404 = vmatpush1.xpose.msra.mxu0 0.0
    %3405 = vmatprep.subr.mxu0 0.0
    %3406 = vmatpush1.xpose.msra.mxu0 0.0
    %3407 = vmatprep.subr.mxu0 0.0
    %3408 = vmatpush1.xpose.msra.mxu0 0.0
    %3409 = vmatprep.subr.mxu0 0.0
    %3410 = vmatpush1.xpose.msra.mxu0 0.0
    %3411 = vmatprep.subr.mxu0 0.0
    %3412 = vmatpush1.xpose.msra.mxu0 0.0
    %3413 = vmatprep.subr.mxu0 0.0
    %3414 = vmatpush1.xpose.msra.mxu0 0.0
    %3415 = vmatprep.subr.mxu0 0.0
    %3416 = vmatpush1.xpose.msra.mxu0 0.0
    %3417 = vmatprep.mubr.f32.mxu0 0.0
    %3418 = vmatmul.mubr.f32.gmra.mrb[0].mxu0 %v3348
    %v3419 = vpop.f32.mrb[0].mxu0
    %v3420 = vadd.f32 0.0, %v3419
    %v3421 = vpop.f32.mrb[0].mxu0
    %3422 = vdwg.mxu0
    %v3423 = vsel %vm2089, %v3344, -inf
    %3424 = vmax.xlane.f32.xlu0 %v3423
    %v3425 = vpop.xlane.xlu0 %3424
    %v3426 = vsel %vm2089, %v3420, -inf
    %3427 = vmax.xlane.f32.xlu0 %v3426
    %v3428 = vpop.xlane.xlu0 %3427
    %v3429 = vsub.f32 %v3344, %v3425
    %v3430 = vsub.f32 %v3420, %v3428
    %v3431 = vmul.f32 %v3429, 1.442695
    %v3432 = vpow.pop %v3431
    %v3433 = vmul.f32 %v3430, 1.442695
    %v3434 = vpow.pop %v3433
    %v3435 = vsel %vm2089, %v3432, 0.0
    %3436 = vadd.xlane.f32.xlu0 %v3435
    %v3437 = vpop.xlane.xlu0 %3436
    %v3438 = vsel %vm2089, %v3434, 0.0
    %3439 = vadd.xlane.f32.xlu0 %v3438
    %v3440 = vpop.xlane.xlu0 %3439
    %v3441 = vrcp.pop %v3437
    %v3442 = vmul.f32 %v3432, %v3441
    %v3443 = vrcp.pop %v3440
    %v3444 = vmul.f32 %v3434, %v3443
    %v3446 = vsel %vm2089, %v3442, 0
    %3448 = vmatprep.subr.mxu0 0.0
    %3449 = vmatpush1.msra.mxu0 %v1924
    %3450 = vmatprep.subr.mxu0 0.0
    %3451 = vmatpush1.msra.mxu0 0.0
    %3452 = vmatprep.subr.mxu0 0.0
    %3453 = vmatpush1.msra.mxu0 0.0
    %3454 = vmatprep.subr.mxu0 0.0
    %3455 = vmatpush1.msra.mxu0 0.0
    %3456 = vmatprep.subr.mxu0 0.0
    %3457 = vmatpush1.msra.mxu0 0.0
    %3458 = vmatprep.subr.mxu0 0.0
    %3459 = vmatpush1.msra.mxu0 0.0
    %3460 = vmatprep.subr.mxu0 0.0
    %3461 = vmatpush1.msra.mxu0 0.0
    %3462 = vmatprep.subr.mxu0 0.0
    %3463 = vmatpush1.msra.mxu0 0.0
    %3464 = vmatprep.subr.mxu0 0.0
    %3465 = vmatpush1.msra.mxu0 0.0
    %3466 = vmatprep.subr.mxu0 0.0
    %3467 = vmatpush1.msra.mxu0 0.0
    %3468 = vmatprep.subr.mxu0 0.0
    %3469 = vmatpush1.msra.mxu0 0.0
    %3470 = vmatprep.subr.mxu0 0.0
    %3471 = vmatpush1.msra.mxu0 0.0
    %3472 = vmatprep.subr.mxu0 0.0
    %3473 = vmatpush1.msra.mxu0 0.0
    %3474 = vmatprep.subr.mxu0 0.0
    %3475 = vmatpush1.msra.mxu0 0.0
    %3476 = vmatprep.subr.mxu0 0.0
    %3477 = vmatpush1.msra.mxu0 0.0
    %3478 = vmatprep.subr.mxu0 0.0
    %3479 = vmatpush1.msra.mxu0 0.0
    %3480 = vmatprep.subr.mxu0 0.0
    %3481 = vmatpush1.msra.mxu0 0.0
    %3482 = vmatprep.subr.mxu0 0.0
    %3483 = vmatpush1.msra.mxu0 0.0
    %3484 = vmatprep.subr.mxu0 0.0
    %3485 = vmatpush1.msra.mxu0 0.0
    %3486 = vmatprep.subr.mxu0 0.0
    %3487 = vmatpush1.msra.mxu0 0.0
    %3488 = vmatprep.subr.mxu0 0.0
    %3489 = vmatpush1.msra.mxu0 0.0
    %3490 = vmatprep.subr.mxu0 0.0
    %3491 = vmatpush1.msra.mxu0 0.0
    %3492 = vmatprep.subr.mxu0 0.0
    %3493 = vmatpush1.msra.mxu0 0.0
    %3494 = vmatprep.subr.mxu0 0.0
    %3495 = vmatpush1.msra.mxu0 0.0
    %3496 = vmatprep.subr.mxu0 0.0
    %3497 = vmatpush1.msra.mxu0 0.0
    %3498 = vmatprep.subr.mxu0 0.0
    %3499 = vmatpush1.msra.mxu0 0.0
    %3500 = vmatprep.subr.mxu0 0.0
    %3501 = vmatpush1.msra.mxu0 0.0
    %3502 = vmatprep.subr.mxu0 0.0
    %3503 = vmatpush1.msra.mxu0 0.0
    %3504 = vmatprep.subr.mxu0 0.0
    %3505 = vmatpush1.msra.mxu0 0.0
    %3506 = vmatprep.subr.mxu0 0.0
    %3507 = vmatpush1.msra.mxu0 0.0
    %3508 = vmatprep.subr.mxu0 0.0
    %3509 = vmatpush1.msra.mxu0 0.0
    %3510 = vmatprep.subr.mxu0 0.0
    %3511 = vmatpush1.msra.mxu0 0.0
    %3512 = vmatprep.mubr.f32.mxu0 0.0
    %3513 = vmatmul.mubr.f32.gmra.mrb[0].mxu0 %v3446
    %v3514 = vpop.f32.mrb[0].mxu0
    %v3515 = vadd.f32 0.0, %v3514
    %v3516 = vpop.f32.mrb[0].mxu0
    %3517 = vdwg.mxu0
    %v3519 = vsel %vm2089, %v3444, 0
    %3521 = vmatprep.subr.mxu0 0.0
    %3522 = vmatpush1.msra.mxu0 %v1930
    %3523 = vmatprep.subr.mxu0 0.0
    %3524 = vmatpush1.msra.mxu0 0.0
    %3525 = vmatprep.subr.mxu0 0.0
    %3526 = vmatpush1.msra.mxu0 0.0
    %3527 = vmatprep.subr.mxu0 0.0
    %3528 = vmatpush1.msra.mxu0 0.0
    %3529 = vmatprep.subr.mxu0 0.0
    %3530 = vmatpush1.msra.mxu0 0.0
    %3531 = vmatprep.subr.mxu0 0.0
    %3532 = vmatpush1.msra.mxu0 0.0
    %3533 = vmatprep.subr.mxu0 0.0
    %3534 = vmatpush1.msra.mxu0 0.0
    %3535 = vmatprep.subr.mxu0 0.0
    %3536 = vmatpush1.msra.mxu0 0.0
    %3537 = vmatprep.subr.mxu0 0.0
    %3538 = vmatpush1.msra.mxu0 0.0
    %3539 = vmatprep.subr.mxu0 0.0
    %3540 = vmatpush1.msra.mxu0 0.0
    %3541 = vmatprep.subr.mxu0 0.0
    %3542 = vmatpush1.msra.mxu0 0.0
    %3543 = vmatprep.subr.mxu0 0.0
    %3544 = vmatpush1.msra.mxu0 0.0
    %3545 = vmatprep.subr.mxu0 0.0
    %3546 = vmatpush1.msra.mxu0 0.0
    %3547 = vmatprep.subr.mxu0 0.0
    %3548 = vmatpush1.msra.mxu0 0.0
    %3549 = vmatprep.subr.mxu0 0.0
    %3550 = vmatpush1.msra.mxu0 0.0
    %3551 = vmatprep.subr.mxu0 0.0
    %3552 = vmatpush1.msra.mxu0 0.0
    %3553 = vmatprep.subr.mxu0 0.0
    %3554 = vmatpush1.msra.mxu0 0.0
    %3555 = vmatprep.subr.mxu0 0.0
    %3556 = vmatpush1.msra.mxu0 0.0
    %3557 = vmatprep.subr.mxu0 0.0
    %3558 = vmatpush1.msra.mxu0 0.0
    %3559 = vmatprep.subr.mxu0 0.0
    %3560 = vmatpush1.msra.mxu0 0.0
    %3561 = vmatprep.subr.mxu0 0.0
    %3562 = vmatpush1.msra.mxu0 0.0
    %3563 = vmatprep.subr.mxu0 0.0
    %3564 = vmatpush1.msra.mxu0 0.0
    %3565 = vmatprep.subr.mxu0 0.0
    %3566 = vmatpush1.msra.mxu0 0.0
    %3567 = vmatprep.subr.mxu0 0.0
    %3568 = vmatpush1.msra.mxu0 0.0
    %3569 = vmatprep.subr.mxu0 0.0
    %3570 = vmatpush1.msra.mxu0 0.0
    %3571 = vmatprep.subr.mxu0 0.0
    %3572 = vmatpush1.msra.mxu0 0.0
    %3573 = vmatprep.subr.mxu0 0.0
    %3574 = vmatpush1.msra.mxu0 0.0
    %3575 = vmatprep.subr.mxu0 0.0
    %3576 = vmatpush1.msra.mxu0 0.0
    %3577 = vmatprep.subr.mxu0 0.0
    %3578 = vmatpush1.msra.mxu0 0.0
    %3579 = vmatprep.subr.mxu0 0.0
    %3580 = vmatpush1.msra.mxu0 0.0
    %3581 = vmatprep.subr.mxu0 0.0
    %3582 = vmatpush1.msra.mxu0 0.0
    %3583 = vmatprep.subr.mxu0 0.0
    %3584 = vmatpush1.msra.mxu0 0.0
    %3585 = vmatprep.mubr.f32.mxu0 0.0
    %3586 = vmatmul.mubr.f32.gmra.mrb[0].mxu0 %v3519
    %v3587 = vpop.f32.mrb[0].mxu0
    %v3588 = vadd.f32 0.0, %v3587
    %v3589 = vpop.f32.mrb[0].mxu0
    %3590 = vdwg.mxu0
    %3591 = vst.msk [vmem:[#allocation2 + $0x10] sm:$0xff] %vm1936, %v3515
    %3592 = vst.msk [vmem:[#allocation2 + $0x30] sm:$0xff] %vm1936, %v3588
    %3593 = vrot.lane.b32.xlu0 %v3269, 64
    %v3594 = vpop.permute.xlu0 %3593
    %3595 = vrot.lane.b32.xlu0 %v1330, 64
    %v3596 = vpop.permute.xlu0 %3595
    %v3597 = vsel %vm1936, %v3594, 0
    %v3599 = vsel %vm1936, %v3596, 0
    %3601 = vmatprep.subr.mxu0 0.0
    %3602 = vmatpush1.xpose.msra.mxu0 %v3599
    %3603 = vmatprep.subr.mxu0 0.0
    %3604 = vmatpush1.xpose.msra.mxu0 0.0
    %3605 = vmatprep.subr.mxu0 0.0
    %3606 = vmatpush1.xpose.msra.mxu0 0.0
    %3607 = vmatprep.subr.mxu0 0.0
    %3608 = vmatpush1.xpose.msra.mxu0 0.0
    %3609 = vmatprep.subr.mxu0 0.0
    %3610 = vmatpush1.xpose.msra.mxu0 0.0
    %3611 = vmatprep.subr.mxu0 0.0
    %3612 = vmatpush1.xpose.msra.mxu0 0.0
    %3613 = vmatprep.subr.mxu0 0.0
    %3614 = vmatpush1.xpose.msra.mxu0 0.0
    %3615 = vmatprep.subr.mxu0 0.0
    %3616 = vmatpush1.xpose.msra.mxu0 0.0
    %3617 = vmatprep.subr.mxu0 0.0
    %3618 = vmatpush1.xpose.msra.mxu0 0.0
    %3619 = vmatprep.subr.mxu0 0.0
    %3620 = vmatpush1.xpose.msra.mxu0 0.0
    %3621 = vmatprep.subr.mxu0 0.0
    %3622 = vmatpush1.xpose.msra.mxu0 0.0
    %3623 = vmatprep.subr.mxu0 0.0
    %3624 = vmatpush1.xpose.msra.mxu0 0.0
    %3625 = vmatprep.subr.mxu0 0.0
    %3626 = vmatpush1.xpose.msra.mxu0 0.0
    %3627 = vmatprep.subr.mxu0 0.0
    %3628 = vmatpush1.xpose.msra.mxu0 0.0
    %3629 = vmatprep.subr.mxu0 0.0
    %3630 = vmatpush1.xpose.msra.mxu0 0.0
    %3631 = vmatprep.subr.mxu0 0.0
    %3632 = vmatpush1.xpose.msra.mxu0 0.0
    %3633 = vmatprep.subr.mxu0 0.0
    %3634 = vmatpush1.xpose.msra.mxu0 0.0
    %3635 = vmatprep.subr.mxu0 0.0
    %3636 = vmatpush1.xpose.msra.mxu0 0.0
    %3637 = vmatprep.subr.mxu0 0.0
    %3638 = vmatpush1.xpose.msra.mxu0 0.0
    %3639 = vmatprep.subr.mxu0 0.0
    %3640 = vmatpush1.xpose.msra.mxu0 0.0
    %3641 = vmatprep.subr.mxu0 0.0
    %3642 = vmatpush1.xpose.msra.mxu0 0.0
    %3643 = vmatprep.subr.mxu0 0.0
    %3644 = vmatpush1.xpose.msra.mxu0 0.0
    %3645 = vmatprep.subr.mxu0 0.0
    %3646 = vmatpush1.xpose.msra.mxu0 0.0
    %3647 = vmatprep.subr.mxu0 0.0
    %3648 = vmatpush1.xpose.msra.mxu0 0.0
    %3649 = vmatprep.subr.mxu0 0.0
    %3650 = vmatpush1.xpose.msra.mxu0 0.0
    %3651 = vmatprep.subr.mxu0 0.0
    %3652 = vmatpush1.xpose.msra.mxu0 0.0
    %3653 = vmatprep.subr.mxu0 0.0
    %3654 = vmatpush1.xpose.msra.mxu0 0.0
    %3655 = vmatprep.subr.mxu0 0.0
    %3656 = vmatpush1.xpose.msra.mxu0 0.0
    %3657 = vmatprep.subr.mxu0 0.0
    %3658 = vmatpush1.xpose.msra.mxu0 0.0
    %3659 = vmatprep.subr.mxu0 0.0
    %3660 = vmatpush1.xpose.msra.mxu0 0.0
    %3661 = vmatprep.subr.mxu0 0.0
    %3662 = vmatpush1.xpose.msra.mxu0 0.0
    %3663 = vmatprep.subr.mxu0 0.0
    %3664 = vmatpush1.xpose.msra.mxu0 0.0
    %3665 = vmatprep.mubr.f32.mxu0 0.0
    %3666 = vmatmul.mubr.f32.gmra.mrb[0].mxu0 %v3597
    %v3667 = vpop.f32.mrb[0].mxu0
    %v3668 = vadd.f32 0.0, %v3667
    %v3669 = vpop.f32.mrb[0].mxu0
    %3670 = vdwg.mxu0
    %3671 = vrot.lane.b32.xlu0 %v3270, 64
    %v3672 = vpop.permute.xlu0 %3671
    %3673 = vrot.lane.b32.xlu0 %v1336, 64
    %v3674 = vpop.permute.xlu0 %3673
    %v3675 = vsel %vm1936, %v3672, 0
    %v3677 = vsel %vm1936, %v3674, 0
    %3679 = vmatprep.subr.mxu0 0.0
    %3680 = vmatpush1.xpose.msra.mxu0 %v3677
    %3681 = vmatprep.subr.mxu0 0.0
    %3682 = vmatpush1.xpose.msra.mxu0 0.0
    %3683 = vmatprep.subr.mxu0 0.0
    %3684 = vmatpush1.xpose.msra.mxu0 0.0
    %3685 = vmatprep.subr.mxu0 0.0
    %3686 = vmatpush1.xpose.msra.mxu0 0.0
    %3687 = vmatprep.subr.mxu0 0.0
    %3688 = vmatpush1.xpose.msra.mxu0 0.0
    %3689 = vmatprep.subr.mxu0 0.0
    %3690 = vmatpush1.xpose.msra.mxu0 0.0
    %3691 = vmatprep.subr.mxu0 0.0
    %3692 = vmatpush1.xpose.msra.mxu0 0.0
    %3693 = vmatprep.subr.mxu0 0.0
    %3694 = vmatpush1.xpose.msra.mxu0 0.0
    %3695 = vmatprep.subr.mxu0 0.0
    %3696 = vmatpush1.xpose.msra.mxu0 0.0
    %3697 = vmatprep.subr.mxu0 0.0
    %3698 = vmatpush1.xpose.msra.mxu0 0.0
    %3699 = vmatprep.subr.mxu0 0.0
    %3700 = vmatpush1.xpose.msra.mxu0 0.0
    %3701 = vmatprep.subr.mxu0 0.0
    %3702 = vmatpush1.xpose.msra.mxu0 0.0
    %3703 = vmatprep.subr.mxu0 0.0
    %3704 = vmatpush1.xpose.msra.mxu0 0.0
    %3705 = vmatprep.subr.mxu0 0.0
    %3706 = vmatpush1.xpose.msra.mxu0 0.0
    %3707 = vmatprep.subr.mxu0 0.0
    %3708 = vmatpush1.xpose.msra.mxu0 0.0
    %3709 = vmatprep.subr.mxu0 0.0
    %3710 = vmatpush1.xpose.msra.mxu0 0.0
    %3711 = vmatprep.subr.mxu0 0.0
    %3712 = vmatpush1.xpose.msra.mxu0 0.0
    %3713 = vmatprep.subr.mxu0 0.0
    %3714 = vmatpush1.xpose.msra.mxu0 0.0
    %3715 = vmatprep.subr.mxu0 0.0
    %3716 = vmatpush1.xpose.msra.mxu0 0.0
    %3717 = vmatprep.subr.mxu0 0.0
    %3718 = vmatpush1.xpose.msra.mxu0 0.0
    %3719 = vmatprep.subr.mxu0 0.0
    %3720 = vmatpush1.xpose.msra.mxu0 0.0
    %3721 = vmatprep.subr.mxu0 0.0
    %3722 = vmatpush1.xpose.msra.mxu0 0.0
    %3723 = vmatprep.subr.mxu0 0.0
    %3724 = vmatpush1.xpose.msra.mxu0 0.0
    %3725 = vmatprep.subr.mxu0 0.0
    %3726 = vmatpush1.xpose.msra.mxu0 0.0
    %3727 = vmatprep.subr.mxu0 0.0
    %3728 = vmatpush1.xpose.msra.mxu0 0.0
    %3729 = vmatprep.subr.mxu0 0.0
    %3730 = vmatpush1.xpose.msra.mxu0 0.0
    %3731 = vmatprep.subr.mxu0 0.0
    %3732 = vmatpush1.xpose.msra.mxu0 0.0
    %3733 = vmatprep.subr.mxu0 0.0
    %3734 = vmatpush1.xpose.msra.mxu0 0.0
    %3735 = vmatprep.subr.mxu0 0.0
    %3736 = vmatpush1.xpose.msra.mxu0 0.0
    %3737 = vmatprep.subr.mxu0 0.0
    %3738 = vmatpush1.xpose.msra.mxu0 0.0
    %3739 = vmatprep.subr.mxu0 0.0
    %3740 = vmatpush1.xpose.msra.mxu0 0.0
    %3741 = vmatprep.subr.mxu0 0.0
    %3742 = vmatpush1.xpose.msra.mxu0 0.0
    %3743 = vmatprep.mubr.f32.mxu0 0.0
    %3744 = vmatmul.mubr.f32.gmra.mrb[0].mxu0 %v3675
    %v3745 = vpop.f32.mrb[0].mxu0
    %v3746 = vadd.f32 0.0, %v3745
    %v3747 = vpop.f32.mrb[0].mxu0
    %3748 = vdwg.mxu0
    %v3749 = vsel %vm2089, %v3668, -inf
    %3750 = vmax.xlane.f32.xlu0 %v3749
    %v3751 = vpop.xlane.xlu0 %3750
    %v3752 = vsel %vm2089, %v3746, -inf
    %3753 = vmax.xlane.f32.xlu0 %v3752
    %v3754 = vpop.xlane.xlu0 %3753
    %v3755 = vsub.f32 %v3668, %v3751
    %v3756 = vsub.f32 %v3746, %v3754
    %v3757 = vmul.f32 %v3755, 1.442695
    %v3758 = vpow.pop %v3757
    %v3759 = vmul.f32 %v3756, 1.442695
    %v3760 = vpow.pop %v3759
    %v3761 = vsel %vm2089, %v3758, 0.0
    %3762 = vadd.xlane.f32.xlu0 %v3761
    %v3763 = vpop.xlane.xlu0 %3762
    %v3764 = vsel %vm2089, %v3760, 0.0
    %3765 = vadd.xlane.f32.xlu0 %v3764
    %v3766 = vpop.xlane.xlu0 %3765
    %v3767 = vrcp.pop %v3763
    %v3768 = vmul.f32 %v3758, %v3767
    %v3769 = vrcp.pop %v3766
    %v3770 = vmul.f32 %v3760, %v3769
    %3772 = vrot.lane.b32.xlu0 %v1924, 64
    %v3773 = vpop.permute.xlu0 %3772
    %v3776 = vsel %vm2089, %v3768, 0
    %3778 = vmatprep.subr.mxu0 0.0
    %3779 = vmatpush1.msra.mxu0 %v3773
    %3780 = vmatprep.subr.mxu0 0.0
    %3781 = vmatpush1.msra.mxu0 0.0
    %3782 = vmatprep.subr.mxu0 0.0
    %3783 = vmatpush1.msra.mxu0 0.0
    %3784 = vmatprep.subr.mxu0 0.0
    %3785 = vmatpush1.msra.mxu0 0.0
    %3786 = vmatprep.subr.mxu0 0.0
    %3787 = vmatpush1.msra.mxu0 0.0
    %3788 = vmatprep.subr.mxu0 0.0
    %3789 = vmatpush1.msra.mxu0 0.0
    %3790 = vmatprep.subr.mxu0 0.0
    %3791 = vmatpush1.msra.mxu0 0.0
    %3792 = vmatprep.subr.mxu0 0.0
    %3793 = vmatpush1.msra.mxu0 0.0
    %3794 = vmatprep.subr.mxu0 0.0
    %3795 = vmatpush1.msra.mxu0 0.0
    %3796 = vmatprep.subr.mxu0 0.0
    %3797 = vmatpush1.msra.mxu0 0.0
    %3798 = vmatprep.subr.mxu0 0.0
    %3799 = vmatpush1.msra.mxu0 0.0
    %3800 = vmatprep.subr.mxu0 0.0
    %3801 = vmatpush1.msra.mxu0 0.0
    %3802 = vmatprep.subr.mxu0 0.0
    %3803 = vmatpush1.msra.mxu0 0.0
    %3804 = vmatprep.subr.mxu0 0.0
    %3805 = vmatpush1.msra.mxu0 0.0
    %3806 = vmatprep.subr.mxu0 0.0
    %3807 = vmatpush1.msra.mxu0 0.0
    %3808 = vmatprep.subr.mxu0 0.0
    %3809 = vmatpush1.msra.mxu0 0.0
    %3810 = vmatprep.subr.mxu0 0.0
    %3811 = vmatpush1.msra.mxu0 0.0
    %3812 = vmatprep.subr.mxu0 0.0
    %3813 = vmatpush1.msra.mxu0 0.0
    %3814 = vmatprep.subr.mxu0 0.0
    %3815 = vmatpush1.msra.mxu0 0.0
    %3816 = vmatprep.subr.mxu0 0.0
    %3817 = vmatpush1.msra.mxu0 0.0
    %3818 = vmatprep.subr.mxu0 0.0
    %3819 = vmatpush1.msra.mxu0 0.0
    %3820 = vmatprep.subr.mxu0 0.0
    %3821 = vmatpush1.msra.mxu0 0.0
    %3822 = vmatprep.subr.mxu0 0.0
    %3823 = vmatpush1.msra.mxu0 0.0
    %3824 = vmatprep.subr.mxu0 0.0
    %3825 = vmatpush1.msra.mxu0 0.0
    %3826 = vmatprep.subr.mxu0 0.0
    %3827 = vmatpush1.msra.mxu0 0.0
    %3828 = vmatprep.subr.mxu0 0.0
    %3829 = vmatpush1.msra.mxu0 0.0
    %3830 = vmatprep.subr.mxu0 0.0
    %3831 = vmatpush1.msra.mxu0 0.0
    %3832 = vmatprep.subr.mxu0 0.0
    %3833 = vmatpush1.msra.mxu0 0.0
    %3834 = vmatprep.subr.mxu0 0.0
    %3835 = vmatpush1.msra.mxu0 0.0
    %3836 = vmatprep.subr.mxu0 0.0
    %3837 = vmatpush1.msra.mxu0 0.0
    %3838 = vmatprep.subr.mxu0 0.0
    %3839 = vmatpush1.msra.mxu0 0.0
    %3840 = vmatprep.subr.mxu0 0.0
    %3841 = vmatpush1.msra.mxu0 0.0
    %3842 = vmatprep.mubr.f32.mxu0 0.0
    %3843 = vmatmul.mubr.f32.gmra.mrb[0].mxu0 %v3776
    %v3844 = vpop.f32.mrb[0].mxu0
    %v3845 = vadd.f32 0.0, %v3844
    %v3846 = vpop.f32.mrb[0].mxu0
    %3847 = vdwg.mxu0
    %3849 = vrot.lane.b32.xlu0 %v1930, 64
    %v3850 = vpop.permute.xlu0 %3849
    %v3853 = vsel %vm2089, %v3770, 0
    %3855 = vmatprep.subr.mxu0 0.0
    %3856 = vmatpush1.msra.mxu0 %v3850
    %3857 = vmatprep.subr.mxu0 0.0
    %3858 = vmatpush1.msra.mxu0 0.0
    %3859 = vmatprep.subr.mxu0 0.0
    %3860 = vmatpush1.msra.mxu0 0.0
    %3861 = vmatprep.subr.mxu0 0.0
    %3862 = vmatpush1.msra.mxu0 0.0
    %3863 = vmatprep.subr.mxu0 0.0
    %3864 = vmatpush1.msra.mxu0 0.0
    %3865 = vmatprep.subr.mxu0 0.0
    %3866 = vmatpush1.msra.mxu0 0.0
    %3867 = vmatprep.subr.mxu0 0.0
    %3868 = vmatpush1.msra.mxu0 0.0
    %3869 = vmatprep.subr.mxu0 0.0
    %3870 = vmatpush1.msra.mxu0 0.0
    %3871 = vmatprep.subr.mxu0 0.0
    %3872 = vmatpush1.msra.mxu0 0.0
    %3873 = vmatprep.subr.mxu0 0.0
    %3874 = vmatpush1.msra.mxu0 0.0
    %3875 = vmatprep.subr.mxu0 0.0
    %3876 = vmatpush1.msra.mxu0 0.0
    %3877 = vmatprep.subr.mxu0 0.0
    %3878 = vmatpush1.msra.mxu0 0.0
    %3879 = vmatprep.subr.mxu0 0.0
    %3880 = vmatpush1.msra.mxu0 0.0
    %3881 = vmatprep.subr.mxu0 0.0
    %3882 = vmatpush1.msra.mxu0 0.0
    %3883 = vmatprep.subr.mxu0 0.0
    %3884 = vmatpush1.msra.mxu0 0.0
    %3885 = vmatprep.subr.mxu0 0.0
    %3886 = vmatpush1.msra.mxu0 0.0
    %3887 = vmatprep.subr.mxu0 0.0
    %3888 = vmatpush1.msra.mxu0 0.0
    %3889 = vmatprep.subr.mxu0 0.0
    %3890 = vmatpush1.msra.mxu0 0.0
    %3891 = vmatprep.subr.mxu0 0.0
    %3892 = vmatpush1.msra.mxu0 0.0
    %3893 = vmatprep.subr.mxu0 0.0
    %3894 = vmatpush1.msra.mxu0 0.0
    %3895 = vmatprep.subr.mxu0 0.0
    %3896 = vmatpush1.msra.mxu0 0.0
    %3897 = vmatprep.subr.mxu0 0.0
    %3898 = vmatpush1.msra.mxu0 0.0
    %3899 = vmatprep.subr.mxu0 0.0
    %3900 = vmatpush1.msra.mxu0 0.0
    %3901 = vmatprep.subr.mxu0 0.0
    %3902 = vmatpush1.msra.mxu0 0.0
    %3903 = vmatprep.subr.mxu0 0.0
    %3904 = vmatpush1.msra.mxu0 0.0
    %3905 = vmatprep.subr.mxu0 0.0
    %3906 = vmatpush1.msra.mxu0 0.0
    %3907 = vmatprep.subr.mxu0 0.0
    %3908 = vmatpush1.msra.mxu0 0.0
    %3909 = vmatprep.subr.mxu0 0.0
    %3910 = vmatpush1.msra.mxu0 0.0
    %3911 = vmatprep.subr.mxu0 0.0
    %3912 = vmatpush1.msra.mxu0 0.0
    %3913 = vmatprep.subr.mxu0 0.0
    %3914 = vmatpush1.msra.mxu0 0.0
    %3915 = vmatprep.subr.mxu0 0.0
    %3916 = vmatpush1.msra.mxu0 0.0
    %3917 = vmatprep.subr.mxu0 0.0
    %3918 = vmatpush1.msra.mxu0 0.0
    %3919 = vmatprep.mubr.f32.mxu0 0.0
    %3920 = vmatmul.mubr.f32.gmra.mrb[0].mxu0 %v3853
    %v3921 = vpop.f32.mrb[0].mxu0
    %v3922 = vadd.f32 0.0, %v3921
    %v3923 = vpop.f32.mrb[0].mxu0
    %3924 = vdwg.mxu0
    %3927 = vrot.lane.b32.xlu0 %v3845, 64
    %v3928 = vpop.permute.xlu0 %3927
    %3929 = vrot.lane.b32.xlu0 %v3922, 64
    %v3930 = vpop.permute.xlu0 %3929
    %3933 = vst.msk [vmem:[#allocation2 + $0x10] sm:$0xff] %vm2600, %v3928
    %3934 = vst.msk [vmem:[#allocation2 + $0x30] sm:$0xff] %vm2600, %v3930
    %v3935 = vmul.f32 %v738, 0.125
    %v3936 = vmul.f32 %v744, 0.125
    %v3938 = vsel %vm1936, %v3935, 0
    %v3941 = vsel %vm1936, %v1332, 0
    %3943 = vmatprep.subr.mxu0 0.0
    %3944 = vmatpush1.xpose.msra.mxu0 %v3941
    %3945 = vmatprep.subr.mxu0 0.0
    %3946 = vmatpush1.xpose.msra.mxu0 0.0
    %3947 = vmatprep.subr.mxu0 0.0
    %3948 = vmatpush1.xpose.msra.mxu0 0.0
    %3949 = vmatprep.subr.mxu0 0.0
    %3950 = vmatpush1.xpose.msra.mxu0 0.0
    %3951 = vmatprep.subr.mxu0 0.0
    %3952 = vmatpush1.xpose.msra.mxu0 0.0
    %3953 = vmatprep.subr.mxu0 0.0
    %3954 = vmatpush1.xpose.msra.mxu0 0.0
    %3955 = vmatprep.subr.mxu0 0.0
    %3956 = vmatpush1.xpose.msra.mxu0 0.0
    %3957 = vmatprep.subr.mxu0 0.0
    %3958 = vmatpush1.xpose.msra.mxu0 0.0
    %3959 = vmatprep.subr.mxu0 0.0
    %3960 = vmatpush1.xpose.msra.mxu0 0.0
    %3961 = vmatprep.subr.mxu0 0.0
    %3962 = vmatpush1.xpose.msra.mxu0 0.0
    %3963 = vmatprep.subr.mxu0 0.0
    %3964 = vmatpush1.xpose.msra.mxu0 0.0
    %3965 = vmatprep.subr.mxu0 0.0
    %3966 = vmatpush1.xpose.msra.mxu0 0.0
    %3967 = vmatprep.subr.mxu0 0.0
    %3968 = vmatpush1.xpose.msra.mxu0 0.0
    %3969 = vmatprep.subr.mxu0 0.0
    %3970 = vmatpush1.xpose.msra.mxu0 0.0
    %3971 = vmatprep.subr.mxu0 0.0
    %3972 = vmatpush1.xpose.msra.mxu0 0.0
    %3973 = vmatprep.subr.mxu0 0.0
    %3974 = vmatpush1.xpose.msra.mxu0 0.0
    %3975 = vmatprep.subr.mxu0 0.0
    %3976 = vmatpush1.xpose.msra.mxu0 0.0
    %3977 = vmatprep.subr.mxu0 0.0
    %3978 = vmatpush1.xpose.msra.mxu0 0.0
    %3979 = vmatprep.subr.mxu0 0.0
    %3980 = vmatpush1.xpose.msra.mxu0 0.0
    %3981 = vmatprep.subr.mxu0 0.0
    %3982 = vmatpush1.xpose.msra.mxu0 0.0
    %3983 = vmatprep.subr.mxu0 0.0
    %3984 = vmatpush1.xpose.msra.mxu0 0.0
    %3985 = vmatprep.subr.mxu0 0.0
    %3986 = vmatpush1.xpose.msra.mxu0 0.0
    %3987 = vmatprep.subr.mxu0 0.0
    %3988 = vmatpush1.xpose.msra.mxu0 0.0
    %3989 = vmatprep.subr.mxu0 0.0
    %3990 = vmatpush1.xpose.msra.mxu0 0.0
    %3991 = vmatprep.subr.mxu0 0.0
    %3992 = vmatpush1.xpose.msra.mxu0 0.0
    %3993 = vmatprep.subr.mxu0 0.0
    %3994 = vmatpush1.xpose.msra.mxu0 0.0
    %3995 = vmatprep.subr.mxu0 0.0
    %3996 = vmatpush1.xpose.msra.mxu0 0.0
    %3997 = vmatprep.subr.mxu0 0.0
    %3998 = vmatpush1.xpose.msra.mxu0 0.0
    %3999 = vmatprep.subr.mxu0 0.0
    %4000 = vmatpush1.xpose.msra.mxu0 0.0
    %4001 = vmatprep.subr.mxu0 0.0
    %4002 = vmatpush1.xpose.msra.mxu0 0.0
    %4003 = vmatprep.subr.mxu0 0.0
    %4004 = vmatpush1.xpose.msra.mxu0 0.0
    %4005 = vmatprep.subr.mxu0 0.0
    %4006 = vmatpush1.xpose.msra.mxu0 0.0
    %4007 = vmatprep.mubr.f32.mxu0 0.0
    %4008 = vmatmul.mubr.f32.gmra.mrb[0].mxu0 %v3938
    %v4009 = vpop.f32.mrb[0].mxu0
    %v4010 = vadd.f32 0.0, %v4009
    %v4011 = vpop.f32.mrb[0].mxu0
    %4012 = vdwg.mxu0
    %v4014 = vsel %vm1936, %v3936, 0
    %v4017 = vsel %vm1936, %v1338, 0
    %4019 = vmatprep.subr.mxu0 0.0
    %4020 = vmatpush1.xpose.msra.mxu0 %v4017
    %4021 = vmatprep.subr.mxu0 0.0
    %4022 = vmatpush1.xpose.msra.mxu0 0.0
    %4023 = vmatprep.subr.mxu0 0.0
    %4024 = vmatpush1.xpose.msra.mxu0 0.0
    %4025 = vmatprep.subr.mxu0 0.0
    %4026 = vmatpush1.xpose.msra.mxu0 0.0
    %4027 = vmatprep.subr.mxu0 0.0
    %4028 = vmatpush1.xpose.msra.mxu0 0.0
    %4029 = vmatprep.subr.mxu0 0.0
    %4030 = vmatpush1.xpose.msra.mxu0 0.0
    %4031 = vmatprep.subr.mxu0 0.0
    %4032 = vmatpush1.xpose.msra.mxu0 0.0
    %4033 = vmatprep.subr.mxu0 0.0
    %4034 = vmatpush1.xpose.msra.mxu0 0.0
    %4035 = vmatprep.subr.mxu0 0.0
    %4036 = vmatpush1.xpose.msra.mxu0 0.0
    %4037 = vmatprep.subr.mxu0 0.0
    %4038 = vmatpush1.xpose.msra.mxu0 0.0
    %4039 = vmatprep.subr.mxu0 0.0
    %4040 = vmatpush1.xpose.msra.mxu0 0.0
    %4041 = vmatprep.subr.mxu0 0.0
    %4042 = vmatpush1.xpose.msra.mxu0 0.0
    %4043 = vmatprep.subr.mxu0 0.0
    %4044 = vmatpush1.xpose.msra.mxu0 0.0
    %4045 = vmatprep.subr.mxu0 0.0
    %4046 = vmatpush1.xpose.msra.mxu0 0.0
    %4047 = vmatprep.subr.mxu0 0.0
    %4048 = vmatpush1.xpose.msra.mxu0 0.0
    %4049 = vmatprep.subr.mxu0 0.0
    %4050 = vmatpush1.xpose.msra.mxu0 0.0
    %4051 = vmatprep.subr.mxu0 0.0
    %4052 = vmatpush1.xpose.msra.mxu0 0.0
    %4053 = vmatprep.subr.mxu0 0.0
    %4054 = vmatpush1.xpose.msra.mxu0 0.0
    %4055 = vmatprep.subr.mxu0 0.0
    %4056 = vmatpush1.xpose.msra.mxu0 0.0
    %4057 = vmatprep.subr.mxu0 0.0
    %4058 = vmatpush1.xpose.msra.mxu0 0.0
    %4059 = vmatprep.subr.mxu0 0.0
    %4060 = vmatpush1.xpose.msra.mxu0 0.0
    %4061 = vmatprep.subr.mxu0 0.0
    %4062 = vmatpush1.xpose.msra.mxu0 0.0
    %4063 = vmatprep.subr.mxu0 0.0
    %4064 = vmatpush1.xpose.msra.mxu0 0.0
    %4065 = vmatprep.subr.mxu0 0.0
    %4066 = vmatpush1.xpose.msra.mxu0 0.0
    %4067 = vmatprep.subr.mxu0 0.0
    %4068 = vmatpush1.xpose.msra.mxu0 0.0
    %4069 = vmatprep.subr.mxu0 0.0
    %4070 = vmatpush1.xpose.msra.mxu0 0.0
    %4071 = vmatprep.subr.mxu0 0.0
    %4072 = vmatpush1.xpose.msra.mxu0 0.0
    %4073 = vmatprep.subr.mxu0 0.0
    %4074 = vmatpush1.xpose.msra.mxu0 0.0
    %4075 = vmatprep.subr.mxu0 0.0
    %4076 = vmatpush1.xpose.msra.mxu0 0.0
    %4077 = vmatprep.subr.mxu0 0.0
    %4078 = vmatpush1.xpose.msra.mxu0 0.0
    %4079 = vmatprep.subr.mxu0 0.0
    %4080 = vmatpush1.xpose.msra.mxu0 0.0
    %4081 = vmatprep.subr.mxu0 0.0
    %4082 = vmatpush1.xpose.msra.mxu0 0.0
    %4083 = vmatprep.mubr.f32.mxu0 0.0
    %4084 = vmatmul.mubr.f32.gmra.mrb[0].mxu0 %v4014
    %v4085 = vpop.f32.mrb[0].mxu0
    %v4086 = vadd.f32 0.0, %v4085
    %v4087 = vpop.f32.mrb[0].mxu0
    %4088 = vdwg.mxu0
    %v4089 = vsel %vm2089, %v4010, -inf
    %4090 = vmax.xlane.f32.xlu0 %v4089
    %v4091 = vpop.xlane.xlu0 %4090
    %v4092 = vsel %vm2089, %v4086, -inf
    %4093 = vmax.xlane.f32.xlu0 %v4092
    %v4094 = vpop.xlane.xlu0 %4093
    %v4095 = vsub.f32 %v4010, %v4091
    %v4096 = vsub.f32 %v4086, %v4094
    %v4097 = vmul.f32 %v4095, 1.442695
    %v4098 = vpow.pop %v4097
    %v4099 = vmul.f32 %v4096, 1.442695
    %v4100 = vpow.pop %v4099
    %v4101 = vsel %vm2089, %v4098, 0.0
    %4102 = vadd.xlane.f32.xlu0 %v4101
    %v4103 = vpop.xlane.xlu0 %4102
    %v4104 = vsel %vm2089, %v4100, 0.0
    %4105 = vadd.xlane.f32.xlu0 %v4104
    %v4106 = vpop.xlane.xlu0 %4105
    %v4107 = vrcp.pop %v4103
    %v4108 = vmul.f32 %v4098, %v4107
    %v4109 = vrcp.pop %v4106
    %v4110 = vmul.f32 %v4100, %v4109
    %v4112 = vsel %vm2089, %v4108, 0
    %4114 = vmatprep.subr.mxu0 0.0
    %4115 = vmatpush1.msra.mxu0 %v1926
    %4116 = vmatprep.subr.mxu0 0.0
    %4117 = vmatpush1.msra.mxu0 0.0
    %4118 = vmatprep.subr.mxu0 0.0
    %4119 = vmatpush1.msra.mxu0 0.0
    %4120 = vmatprep.subr.mxu0 0.0
    %4121 = vmatpush1.msra.mxu0 0.0
    %4122 = vmatprep.subr.mxu0 0.0
    %4123 = vmatpush1.msra.mxu0 0.0
    %4124 = vmatprep.subr.mxu0 0.0
    %4125 = vmatpush1.msra.mxu0 0.0
    %4126 = vmatprep.subr.mxu0 0.0
    %4127 = vmatpush1.msra.mxu0 0.0
    %4128 = vmatprep.subr.mxu0 0.0
    %4129 = vmatpush1.msra.mxu0 0.0
    %4130 = vmatprep.subr.mxu0 0.0
    %4131 = vmatpush1.msra.mxu0 0.0
    %4132 = vmatprep.subr.mxu0 0.0
    %4133 = vmatpush1.msra.mxu0 0.0
    %4134 = vmatprep.subr.mxu0 0.0
    %4135 = vmatpush1.msra.mxu0 0.0
    %4136 = vmatprep.subr.mxu0 0.0
    %4137 = vmatpush1.msra.mxu0 0.0
    %4138 = vmatprep.subr.mxu0 0.0
    %4139 = vmatpush1.msra.mxu0 0.0
    %4140 = vmatprep.subr.mxu0 0.0
    %4141 = vmatpush1.msra.mxu0 0.0
    %4142 = vmatprep.subr.mxu0 0.0
    %4143 = vmatpush1.msra.mxu0 0.0
    %4144 = vmatprep.subr.mxu0 0.0
    %4145 = vmatpush1.msra.mxu0 0.0
    %4146 = vmatprep.subr.mxu0 0.0
    %4147 = vmatpush1.msra.mxu0 0.0
    %4148 = vmatprep.subr.mxu0 0.0
    %4149 = vmatpush1.msra.mxu0 0.0
    %4150 = vmatprep.subr.mxu0 0.0
    %4151 = vmatpush1.msra.mxu0 0.0
    %4152 = vmatprep.subr.mxu0 0.0
    %4153 = vmatpush1.msra.mxu0 0.0
    %4154 = vmatprep.subr.mxu0 0.0
    %4155 = vmatpush1.msra.mxu0 0.0
    %4156 = vmatprep.subr.mxu0 0.0
    %4157 = vmatpush1.msra.mxu0 0.0
    %4158 = vmatprep.subr.mxu0 0.0
    %4159 = vmatpush1.msra.mxu0 0.0
    %4160 = vmatprep.subr.mxu0 0.0
    %4161 = vmatpush1.msra.mxu0 0.0
    %4162 = vmatprep.subr.mxu0 0.0
    %4163 = vmatpush1.msra.mxu0 0.0
    %4164 = vmatprep.subr.mxu0 0.0
    %4165 = vmatpush1.msra.mxu0 0.0
    %4166 = vmatprep.subr.mxu0 0.0
    %4167 = vmatpush1.msra.mxu0 0.0
    %4168 = vmatprep.subr.mxu0 0.0
    %4169 = vmatpush1.msra.mxu0 0.0
    %4170 = vmatprep.subr.mxu0 0.0
    %4171 = vmatpush1.msra.mxu0 0.0
    %4172 = vmatprep.subr.mxu0 0.0
    %4173 = vmatpush1.msra.mxu0 0.0
    %4174 = vmatprep.subr.mxu0 0.0
    %4175 = vmatpush1.msra.mxu0 0.0
    %4176 = vmatprep.subr.mxu0 0.0
    %4177 = vmatpush1.msra.mxu0 0.0
    %4178 = vmatprep.mubr.f32.mxu0 0.0
    %4179 = vmatmul.mubr.f32.gmra.mrb[0].mxu0 %v4112
    %v4180 = vpop.f32.mrb[0].mxu0
    %v4181 = vadd.f32 0.0, %v4180
    %v4182 = vpop.f32.mrb[0].mxu0
    %4183 = vdwg.mxu0
    %v4185 = vsel %vm2089, %v4110, 0
    %4187 = vmatprep.subr.mxu0 0.0
    %4188 = vmatpush1.msra.mxu0 %v1932
    %4189 = vmatprep.subr.mxu0 0.0
    %4190 = vmatpush1.msra.mxu0 0.0
    %4191 = vmatprep.subr.mxu0 0.0
    %4192 = vmatpush1.msra.mxu0 0.0
    %4193 = vmatprep.subr.mxu0 0.0
    %4194 = vmatpush1.msra.mxu0 0.0
    %4195 = vmatprep.subr.mxu0 0.0
    %4196 = vmatpush1.msra.mxu0 0.0
    %4197 = vmatprep.subr.mxu0 0.0
    %4198 = vmatpush1.msra.mxu0 0.0
    %4199 = vmatprep.subr.mxu0 0.0
    %4200 = vmatpush1.msra.mxu0 0.0
    %4201 = vmatprep.subr.mxu0 0.0
    %4202 = vmatpush1.msra.mxu0 0.0
    %4203 = vmatprep.subr.mxu0 0.0
    %4204 = vmatpush1.msra.mxu0 0.0
    %4205 = vmatprep.subr.mxu0 0.0
    %4206 = vmatpush1.msra.mxu0 0.0
    %4207 = vmatprep.subr.mxu0 0.0
    %4208 = vmatpush1.msra.mxu0 0.0
    %4209 = vmatprep.subr.mxu0 0.0
    %4210 = vmatpush1.msra.mxu0 0.0
    %4211 = vmatprep.subr.mxu0 0.0
    %4212 = vmatpush1.msra.mxu0 0.0
    %4213 = vmatprep.subr.mxu0 0.0
    %4214 = vmatpush1.msra.mxu0 0.0
    %4215 = vmatprep.subr.mxu0 0.0
    %4216 = vmatpush1.msra.mxu0 0.0
    %4217 = vmatprep.subr.mxu0 0.0
    %4218 = vmatpush1.msra.mxu0 0.0
    %4219 = vmatprep.subr.mxu0 0.0
    %4220 = vmatpush1.msra.mxu0 0.0
    %4221 = vmatprep.subr.mxu0 0.0
    %4222 = vmatpush1.msra.mxu0 0.0
    %4223 = vmatprep.subr.mxu0 0.0
    %4224 = vmatpush1.msra.mxu0 0.0
    %4225 = vmatprep.subr.mxu0 0.0
    %4226 = vmatpush1.msra.mxu0 0.0
    %4227 = vmatprep.subr.mxu0 0.0
    %4228 = vmatpush1.msra.mxu0 0.0
    %4229 = vmatprep.subr.mxu0 0.0
    %4230 = vmatpush1.msra.mxu0 0.0
    %4231 = vmatprep.subr.mxu0 0.0
    %4232 = vmatpush1.msra.mxu0 0.0
    %4233 = vmatprep.subr.mxu0 0.0
    %4234 = vmatpush1.msra.mxu0 0.0
    %4235 = vmatprep.subr.mxu0 0.0
    %4236 = vmatpush1.msra.mxu0 0.0
    %4237 = vmatprep.subr.mxu0 0.0
    %4238 = vmatpush1.msra.mxu0 0.0
    %4239 = vmatprep.subr.mxu0 0.0
    %4240 = vmatpush1.msra.mxu0 0.0
    %4241 = vmatprep.subr.mxu0 0.0
    %4242 = vmatpush1.msra.mxu0 0.0
    %4243 = vmatprep.subr.mxu0 0.0
    %4244 = vmatpush1.msra.mxu0 0.0
    %4245 = vmatprep.subr.mxu0 0.0
    %4246 = vmatpush1.msra.mxu0 0.0
    %4247 = vmatprep.subr.mxu0 0.0
    %4248 = vmatpush1.msra.mxu0 0.0
    %4249 = vmatprep.subr.mxu0 0.0
    %4250 = vmatpush1.msra.mxu0 0.0
    %4251 = vmatprep.mubr.f32.mxu0 0.0
    %4252 = vmatmul.mubr.f32.gmra.mrb[0].mxu0 %v4185
    %v4253 = vpop.f32.mrb[0].mxu0
    %v4254 = vadd.f32 0.0, %v4253
    %v4255 = vpop.f32.mrb[0].mxu0
    %4256 = vdwg.mxu0
    %4257 = vst.msk [vmem:[#allocation2 + $0x18] sm:$0xff] %vm1936, %v4181
    %4258 = vst.msk [vmem:[#allocation2 + $0x38] sm:$0xff] %vm1936, %v4254
    %4259 = vrot.lane.b32.xlu0 %v3935, 64
    %v4260 = vpop.permute.xlu0 %4259
    %4261 = vrot.lane.b32.xlu0 %v1332, 64
    %v4262 = vpop.permute.xlu0 %4261
    %v4263 = vsel %vm1936, %v4260, 0
    %v4265 = vsel %vm1936, %v4262, 0
    %4267 = vmatprep.subr.mxu0 0.0
    %4268 = vmatpush1.xpose.msra.mxu0 %v4265
    %4269 = vmatprep.subr.mxu0 0.0
    %4270 = vmatpush1.xpose.msra.mxu0 0.0
    %4271 = vmatprep.subr.mxu0 0.0
    %4272 = vmatpush1.xpose.msra.mxu0 0.0
    %4273 = vmatprep.subr.mxu0 0.0
    %4274 = vmatpush1.xpose.msra.mxu0 0.0
    %4275 = vmatprep.subr.mxu0 0.0
    %4276 = vmatpush1.xpose.msra.mxu0 0.0
    %4277 = vmatprep.subr.mxu0 0.0
    %4278 = vmatpush1.xpose.msra.mxu0 0.0
    %4279 = vmatprep.subr.mxu0 0.0
    %4280 = vmatpush1.xpose.msra.mxu0 0.0
    %4281 = vmatprep.subr.mxu0 0.0
    %4282 = vmatpush1.xpose.msra.mxu0 0.0
    %4283 = vmatprep.subr.mxu0 0.0
    %4284 = vmatpush1.xpose.msra.mxu0 0.0
    %4285 = vmatprep.subr.mxu0 0.0
    %4286 = vmatpush1.xpose.msra.mxu0 0.0
    %4287 = vmatprep.subr.mxu0 0.0
    %4288 = vmatpush1.xpose.msra.mxu0 0.0
    %4289 = vmatprep.subr.mxu0 0.0
    %4290 = vmatpush1.xpose.msra.mxu0 0.0
    %4291 = vmatprep.subr.mxu0 0.0
    %4292 = vmatpush1.xpose.msra.mxu0 0.0
    %4293 = vmatprep.subr.mxu0 0.0
    %4294 = vmatpush1.xpose.msra.mxu0 0.0
    %4295 = vmatprep.subr.mxu0 0.0
    %4296 = vmatpush1.xpose.msra.mxu0 0.0
    %4297 = vmatprep.subr.mxu0 0.0
    %4298 = vmatpush1.xpose.msra.mxu0 0.0
    %4299 = vmatprep.subr.mxu0 0.0
    %4300 = vmatpush1.xpose.msra.mxu0 0.0
    %4301 = vmatprep.subr.mxu0 0.0
    %4302 = vmatpush1.xpose.msra.mxu0 0.0
    %4303 = vmatprep.subr.mxu0 0.0
    %4304 = vmatpush1.xpose.msra.mxu0 0.0
    %4305 = vmatprep.subr.mxu0 0.0
    %4306 = vmatpush1.xpose.msra.mxu0 0.0
    %4307 = vmatprep.subr.mxu0 0.0
    %4308 = vmatpush1.xpose.msra.mxu0 0.0
    %4309 = vmatprep.subr.mxu0 0.0
    %4310 = vmatpush1.xpose.msra.mxu0 0.0
    %4311 = vmatprep.subr.mxu0 0.0
    %4312 = vmatpush1.xpose.msra.mxu0 0.0
    %4313 = vmatprep.subr.mxu0 0.0
    %4314 = vmatpush1.xpose.msra.mxu0 0.0
    %4315 = vmatprep.subr.mxu0 0.0
    %4316 = vmatpush1.xpose.msra.mxu0 0.0
    %4317 = vmatprep.subr.mxu0 0.0
    %4318 = vmatpush1.xpose.msra.mxu0 0.0
    %4319 = vmatprep.subr.mxu0 0.0
    %4320 = vmatpush1.xpose.msra.mxu0 0.0
    %4321 = vmatprep.subr.mxu0 0.0
    %4322 = vmatpush1.xpose.msra.mxu0 0.0
    %4323 = vmatprep.subr.mxu0 0.0
    %4324 = vmatpush1.xpose.msra.mxu0 0.0
    %4325 = vmatprep.subr.mxu0 0.0
    %4326 = vmatpush1.xpose.msra.mxu0 0.0
    %4327 = vmatprep.subr.mxu0 0.0
    %4328 = vmatpush1.xpose.msra.mxu0 0.0
    %4329 = vmatprep.subr.mxu0 0.0
    %4330 = vmatpush1.xpose.msra.mxu0 0.0
    %4331 = vmatprep.mubr.f32.mxu0 0.0
    %4332 = vmatmul.mubr.f32.gmra.mrb[0].mxu0 %v4263
    %v4333 = vpop.f32.mrb[0].mxu0
    %v4334 = vadd.f32 0.0, %v4333
    %v4335 = vpop.f32.mrb[0].mxu0
    %4336 = vdwg.mxu0
    %4337 = vrot.lane.b32.xlu0 %v3936, 64
    %v4338 = vpop.permute.xlu0 %4337
    %4339 = vrot.lane.b32.xlu0 %v1338, 64
    %v4340 = vpop.permute.xlu0 %4339
    %v4341 = vsel %vm1936, %v4338, 0
    %v4343 = vsel %vm1936, %v4340, 0
    %4345 = vmatprep.subr.mxu0 0.0
    %4346 = vmatpush1.xpose.msra.mxu0 %v4343
    %4347 = vmatprep.subr.mxu0 0.0
    %4348 = vmatpush1.xpose.msra.mxu0 0.0
    %4349 = vmatprep.subr.mxu0 0.0
    %4350 = vmatpush1.xpose.msra.mxu0 0.0
    %4351 = vmatprep.subr.mxu0 0.0
    %4352 = vmatpush1.xpose.msra.mxu0 0.0
    %4353 = vmatprep.subr.mxu0 0.0
    %4354 = vmatpush1.xpose.msra.mxu0 0.0
    %4355 = vmatprep.subr.mxu0 0.0
    %4356 = vmatpush1.xpose.msra.mxu0 0.0
    %4357 = vmatprep.subr.mxu0 0.0
    %4358 = vmatpush1.xpose.msra.mxu0 0.0
    %4359 = vmatprep.subr.mxu0 0.0
    %4360 = vmatpush1.xpose.msra.mxu0 0.0
    %4361 = vmatprep.subr.mxu0 0.0
    %4362 = vmatpush1.xpose.msra.mxu0 0.0
    %4363 = vmatprep.subr.mxu0 0.0
    %4364 = vmatpush1.xpose.msra.mxu0 0.0
    %4365 = vmatprep.subr.mxu0 0.0
    %4366 = vmatpush1.xpose.msra.mxu0 0.0
    %4367 = vmatprep.subr.mxu0 0.0
    %4368 = vmatpush1.xpose.msra.mxu0 0.0
    %4369 = vmatprep.subr.mxu0 0.0
    %4370 = vmatpush1.xpose.msra.mxu0 0.0
    %4371 = vmatprep.subr.mxu0 0.0
    %4372 = vmatpush1.xpose.msra.mxu0 0.0
    %4373 = vmatprep.subr.mxu0 0.0
    %4374 = vmatpush1.xpose.msra.mxu0 0.0
    %4375 = vmatprep.subr.mxu0 0.0
    %4376 = vmatpush1.xpose.msra.mxu0 0.0
    %4377 = vmatprep.subr.mxu0 0.0
    %4378 = vmatpush1.xpose.msra.mxu0 0.0
    %4379 = vmatprep.subr.mxu0 0.0
    %4380 = vmatpush1.xpose.msra.mxu0 0.0
    %4381 = vmatprep.subr.mxu0 0.0
    %4382 = vmatpush1.xpose.msra.mxu0 0.0
    %4383 = vmatprep.subr.mxu0 0.0
    %4384 = vmatpush1.xpose.msra.mxu0 0.0
    %4385 = vmatprep.subr.mxu0 0.0
    %4386 = vmatpush1.xpose.msra.mxu0 0.0
    %4387 = vmatprep.subr.mxu0 0.0
    %4388 = vmatpush1.xpose.msra.mxu0 0.0
    %4389 = vmatprep.subr.mxu0 0.0
    %4390 = vmatpush1.xpose.msra.mxu0 0.0
    %4391 = vmatprep.subr.mxu0 0.0
    %4392 = vmatpush1.xpose.msra.mxu0 0.0
    %4393 = vmatprep.subr.mxu0 0.0
    %4394 = vmatpush1.xpose.msra.mxu0 0.0
    %4395 = vmatprep.subr.mxu0 0.0
    %4396 = vmatpush1.xpose.msra.mxu0 0.0
    %4397 = vmatprep.subr.mxu0 0.0
    %4398 = vmatpush1.xpose.msra.mxu0 0.0
    %4399 = vmatprep.subr.mxu0 0.0
    %4400 = vmatpush1.xpose.msra.mxu0 0.0
    %4401 = vmatprep.subr.mxu0 0.0
    %4402 = vmatpush1.xpose.msra.mxu0 0.0
    %4403 = vmatprep.subr.mxu0 0.0
    %4404 = vmatpush1.xpose.msra.mxu0 0.0
    %4405 = vmatprep.subr.mxu0 0.0
    %4406 = vmatpush1.xpose.msra.mxu0 0.0
    %4407 = vmatprep.subr.mxu0 0.0
    %4408 = vmatpush1.xpose.msra.mxu0 0.0
    %4409 = vmatprep.mubr.f32.mxu0 0.0
    %4410 = vmatmul.mubr.f32.gmra.mrb[0].mxu0 %v4341
    %v4411 = vpop.f32.mrb[0].mxu0
    %v4412 = vadd.f32 0.0, %v4411
    %v4413 = vpop.f32.mrb[0].mxu0
    %4414 = vdwg.mxu0
    %v4415 = vsel %vm2089, %v4334, -inf
    %4416 = vmax.xlane.f32.xlu0 %v4415
    %v4417 = vpop.xlane.xlu0 %4416
    %v4418 = vsel %vm2089, %v4412, -inf
    %4419 = vmax.xlane.f32.xlu0 %v4418
    %v4420 = vpop.xlane.xlu0 %4419
    %v4421 = vsub.f32 %v4334, %v4417
    %v4422 = vsub.f32 %v4412, %v4420
    %v4423 = vmul.f32 %v4421, 1.442695
    %v4424 = vpow.pop %v4423
    %v4425 = vmul.f32 %v4422, 1.442695
    %v4426 = vpow.pop %v4425
    %v4427 = vsel %vm2089, %v4424, 0.0
    %4428 = vadd.xlane.f32.xlu0 %v4427
    %v4429 = vpop.xlane.xlu0 %4428
    %v4430 = vsel %vm2089, %v4426, 0.0
    %4431 = vadd.xlane.f32.xlu0 %v4430
    %v4432 = vpop.xlane.xlu0 %4431
    %v4433 = vrcp.pop %v4429
    %v4434 = vmul.f32 %v4424, %v4433
    %v4435 = vrcp.pop %v4432
    %v4436 = vmul.f32 %v4426, %v4435
    %4438 = vrot.lane.b32.xlu0 %v1926, 64
    %v4439 = vpop.permute.xlu0 %4438
    %v4442 = vsel %vm2089, %v4434, 0
    %4444 = vmatprep.subr.mxu0 0.0
    %4445 = vmatpush1.msra.mxu0 %v4439
    %4446 = vmatprep.subr.mxu0 0.0
    %4447 = vmatpush1.msra.mxu0 0.0
    %4448 = vmatprep.subr.mxu0 0.0
    %4449 = vmatpush1.msra.mxu0 0.0
    %4450 = vmatprep.subr.mxu0 0.0
    %4451 = vmatpush1.msra.mxu0 0.0
    %4452 = vmatprep.subr.mxu0 0.0
    %4453 = vmatpush1.msra.mxu0 0.0
    %4454 = vmatprep.subr.mxu0 0.0
    %4455 = vmatpush1.msra.mxu0 0.0
    %4456 = vmatprep.subr.mxu0 0.0
    %4457 = vmatpush1.msra.mxu0 0.0
    %4458 = vmatprep.subr.mxu0 0.0
    %4459 = vmatpush1.msra.mxu0 0.0
    %4460 = vmatprep.subr.mxu0 0.0
    %4461 = vmatpush1.msra.mxu0 0.0
    %4462 = vmatprep.subr.mxu0 0.0
    %4463 = vmatpush1.msra.mxu0 0.0
    %4464 = vmatprep.subr.mxu0 0.0
    %4465 = vmatpush1.msra.mxu0 0.0
    %4466 = vmatprep.subr.mxu0 0.0
    %4467 = vmatpush1.msra.mxu0 0.0
    %4468 = vmatprep.subr.mxu0 0.0
    %4469 = vmatpush1.msra.mxu0 0.0
    %4470 = vmatprep.subr.mxu0 0.0
    %4471 = vmatpush1.msra.mxu0 0.0
    %4472 = vmatprep.subr.mxu0 0.0
    %4473 = vmatpush1.msra.mxu0 0.0
    %4474 = vmatprep.subr.mxu0 0.0
    %4475 = vmatpush1.msra.mxu0 0.0
    %4476 = vmatprep.subr.mxu0 0.0
    %4477 = vmatpush1.msra.mxu0 0.0
    %4478 = vmatprep.subr.mxu0 0.0
    %4479 = vmatpush1.msra.mxu0 0.0
    %4480 = vmatprep.subr.mxu0 0.0
    %4481 = vmatpush1.msra.mxu0 0.0
    %4482 = vmatprep.subr.mxu0 0.0
    %4483 = vmatpush1.msra.mxu0 0.0
    %4484 = vmatprep.subr.mxu0 0.0
    %4485 = vmatpush1.msra.mxu0 0.0
    %4486 = vmatprep.subr.mxu0 0.0
    %4487 = vmatpush1.msra.mxu0 0.0
    %4488 = vmatprep.subr.mxu0 0.0
    %4489 = vmatpush1.msra.mxu0 0.0
    %4490 = vmatprep.subr.mxu0 0.0
    %4491 = vmatpush1.msra.mxu0 0.0
    %4492 = vmatprep.subr.mxu0 0.0
    %4493 = vmatpush1.msra.mxu0 0.0
    %4494 = vmatprep.subr.mxu0 0.0
    %4495 = vmatpush1.msra.mxu0 0.0
    %4496 = vmatprep.subr.mxu0 0.0
    %4497 = vmatpush1.msra.mxu0 0.0
    %4498 = vmatprep.subr.mxu0 0.0
    %4499 = vmatpush1.msra.mxu0 0.0
    %4500 = vmatprep.subr.mxu0 0.0
    %4501 = vmatpush1.msra.mxu0 0.0
    %4502 = vmatprep.subr.mxu0 0.0
    %4503 = vmatpush1.msra.mxu0 0.0
    %4504 = vmatprep.subr.mxu0 0.0
    %4505 = vmatpush1.msra.mxu0 0.0
    %4506 = vmatprep.subr.mxu0 0.0
    %4507 = vmatpush1.msra.mxu0 0.0
    %4508 = vmatprep.mubr.f32.mxu0 0.0
    %4509 = vmatmul.mubr.f32.gmra.mrb[0].mxu0 %v4442
    %v4510 = vpop.f32.mrb[0].mxu0
    %v4511 = vadd.f32 0.0, %v4510
    %v4512 = vpop.f32.mrb[0].mxu0
    %4513 = vdwg.mxu0
    %4515 = vrot.lane.b32.xlu0 %v1932, 64
    %v4516 = vpop.permute.xlu0 %4515
    %v4519 = vsel %vm2089, %v4436, 0
    %4521 = vmatprep.subr.mxu0 0.0
    %4522 = vmatpush1.msra.mxu0 %v4516
    %4523 = vmatprep.subr.mxu0 0.0
    %4524 = vmatpush1.msra.mxu0 0.0
    %4525 = vmatprep.subr.mxu0 0.0
    %4526 = vmatpush1.msra.mxu0 0.0
    %4527 = vmatprep.subr.mxu0 0.0
    %4528 = vmatpush1.msra.mxu0 0.0
    %4529 = vmatprep.subr.mxu0 0.0
    %4530 = vmatpush1.msra.mxu0 0.0
    %4531 = vmatprep.subr.mxu0 0.0
    %4532 = vmatpush1.msra.mxu0 0.0
    %4533 = vmatprep.subr.mxu0 0.0
    %4534 = vmatpush1.msra.mxu0 0.0
    %4535 = vmatprep.subr.mxu0 0.0
    %4536 = vmatpush1.msra.mxu0 0.0
    %4537 = vmatprep.subr.mxu0 0.0
    %4538 = vmatpush1.msra.mxu0 0.0
    %4539 = vmatprep.subr.mxu0 0.0
    %4540 = vmatpush1.msra.mxu0 0.0
    %4541 = vmatprep.subr.mxu0 0.0
    %4542 = vmatpush1.msra.mxu0 0.0
    %4543 = vmatprep.subr.mxu0 0.0
    %4544 = vmatpush1.msra.mxu0 0.0
    %4545 = vmatprep.subr.mxu0 0.0
    %4546 = vmatpush1.msra.mxu0 0.0
    %4547 = vmatprep.subr.mxu0 0.0
    %4548 = vmatpush1.msra.mxu0 0.0
    %4549 = vmatprep.subr.mxu0 0.0
    %4550 = vmatpush1.msra.mxu0 0.0
    %4551 = vmatprep.subr.mxu0 0.0
    %4552 = vmatpush1.msra.mxu0 0.0
    %4553 = vmatprep.subr.mxu0 0.0
    %4554 = vmatpush1.msra.mxu0 0.0
    %4555 = vmatprep.subr.mxu0 0.0
    %4556 = vmatpush1.msra.mxu0 0.0
    %4557 = vmatprep.subr.mxu0 0.0
    %4558 = vmatpush1.msra.mxu0 0.0
    %4559 = vmatprep.subr.mxu0 0.0
    %4560 = vmatpush1.msra.mxu0 0.0
    %4561 = vmatprep.subr.mxu0 0.0
    %4562 = vmatpush1.msra.mxu0 0.0
    %4563 = vmatprep.subr.mxu0 0.0
    %4564 = vmatpush1.msra.mxu0 0.0
    %4565 = vmatprep.subr.mxu0 0.0
    %4566 = vmatpush1.msra.mxu0 0.0
    %4567 = vmatprep.subr.mxu0 0.0
    %4568 = vmatpush1.msra.mxu0 0.0
    %4569 = vmatprep.subr.mxu0 0.0
    %4570 = vmatpush1.msra.mxu0 0.0
    %4571 = vmatprep.subr.mxu0 0.0
    %4572 = vmatpush1.msra.mxu0 0.0
    %4573 = vmatprep.subr.mxu0 0.0
    %4574 = vmatpush1.msra.mxu0 0.0
    %4575 = vmatprep.subr.mxu0 0.0
    %4576 = vmatpush1.msra.mxu0 0.0
    %4577 = vmatprep.subr.mxu0 0.0
    %4578 = vmatpush1.msra.mxu0 0.0
    %4579 = vmatprep.subr.mxu0 0.0
    %4580 = vmatpush1.msra.mxu0 0.0
    %4581 = vmatprep.subr.mxu0 0.0
    %4582 = vmatpush1.msra.mxu0 0.0
    %4583 = vmatprep.subr.mxu0 0.0
    %4584 = vmatpush1.msra.mxu0 0.0
    %4585 = vmatprep.mubr.f32.mxu0 0.0
    %4586 = vmatmul.mubr.f32.gmra.mrb[0].mxu0 %v4519
    %v4587 = vpop.f32.mrb[0].mxu0
    %v4588 = vadd.f32 0.0, %v4587
    %v4589 = vpop.f32.mrb[0].mxu0
    %4590 = vdwg.mxu0
    %4593 = vrot.lane.b32.xlu0 %v4511, 64
    %v4594 = vpop.permute.xlu0 %4593
    %4595 = vrot.lane.b32.xlu0 %v4588, 64
    %v4596 = vpop.permute.xlu0 %4595
    %4599 = vst.msk [vmem:[#allocation2 + $0x18] sm:$0xff] %vm2600, %v4594
    %4600 = vst.msk [vmem:[#allocation2 + $0x38] sm:$0xff] %vm2600, %v4596
    %v4601 = vld [vmem:[#allocation2] sm:$0xff]
    %v4602 = vld [vmem:[#allocation2 + $0x8] sm:$0xff]
    %v4603 = vld [vmem:[#allocation2 + $0x10] sm:$0xff]
    %v4604 = vld [vmem:[#allocation2 + $0x18] sm:$0xff]
    %v4605 = vld [vmem:[#allocation2 + $0x20] sm:$0xff]
    %v4606 = vld [vmem:[#allocation2 + $0x28] sm:$0xff]
    %v4607 = vld [vmem:[#allocation2 + $0x30] sm:$0xff]
    %v4608 = vld [vmem:[#allocation2 + $0x38] sm:$0xff]
    %v4609 = vld [vmem:[#allocation8] sm:$0xff]
    %v4610 = vld [vmem:[#allocation8 + $0x8] sm:$0xff]
    %v4611 = vld [vmem:[#allocation8 + $0x10] sm:$0xff]
    %v4612 = vld [vmem:[#allocation8 + $0x18] sm:$0xff]
    %v4613 = vld [vmem:[#allocation8 + $0x20] sm:$0xff]
    %v4614 = vld [vmem:[#allocation8 + $0x28] sm:$0xff]
    %v4615 = vld [vmem:[#allocation8 + $0x30] sm:$0xff]
    %v4616 = vld [vmem:[#allocation8 + $0x38] sm:$0xff]
    %v4617 = vld [vmem:[#allocation8 + $0x40] sm:$0xff]
    %v4618 = vld [vmem:[#allocation8 + $0x48] sm:$0xff]
    %v4619 = vld [vmem:[#allocation8 + $0x50] sm:$0xff]
    %v4620 = vld [vmem:[#allocation8 + $0x58] sm:$0xff]
    %v4621 = vld [vmem:[#allocation8 + $0x60] sm:$0xff]
    %v4622 = vld [vmem:[#allocation8 + $0x68] sm:$0xff]
    %v4623 = vld [vmem:[#allocation8 + $0x70] sm:$0xff]
    %v4624 = vld [vmem:[#allocation8 + $0x78] sm:$0xff]
    %v4625 = vld [vmem:[#allocation8 + $0x80] sm:$0xff]
    %v4626 = vld [vmem:[#allocation8 + $0x88] sm:$0xff]
    %v4627 = vld [vmem:[#allocation8 + $0x90] sm:$0xff]
    %v4628 = vld [vmem:[#allocation8 + $0x98] sm:$0xff]
    %v4629 = vld [vmem:[#allocation8 + $0xa0] sm:$0xff]
    %v4630 = vld [vmem:[#allocation8 + $0xa8] sm:$0xff]
    %v4631 = vld [vmem:[#allocation8 + $0xb0] sm:$0xff]
    %v4632 = vld [vmem:[#allocation8 + $0xb8] sm:$0xff]
    %v4633 = vld [vmem:[#allocation8 + $0xc0] sm:$0xff]
    %v4634 = vld [vmem:[#allocation8 + $0xc8] sm:$0xff]
    %v4635 = vld [vmem:[#allocation8 + $0xd0] sm:$0xff]
    %v4636 = vld [vmem:[#allocation8 + $0xd8] sm:$0xff]
    %v4637 = vld [vmem:[#allocation8 + $0xe0] sm:$0xff]
    %v4638 = vld [vmem:[#allocation8 + $0xe8] sm:$0xff]
    %v4639 = vld [vmem:[#allocation8 + $0xf0] sm:$0xff]
    %v4640 = vld [vmem:[#allocation8 + $0xf8] sm:$0xff]
    %v4641 = vld [vmem:[#allocation8 + $0x100] sm:$0xff]
    %v4642 = vld [vmem:[#allocation8 + $0x108] sm:$0xff]
    %v4643 = vld [vmem:[#allocation8 + $0x110] sm:$0xff]
    %v4644 = vld [vmem:[#allocation8 + $0x118] sm:$0xff]
    %v4645 = vld [vmem:[#allocation8 + $0x120] sm:$0xff]
    %v4646 = vld [vmem:[#allocation8 + $0x128] sm:$0xff]
    %v4647 = vld [vmem:[#allocation8 + $0x130] sm:$0xff]
    %v4648 = vld [vmem:[#allocation8 + $0x138] sm:$0xff]
    %v4649 = vld [vmem:[#allocation8 + $0x140] sm:$0xff]
    %v4650 = vld [vmem:[#allocation8 + $0x148] sm:$0xff]
    %v4651 = vld [vmem:[#allocation8 + $0x150] sm:$0xff]
    %v4652 = vld [vmem:[#allocation8 + $0x158] sm:$0xff]
    %v4653 = vld [vmem:[#allocation8 + $0x160] sm:$0xff]
    %v4654 = vld [vmem:[#allocation8 + $0x168] sm:$0xff]
    %v4655 = vld [vmem:[#allocation8 + $0x170] sm:$0xff]
    %v4656 = vld [vmem:[#allocation8 + $0x178] sm:$0xff]
    %v4657 = vld [vmem:[#allocation8 + $0x180] sm:$0xff]
    %v4658 = vld [vmem:[#allocation8 + $0x188] sm:$0xff]
    %v4659 = vld [vmem:[#allocation8 + $0x190] sm:$0xff]
    %v4660 = vld [vmem:[#allocation8 + $0x198] sm:$0xff]
    %v4661 = vld [vmem:[#allocation8 + $0x1a0] sm:$0xff]
    %v4662 = vld [vmem:[#allocation8 + $0x1a8] sm:$0xff]
    %v4663 = vld [vmem:[#allocation8 + $0x1b0] sm:$0xff]
    %v4664 = vld [vmem:[#allocation8 + $0x1b8] sm:$0xff]
    %v4665 = vld [vmem:[#allocation8 + $0x1c0] sm:$0xff]
    %v4666 = vld [vmem:[#allocation8 + $0x1c8] sm:$0xff]
    %v4667 = vld [vmem:[#allocation8 + $0x1d0] sm:$0xff]
    %v4668 = vld [vmem:[#allocation8 + $0x1d8] sm:$0xff]
    %v4669 = vld [vmem:[#allocation8 + $0x1e0] sm:$0xff]
    %v4670 = vld [vmem:[#allocation8 + $0x1e8] sm:$0xff]
    %v4671 = vld [vmem:[#allocation8 + $0x1f0] sm:$0xff]
    %v4672 = vld [vmem:[#allocation8 + $0x1f8] sm:$0xff]
    %v4673 = vld [vmem:[#allocation8 + $0x200] sm:$0xff]
    %v4674 = vld [vmem:[#allocation8 + $0x208] sm:$0xff]
    %v4675 = vld [vmem:[#allocation8 + $0x210] sm:$0xff]
    %v4676 = vld [vmem:[#allocation8 + $0x218] sm:$0xff]
    %v4677 = vld [vmem:[#allocation8 + $0x220] sm:$0xff]
    %v4678 = vld [vmem:[#allocation8 + $0x228] sm:$0xff]
    %v4679 = vld [vmem:[#allocation8 + $0x230] sm:$0xff]
    %v4680 = vld [vmem:[#allocation8 + $0x238] sm:$0xff]
    %v4681 = vld [vmem:[#allocation8 + $0x240] sm:$0xff]
    %v4682 = vld [vmem:[#allocation8 + $0x248] sm:$0xff]
    %v4683 = vld [vmem:[#allocation8 + $0x250] sm:$0xff]
    %v4684 = vld [vmem:[#allocation8 + $0x258] sm:$0xff]
    %v4685 = vld [vmem:[#allocation8 + $0x260] sm:$0xff]
    %v4686 = vld [vmem:[#allocation8 + $0x268] sm:$0xff]
    %v4687 = vld [vmem:[#allocation8 + $0x270] sm:$0xff]
    %v4688 = vld [vmem:[#allocation8 + $0x278] sm:$0xff]
    %v4689 = vld [vmem:[#allocation8 + $0x280] sm:$0xff]
    %v4690 = vld [vmem:[#allocation8 + $0x288] sm:$0xff]
    %v4691 = vld [vmem:[#allocation8 + $0x290] sm:$0xff]
    %v4692 = vld [vmem:[#allocation8 + $0x298] sm:$0xff]
    %v4693 = vld [vmem:[#allocation8 + $0x2a0] sm:$0xff]
    %v4694 = vld [vmem:[#allocation8 + $0x2a8] sm:$0xff]
    %v4695 = vld [vmem:[#allocation8 + $0x2b0] sm:$0xff]
    %v4696 = vld [vmem:[#allocation8 + $0x2b8] sm:$0xff]
    %v4697 = vld [vmem:[#allocation8 + $0x2c0] sm:$0xff]
    %v4698 = vld [vmem:[#allocation8 + $0x2c8] sm:$0xff]
    %v4699 = vld [vmem:[#allocation8 + $0x2d0] sm:$0xff]
    %v4700 = vld [vmem:[#allocation8 + $0x2d8] sm:$0xff]
    %v4701 = vld [vmem:[#allocation8 + $0x2e0] sm:$0xff]
    %v4702 = vld [vmem:[#allocation8 + $0x2e8] sm:$0xff]
    %v4703 = vld [vmem:[#allocation8 + $0x2f0] sm:$0xff]
    %v4704 = vld [vmem:[#allocation8 + $0x2f8] sm:$0xff]
    %v4705 = vld [vmem:[#allocation8 + $0x300] sm:$0xff]
    %v4706 = vld [vmem:[#allocation8 + $0x308] sm:$0xff]
    %v4707 = vld [vmem:[#allocation8 + $0x310] sm:$0xff]
    %v4708 = vld [vmem:[#allocation8 + $0x318] sm:$0xff]
    %v4709 = vld [vmem:[#allocation8 + $0x320] sm:$0xff]
    %v4710 = vld [vmem:[#allocation8 + $0x328] sm:$0xff]
    %v4711 = vld [vmem:[#allocation8 + $0x330] sm:$0xff]
    %v4712 = vld [vmem:[#allocation8 + $0x338] sm:$0xff]
    %v4713 = vld [vmem:[#allocation8 + $0x340] sm:$0xff]
    %v4714 = vld [vmem:[#allocation8 + $0x348] sm:$0xff]
    %v4715 = vld [vmem:[#allocation8 + $0x350] sm:$0xff]
    %v4716 = vld [vmem:[#allocation8 + $0x358] sm:$0xff]
    %v4717 = vld [vmem:[#allocation8 + $0x360] sm:$0xff]
    %v4718 = vld [vmem:[#allocation8 + $0x368] sm:$0xff]
    %v4719 = vld [vmem:[#allocation8 + $0x370] sm:$0xff]
    %v4720 = vld [vmem:[#allocation8 + $0x378] sm:$0xff]
    %v4721 = vld [vmem:[#allocation8 + $0x380] sm:$0xff]
    %v4722 = vld [vmem:[#allocation8 + $0x388] sm:$0xff]
    %v4723 = vld [vmem:[#allocation8 + $0x390] sm:$0xff]
    %v4724 = vld [vmem:[#allocation8 + $0x398] sm:$0xff]
    %v4725 = vld [vmem:[#allocation8 + $0x3a0] sm:$0xff]
    %v4726 = vld [vmem:[#allocation8 + $0x3a8] sm:$0xff]
    %v4727 = vld [vmem:[#allocation8 + $0x3b0] sm:$0xff]
    %v4728 = vld [vmem:[#allocation8 + $0x3b8] sm:$0xff]
    %v4729 = vld [vmem:[#allocation8 + $0x3c0] sm:$0xff]
    %v4730 = vld [vmem:[#allocation8 + $0x3c8] sm:$0xff]
    %v4731 = vld [vmem:[#allocation8 + $0x3d0] sm:$0xff]
    %v4732 = vld [vmem:[#allocation8 + $0x3d8] sm:$0xff]
    %v4733 = vld [vmem:[#allocation8 + $0x3e0] sm:$0xff]
    %v4734 = vld [vmem:[#allocation8 + $0x3e8] sm:$0xff]
    %v4735 = vld [vmem:[#allocation8 + $0x3f0] sm:$0xff]
    %v4736 = vld [vmem:[#allocation8 + $0x3f8] sm:$0xff]
    %v4737 = vld [vmem:[#allocation8 + $0x400] sm:$0xff]
    %v4738 = vld [vmem:[#allocation8 + $0x408] sm:$0xff]
    %v4739 = vld [vmem:[#allocation8 + $0x410] sm:$0xff]
    %v4740 = vld [vmem:[#allocation8 + $0x418] sm:$0xff]
    %v4741 = vld [vmem:[#allocation8 + $0x420] sm:$0xff]
    %v4742 = vld [vmem:[#allocation8 + $0x428] sm:$0xff]
    %v4743 = vld [vmem:[#allocation8 + $0x430] sm:$0xff]
    %v4744 = vld [vmem:[#allocation8 + $0x438] sm:$0xff]
    %v4745 = vld [vmem:[#allocation8 + $0x440] sm:$0xff]
    %v4746 = vld [vmem:[#allocation8 + $0x448] sm:$0xff]
    %v4747 = vld [vmem:[#allocation8 + $0x450] sm:$0xff]
    %v4748 = vld [vmem:[#allocation8 + $0x458] sm:$0xff]
    %v4749 = vld [vmem:[#allocation8 + $0x460] sm:$0xff]
    %v4750 = vld [vmem:[#allocation8 + $0x468] sm:$0xff]
    %v4751 = vld [vmem:[#allocation8 + $0x470] sm:$0xff]
    %v4752 = vld [vmem:[#allocation8 + $0x478] sm:$0xff]
    %v4753 = vld [vmem:[#allocation8 + $0x480] sm:$0xff]
    %v4754 = vld [vmem:[#allocation8 + $0x488] sm:$0xff]
    %v4755 = vld [vmem:[#allocation8 + $0x490] sm:$0xff]
    %v4756 = vld [vmem:[#allocation8 + $0x498] sm:$0xff]
    %v4757 = vld [vmem:[#allocation8 + $0x4a0] sm:$0xff]
    %v4758 = vld [vmem:[#allocation8 + $0x4a8] sm:$0xff]
    %v4759 = vld [vmem:[#allocation8 + $0x4b0] sm:$0xff]
    %v4760 = vld [vmem:[#allocation8 + $0x4b8] sm:$0xff]
    %v4761 = vld [vmem:[#allocation8 + $0x4c0] sm:$0xff]
    %v4762 = vld [vmem:[#allocation8 + $0x4c8] sm:$0xff]
    %v4763 = vld [vmem:[#allocation8 + $0x4d0] sm:$0xff]
    %v4764 = vld [vmem:[#allocation8 + $0x4d8] sm:$0xff]
    %v4765 = vld [vmem:[#allocation8 + $0x4e0] sm:$0xff]
    %v4766 = vld [vmem:[#allocation8 + $0x4e8] sm:$0xff]
    %v4767 = vld [vmem:[#allocation8 + $0x4f0] sm:$0xff]
    %v4768 = vld [vmem:[#allocation8 + $0x4f8] sm:$0xff]
    %v4769 = vld [vmem:[#allocation8 + $0x500] sm:$0xff]
    %v4770 = vld [vmem:[#allocation8 + $0x508] sm:$0xff]
    %v4771 = vld [vmem:[#allocation8 + $0x510] sm:$0xff]
    %v4772 = vld [vmem:[#allocation8 + $0x518] sm:$0xff]
    %v4773 = vld [vmem:[#allocation8 + $0x520] sm:$0xff]
    %v4774 = vld [vmem:[#allocation8 + $0x528] sm:$0xff]
    %v4775 = vld [vmem:[#allocation8 + $0x530] sm:$0xff]
    %v4776 = vld [vmem:[#allocation8 + $0x538] sm:$0xff]
    %v4777 = vld [vmem:[#allocation8 + $0x540] sm:$0xff]
    %v4778 = vld [vmem:[#allocation8 + $0x548] sm:$0xff]
    %v4779 = vld [vmem:[#allocation8 + $0x550] sm:$0xff]
    %v4780 = vld [vmem:[#allocation8 + $0x558] sm:$0xff]
    %v4781 = vld [vmem:[#allocation8 + $0x560] sm:$0xff]
    %v4782 = vld [vmem:[#allocation8 + $0x568] sm:$0xff]
    %v4783 = vld [vmem:[#allocation8 + $0x570] sm:$0xff]
    %v4784 = vld [vmem:[#allocation8 + $0x578] sm:$0xff]
    %v4785 = vld [vmem:[#allocation8 + $0x580] sm:$0xff]
    %v4786 = vld [vmem:[#allocation8 + $0x588] sm:$0xff]
    %v4787 = vld [vmem:[#allocation8 + $0x590] sm:$0xff]
    %v4788 = vld [vmem:[#allocation8 + $0x598] sm:$0xff]
    %v4789 = vld [vmem:[#allocation8 + $0x5a0] sm:$0xff]
    %v4790 = vld [vmem:[#allocation8 + $0x5a8] sm:$0xff]
    %v4791 = vld [vmem:[#allocation8 + $0x5b0] sm:$0xff]
    %v4792 = vld [vmem:[#allocation8 + $0x5b8] sm:$0xff]
    %v4793 = vld [vmem:[#allocation8 + $0x5c0] sm:$0xff]
    %v4794 = vld [vmem:[#allocation8 + $0x5c8] sm:$0xff]
    %v4795 = vld [vmem:[#allocation8 + $0x5d0] sm:$0xff]
    %v4796 = vld [vmem:[#allocation8 + $0x5d8] sm:$0xff]
    %v4797 = vld [vmem:[#allocation8 + $0x5e0] sm:$0xff]
    %v4798 = vld [vmem:[#allocation8 + $0x5e8] sm:$0xff]
    %v4799 = vld [vmem:[#allocation8 + $0x5f0] sm:$0xff]
    %v4800 = vld [vmem:[#allocation8 + $0x5f8] sm:$0xff]
    %v4801 = vld [vmem:[#allocation8 + $0x600] sm:$0xff]
    %v4802 = vld [vmem:[#allocation8 + $0x608] sm:$0xff]
    %v4803 = vld [vmem:[#allocation8 + $0x610] sm:$0xff]
    %v4804 = vld [vmem:[#allocation8 + $0x618] sm:$0xff]
    %v4805 = vld [vmem:[#allocation8 + $0x620] sm:$0xff]
    %v4806 = vld [vmem:[#allocation8 + $0x628] sm:$0xff]
    %v4807 = vld [vmem:[#allocation8 + $0x630] sm:$0xff]
    %v4808 = vld [vmem:[#allocation8 + $0x638] sm:$0xff]
    %v4809 = vld [vmem:[#allocation8 + $0x640] sm:$0xff]
    %v4810 = vld [vmem:[#allocation8 + $0x648] sm:$0xff]
    %v4811 = vld [vmem:[#allocation8 + $0x650] sm:$0xff]
    %v4812 = vld [vmem:[#allocation8 + $0x658] sm:$0xff]
    %v4813 = vld [vmem:[#allocation8 + $0x660] sm:$0xff]
    %v4814 = vld [vmem:[#allocation8 + $0x668] sm:$0xff]
    %v4815 = vld [vmem:[#allocation8 + $0x670] sm:$0xff]
    %v4816 = vld [vmem:[#allocation8 + $0x678] sm:$0xff]
    %v4817 = vld [vmem:[#allocation8 + $0x680] sm:$0xff]
    %v4818 = vld [vmem:[#allocation8 + $0x688] sm:$0xff]
    %v4819 = vld [vmem:[#allocation8 + $0x690] sm:$0xff]
    %v4820 = vld [vmem:[#allocation8 + $0x698] sm:$0xff]
    %v4821 = vld [vmem:[#allocation8 + $0x6a0] sm:$0xff]
    %v4822 = vld [vmem:[#allocation8 + $0x6a8] sm:$0xff]
    %v4823 = vld [vmem:[#allocation8 + $0x6b0] sm:$0xff]
    %v4824 = vld [vmem:[#allocation8 + $0x6b8] sm:$0xff]
    %v4825 = vld [vmem:[#allocation8 + $0x6c0] sm:$0xff]
    %v4826 = vld [vmem:[#allocation8 + $0x6c8] sm:$0xff]
    %v4827 = vld [vmem:[#allocation8 + $0x6d0] sm:$0xff]
    %v4828 = vld [vmem:[#allocation8 + $0x6d8] sm:$0xff]
    %v4829 = vld [vmem:[#allocation8 + $0x6e0] sm:$0xff]
    %v4830 = vld [vmem:[#allocation8 + $0x6e8] sm:$0xff]
    %v4831 = vld [vmem:[#allocation8 + $0x6f0] sm:$0xff]
    %v4832 = vld [vmem:[#allocation8 + $0x6f8] sm:$0xff]
    %v4833 = vld [vmem:[#allocation8 + $0x700] sm:$0xff]
    %v4834 = vld [vmem:[#allocation8 + $0x708] sm:$0xff]
    %v4835 = vld [vmem:[#allocation8 + $0x710] sm:$0xff]
    %v4836 = vld [vmem:[#allocation8 + $0x718] sm:$0xff]
    %v4837 = vld [vmem:[#allocation8 + $0x720] sm:$0xff]
    %v4838 = vld [vmem:[#allocation8 + $0x728] sm:$0xff]
    %v4839 = vld [vmem:[#allocation8 + $0x730] sm:$0xff]
    %v4840 = vld [vmem:[#allocation8 + $0x738] sm:$0xff]
    %v4841 = vld [vmem:[#allocation8 + $0x740] sm:$0xff]
    %v4842 = vld [vmem:[#allocation8 + $0x748] sm:$0xff]
    %v4843 = vld [vmem:[#allocation8 + $0x750] sm:$0xff]
    %v4844 = vld [vmem:[#allocation8 + $0x758] sm:$0xff]
    %v4845 = vld [vmem:[#allocation8 + $0x760] sm:$0xff]
    %v4846 = vld [vmem:[#allocation8 + $0x768] sm:$0xff]
    %v4847 = vld [vmem:[#allocation8 + $0x770] sm:$0xff]
    %v4848 = vld [vmem:[#allocation8 + $0x778] sm:$0xff]
    %v4849 = vld [vmem:[#allocation8 + $0x780] sm:$0xff]
    %v4850 = vld [vmem:[#allocation8 + $0x788] sm:$0xff]
    %v4851 = vld [vmem:[#allocation8 + $0x790] sm:$0xff]
    %v4852 = vld [vmem:[#allocation8 + $0x798] sm:$0xff]
    %v4853 = vld [vmem:[#allocation8 + $0x7a0] sm:$0xff]
    %v4854 = vld [vmem:[#allocation8 + $0x7a8] sm:$0xff]
    %v4855 = vld [vmem:[#allocation8 + $0x7b0] sm:$0xff]
    %v4856 = vld [vmem:[#allocation8 + $0x7b8] sm:$0xff]
    %v4857 = vld [vmem:[#allocation8 + $0x7c0] sm:$0xff]
    %v4858 = vld [vmem:[#allocation8 + $0x7c8] sm:$0xff]
    %v4859 = vld [vmem:[#allocation8 + $0x7d0] sm:$0xff]
    %v4860 = vld [vmem:[#allocation8 + $0x7d8] sm:$0xff]
    %v4861 = vld [vmem:[#allocation8 + $0x7e0] sm:$0xff]
    %v4862 = vld [vmem:[#allocation8 + $0x7e8] sm:$0xff]
    %v4863 = vld [vmem:[#allocation8 + $0x7f0] sm:$0xff]
    %v4864 = vld [vmem:[#allocation8 + $0x7f8] sm:$0xff]
    %4865 = vmatprep.subr.mxu0 %v4610
    %4866 = vmatpush1.xpose.msra.mxu0 %v4609
    %4867 = vmatprep.subr.mxu0 %v4614
    %4868 = vmatpush1.xpose.msra.mxu0 %v4613
    %4869 = vmatprep.subr.mxu0 %v4618
    %4870 = vmatpush1.xpose.msra.mxu0 %v4617
    %4871 = vmatprep.subr.mxu0 %v4622
    %4872 = vmatpush1.xpose.msra.mxu0 %v4621
    %4873 = vmatprep.subr.mxu0 %v4626
    %4874 = vmatpush1.xpose.msra.mxu0 %v4625
    %4875 = vmatprep.subr.mxu0 %v4630
    %4876 = vmatpush1.xpose.msra.mxu0 %v4629
    %4877 = vmatprep.subr.mxu0 %v4634
    %4878 = vmatpush1.xpose.msra.mxu0 %v4633
    %4879 = vmatprep.subr.mxu0 %v4638
    %4880 = vmatpush1.xpose.msra.mxu0 %v4637
    %4881 = vmatprep.subr.mxu0 %v4642
    %4882 = vmatpush1.xpose.msra.mxu0 %v4641
    %4883 = vmatprep.subr.mxu0 %v4646
    %4884 = vmatpush1.xpose.msra.mxu0 %v4645
    %4885 = vmatprep.subr.mxu0 %v4650
    %4886 = vmatpush1.xpose.msra.mxu0 %v4649
    %4887 = vmatprep.subr.mxu0 %v4654
    %4888 = vmatpush1.xpose.msra.mxu0 %v4653
    %4889 = vmatprep.subr.mxu0 %v4658
    %4890 = vmatpush1.xpose.msra.mxu0 %v4657
    %4891 = vmatprep.subr.mxu0 %v4662
    %4892 = vmatpush1.xpose.msra.mxu0 %v4661
    %4893 = vmatprep.subr.mxu0 %v4666
    %4894 = vmatpush1.xpose.msra.mxu0 %v4665
    %4895 = vmatprep.subr.mxu0 %v4670
    %4896 = vmatpush1.xpose.msra.mxu0 %v4669
    %4897 = vmatprep.subr.mxu0 %v4674
    %4898 = vmatpush1.xpose.msra.mxu0 %v4673
    %4899 = vmatprep.subr.mxu0 %v4678
    %4900 = vmatpush1.xpose.msra.mxu0 %v4677
    %4901 = vmatprep.subr.mxu0 %v4682
    %4902 = vmatpush1.xpose.msra.mxu0 %v4681
    %4903 = vmatprep.subr.mxu0 %v4686
    %4904 = vmatpush1.xpose.msra.mxu0 %v4685
    %4905 = vmatprep.subr.mxu0 %v4690
    %4906 = vmatpush1.xpose.msra.mxu0 %v4689
    %4907 = vmatprep.subr.mxu0 %v4694
    %4908 = vmatpush1.xpose.msra.mxu0 %v4693
    %4909 = vmatprep.subr.mxu0 %v4698
    %4910 = vmatpush1.xpose.msra.mxu0 %v4697
    %4911 = vmatprep.subr.mxu0 %v4702
    %4912 = vmatpush1.xpose.msra.mxu0 %v4701
    %4913 = vmatprep.subr.mxu0 %v4706
    %4914 = vmatpush1.xpose.msra.mxu0 %v4705
    %4915 = vmatprep.subr.mxu0 %v4710
    %4916 = vmatpush1.xpose.msra.mxu0 %v4709
    %4917 = vmatprep.subr.mxu0 %v4714
    %4918 = vmatpush1.xpose.msra.mxu0 %v4713
    %4919 = vmatprep.subr.mxu0 %v4718
    %4920 = vmatpush1.xpose.msra.mxu0 %v4717
    %4921 = vmatprep.subr.mxu0 %v4722
    %4922 = vmatpush1.xpose.msra.mxu0 %v4721
    %4923 = vmatprep.subr.mxu0 %v4726
    %4924 = vmatpush1.xpose.msra.mxu0 %v4725
    %4925 = vmatprep.subr.mxu0 %v4730
    %4926 = vmatpush1.xpose.msra.mxu0 %v4729
    %4927 = vmatprep.subr.mxu0 %v4734
    %4928 = vmatpush1.xpose.msra.mxu0 %v4733
    %4929 = vmatprep.mubr.f32.mxu0 %v4602
    %4930 = vmatmul.mubr.f32.gmra.mrb[0].mxu0 %v4601
    %v4931 = vpop.f32.mrb[0].mxu0
    %v4932 = vadd.f32 0.0, %v4931
    %v4933 = vpop.f32.mrb[0].mxu0
    %v4934 = vadd.f32 0.0, %v4933
    %4935 = vmatprep.mubr.f32.mxu0 %v4606
    %4936 = vmatmul.mubr.f32.gmra.mrb[0].mxu0 %v4605
    %v4937 = vpop.f32.mrb[0].mxu0
    %v4938 = vadd.f32 0.0, %v4937
    %v4939 = vpop.f32.mrb[0].mxu0
    %v4940 = vadd.f32 0.0, %v4939
    %4941 = vdwg.mxu0
    %4942 = vmatprep.subr.mxu0 %v4612
    %4943 = vmatpush1.xpose.msra.mxu0 %v4611
    %4944 = vmatprep.subr.mxu0 %v4616
    %4945 = vmatpush1.xpose.msra.mxu0 %v4615
    %4946 = vmatprep.subr.mxu0 %v4620
    %4947 = vmatpush1.xpose.msra.mxu0 %v4619
    %4948 = vmatprep.subr.mxu0 %v4624
    %4949 = vmatpush1.xpose.msra.mxu0 %v4623
    %4950 = vmatprep.subr.mxu0 %v4628
    %4951 = vmatpush1.xpose.msra.mxu0 %v4627
    %4952 = vmatprep.subr.mxu0 %v4632
    %4953 = vmatpush1.xpose.msra.mxu0 %v4631
    %4954 = vmatprep.subr.mxu0 %v4636
    %4955 = vmatpush1.xpose.msra.mxu0 %v4635
    %4956 = vmatprep.subr.mxu0 %v4640
    %4957 = vmatpush1.xpose.msra.mxu0 %v4639
    %4958 = vmatprep.subr.mxu0 %v4644
    %4959 = vmatpush1.xpose.msra.mxu0 %v4643
    %4960 = vmatprep.subr.mxu0 %v4648
    %4961 = vmatpush1.xpose.msra.mxu0 %v4647
    %4962 = vmatprep.subr.mxu0 %v4652
    %4963 = vmatpush1.xpose.msra.mxu0 %v4651
    %4964 = vmatprep.subr.mxu0 %v4656
    %4965 = vmatpush1.xpose.msra.mxu0 %v4655
    %4966 = vmatprep.subr.mxu0 %v4660
    %4967 = vmatpush1.xpose.msra.mxu0 %v4659
    %4968 = vmatprep.subr.mxu0 %v4664
    %4969 = vmatpush1.xpose.msra.mxu0 %v4663
    %4970 = vmatprep.subr.mxu0 %v4668
    %4971 = vmatpush1.xpose.msra.mxu0 %v4667
    %4972 = vmatprep.subr.mxu0 %v4672
    %4973 = vmatpush1.xpose.msra.mxu0 %v4671
    %4974 = vmatprep.subr.mxu0 %v4676
    %4975 = vmatpush1.xpose.msra.mxu0 %v4675
    %4976 = vmatprep.subr.mxu0 %v4680
    %4977 = vmatpush1.xpose.msra.mxu0 %v4679
    %4978 = vmatprep.subr.mxu0 %v4684
    %4979 = vmatpush1.xpose.msra.mxu0 %v4683
    %4980 = vmatprep.subr.mxu0 %v4688
    %4981 = vmatpush1.xpose.msra.mxu0 %v4687
    %4982 = vmatprep.subr.mxu0 %v4692
    %4983 = vmatpush1.xpose.msra.mxu0 %v4691
    %4984 = vmatprep.subr.mxu0 %v4696
    %4985 = vmatpush1.xpose.msra.mxu0 %v4695
    %4986 = vmatprep.subr.mxu0 %v4700
    %4987 = vmatpush1.xpose.msra.mxu0 %v4699
    %4988 = vmatprep.subr.mxu0 %v4704
    %4989 = vmatpush1.xpose.msra.mxu0 %v4703
    %4990 = vmatprep.subr.mxu0 %v4708
    %4991 = vmatpush1.xpose.msra.mxu0 %v4707
    %4992 = vmatprep.subr.mxu0 %v4712
    %4993 = vmatpush1.xpose.msra.mxu0 %v4711
    %4994 = vmatprep.subr.mxu0 %v4716
    %4995 = vmatpush1.xpose.msra.mxu0 %v4715
    %4996 = vmatprep.subr.mxu0 %v4720
    %4997 = vmatpush1.xpose.msra.mxu0 %v4719
    %4998 = vmatprep.subr.mxu0 %v4724
    %4999 = vmatpush1.xpose.msra.mxu0 %v4723
    %5000 = vmatprep.subr.mxu0 %v4728
    %5001 = vmatpush1.xpose.msra.mxu0 %v4727
    %5002 = vmatprep.subr.mxu0 %v4732
    %5003 = vmatpush1.xpose.msra.mxu0 %v4731
    %5004 = vmatprep.subr.mxu0 %v4736
    %5005 = vmatpush1.xpose.msra.mxu0 %v4735
    %5006 = vmatprep.mubr.f32.mxu0 %v4604
    %5007 = vmatmul.mubr.f32.gmra.mrb[0].mxu0 %v4603
    %v5008 = vpop.f32.mrb[0].mxu0
    %v5009 = vadd.f32 %v4932, %v5008
    %v5010 = vpop.f32.mrb[0].mxu0
    %v5011 = vadd.f32 %v4934, %v5010
    %5012 = vmatprep.mubr.f32.mxu0 %v4608
    %5013 = vmatmul.mubr.f32.gmra.mrb[0].mxu0 %v4607
    %v5014 = vpop.f32.mrb[0].mxu0
    %v5015 = vadd.f32 %v4938, %v5014
    %v5016 = vpop.f32.mrb[0].mxu0
    %v5017 = vadd.f32 %v4940, %v5016
    %5018 = vdwg.mxu0
    %5019 = vmatprep.subr.mxu0 %v4738
    %5020 = vmatpush1.xpose.msra.mxu0 %v4737
    %5021 = vmatprep.subr.mxu0 %v4742
    %5022 = vmatpush1.xpose.msra.mxu0 %v4741
    %5023 = vmatprep.subr.mxu0 %v4746
    %5024 = vmatpush1.xpose.msra.mxu0 %v4745
    %5025 = vmatprep.subr.mxu0 %v4750
    %5026 = vmatpush1.xpose.msra.mxu0 %v4749
    %5027 = vmatprep.subr.mxu0 %v4754
    %5028 = vmatpush1.xpose.msra.mxu0 %v4753
    %5029 = vmatprep.subr.mxu0 %v4758
    %5030 = vmatpush1.xpose.msra.mxu0 %v4757
    %5031 = vmatprep.subr.mxu0 %v4762
    %5032 = vmatpush1.xpose.msra.mxu0 %v4761
    %5033 = vmatprep.subr.mxu0 %v4766
    %5034 = vmatpush1.xpose.msra.mxu0 %v4765
    %5035 = vmatprep.subr.mxu0 %v4770
    %5036 = vmatpush1.xpose.msra.mxu0 %v4769
    %5037 = vmatprep.subr.mxu0 %v4774
    %5038 = vmatpush1.xpose.msra.mxu0 %v4773
    %5039 = vmatprep.subr.mxu0 %v4778
    %5040 = vmatpush1.xpose.msra.mxu0 %v4777
    %5041 = vmatprep.subr.mxu0 %v4782
    %5042 = vmatpush1.xpose.msra.mxu0 %v4781
    %5043 = vmatprep.subr.mxu0 %v4786
    %5044 = vmatpush1.xpose.msra.mxu0 %v4785
    %5045 = vmatprep.subr.mxu0 %v4790
    %5046 = vmatpush1.xpose.msra.mxu0 %v4789
    %5047 = vmatprep.subr.mxu0 %v4794
    %5048 = vmatpush1.xpose.msra.mxu0 %v4793
    %5049 = vmatprep.subr.mxu0 %v4798
    %5050 = vmatpush1.xpose.msra.mxu0 %v4797
    %5051 = vmatprep.subr.mxu0 %v4802
    %5052 = vmatpush1.xpose.msra.mxu0 %v4801
    %5053 = vmatprep.subr.mxu0 %v4806
    %5054 = vmatpush1.xpose.msra.mxu0 %v4805
    %5055 = vmatprep.subr.mxu0 %v4810
    %5056 = vmatpush1.xpose.msra.mxu0 %v4809
    %5057 = vmatprep.subr.mxu0 %v4814
    %5058 = vmatpush1.xpose.msra.mxu0 %v4813
    %5059 = vmatprep.subr.mxu0 %v4818
    %5060 = vmatpush1.xpose.msra.mxu0 %v4817
    %5061 = vmatprep.subr.mxu0 %v4822
    %5062 = vmatpush1.xpose.msra.mxu0 %v4821
    %5063 = vmatprep.subr.mxu0 %v4826
    %5064 = vmatpush1.xpose.msra.mxu0 %v4825
    %5065 = vmatprep.subr.mxu0 %v4830
    %5066 = vmatpush1.xpose.msra.mxu0 %v4829
    %5067 = vmatprep.subr.mxu0 %v4834
    %5068 = vmatpush1.xpose.msra.mxu0 %v4833
    %5069 = vmatprep.subr.mxu0 %v4838
    %5070 = vmatpush1.xpose.msra.mxu0 %v4837
    %5071 = vmatprep.subr.mxu0 %v4842
    %5072 = vmatpush1.xpose.msra.mxu0 %v4841
    %5073 = vmatprep.subr.mxu0 %v4846
    %5074 = vmatpush1.xpose.msra.mxu0 %v4845
    %5075 = vmatprep.subr.mxu0 %v4850
    %5076 = vmatpush1.xpose.msra.mxu0 %v4849
    %5077 = vmatprep.subr.mxu0 %v4854
    %5078 = vmatpush1.xpose.msra.mxu0 %v4853
    %5079 = vmatprep.subr.mxu0 %v4858
    %5080 = vmatpush1.xpose.msra.mxu0 %v4857
    %5081 = vmatprep.subr.mxu0 %v4862
    %5082 = vmatpush1.xpose.msra.mxu0 %v4861
    %5083 = vmatprep.mubr.f32.mxu0 %v4602
    %5084 = vmatmul.mubr.f32.gmra.mrb[0].mxu0 %v4601
    %v5085 = vpop.f32.mrb[0].mxu0
    %v5086 = vadd.f32 0.0, %v5085
    %v5087 = vpop.f32.mrb[0].mxu0
    %v5088 = vadd.f32 0.0, %v5087
    %5089 = vmatprep.mubr.f32.mxu0 %v4606
    %5090 = vmatmul.mubr.f32.gmra.mrb[0].mxu0 %v4605
    %v5091 = vpop.f32.mrb[0].mxu0
    %v5092 = vadd.f32 0.0, %v5091
    %v5093 = vpop.f32.mrb[0].mxu0
    %v5094 = vadd.f32 0.0, %v5093
    %5095 = vdwg.mxu0
    %5096 = vmatprep.subr.mxu0 %v4740
    %5097 = vmatpush1.xpose.msra.mxu0 %v4739
    %5098 = vmatprep.subr.mxu0 %v4744
    %5099 = vmatpush1.xpose.msra.mxu0 %v4743
    %5100 = vmatprep.subr.mxu0 %v4748
    %5101 = vmatpush1.xpose.msra.mxu0 %v4747
    %5102 = vmatprep.subr.mxu0 %v4752
    %5103 = vmatpush1.xpose.msra.mxu0 %v4751
    %5104 = vmatprep.subr.mxu0 %v4756
    %5105 = vmatpush1.xpose.msra.mxu0 %v4755
    %5106 = vmatprep.subr.mxu0 %v4760
    %5107 = vmatpush1.xpose.msra.mxu0 %v4759
    %5108 = vmatprep.subr.mxu0 %v4764
    %5109 = vmatpush1.xpose.msra.mxu0 %v4763
    %5110 = vmatprep.subr.mxu0 %v4768
    %5111 = vmatpush1.xpose.msra.mxu0 %v4767
    %5112 = vmatprep.subr.mxu0 %v4772
    %5113 = vmatpush1.xpose.msra.mxu0 %v4771
    %5114 = vmatprep.subr.mxu0 %v4776
    %5115 = vmatpush1.xpose.msra.mxu0 %v4775
    %5116 = vmatprep.subr.mxu0 %v4780
    %5117 = vmatpush1.xpose.msra.mxu0 %v4779
    %5118 = vmatprep.subr.mxu0 %v4784
    %5119 = vmatpush1.xpose.msra.mxu0 %v4783
    %5120 = vmatprep.subr.mxu0 %v4788
    %5121 = vmatpush1.xpose.msra.mxu0 %v4787
    %5122 = vmatprep.subr.mxu0 %v4792
    %5123 = vmatpush1.xpose.msra.mxu0 %v4791
    %5124 = vmatprep.subr.mxu0 %v4796
    %5125 = vmatpush1.xpose.msra.mxu0 %v4795
    %5126 = vmatprep.subr.mxu0 %v4800
    %5127 = vmatpush1.xpose.msra.mxu0 %v4799
    %5128 = vmatprep.subr.mxu0 %v4804
    %5129 = vmatpush1.xpose.msra.mxu0 %v4803
    %5130 = vmatprep.subr.mxu0 %v4808
    %5131 = vmatpush1.xpose.msra.mxu0 %v4807
    %5132 = vmatprep.subr.mxu0 %v4812
    %5133 = vmatpush1.xpose.msra.mxu0 %v4811
    %5134 = vmatprep.subr.mxu0 %v4816
    %5135 = vmatpush1.xpose.msra.mxu0 %v4815
    %5136 = vmatprep.subr.mxu0 %v4820
    %5137 = vmatpush1.xpose.msra.mxu0 %v4819
    %5138 = vmatprep.subr.mxu0 %v4824
    %5139 = vmatpush1.xpose.msra.mxu0 %v4823
    %5140 = vmatprep.subr.mxu0 %v4828
    %5141 = vmatpush1.xpose.msra.mxu0 %v4827
    %5142 = vmatprep.subr.mxu0 %v4832
    %5143 = vmatpush1.xpose.msra.mxu0 %v4831
    %5144 = vmatprep.subr.mxu0 %v4836
    %5145 = vmatpush1.xpose.msra.mxu0 %v4835
    %5146 = vmatprep.subr.mxu0 %v4840
    %5147 = vmatpush1.xpose.msra.mxu0 %v4839
    %5148 = vmatprep.subr.mxu0 %v4844
    %5149 = vmatpush1.xpose.msra.mxu0 %v4843
    %5150 = vmatprep.subr.mxu0 %v4848
    %5151 = vmatpush1.xpose.msra.mxu0 %v4847
    %5152 = vmatprep.subr.mxu0 %v4852
    %5153 = vmatpush1.xpose.msra.mxu0 %v4851
    %5154 = vmatprep.subr.mxu0 %v4856
    %5155 = vmatpush1.xpose.msra.mxu0 %v4855
    %5156 = vmatprep.subr.mxu0 %v4860
    %5157 = vmatpush1.xpose.msra.mxu0 %v4859
    %5158 = vmatprep.subr.mxu0 %v4864
    %5159 = vmatpush1.xpose.msra.mxu0 %v4863
    %5160 = vmatprep.mubr.f32.mxu0 %v4604
    %5161 = vmatmul.mubr.f32.gmra.mrb[0].mxu0 %v4603
    %v5162 = vpop.f32.mrb[0].mxu0
    %v5163 = vadd.f32 %v5086, %v5162
    %v5164 = vpop.f32.mrb[0].mxu0
    %v5165 = vadd.f32 %v5088, %v5164
    %5166 = vmatprep.mubr.f32.mxu0 %v4608
    %5167 = vmatmul.mubr.f32.gmra.mrb[0].mxu0 %v4607
    %v5168 = vpop.f32.mrb[0].mxu0
    %v5169 = vadd.f32 %v5092, %v5168
    %v5170 = vpop.f32.mrb[0].mxu0
    %v5171 = vadd.f32 %v5094, %v5170
    %5172 = vdwg.mxu0
    %p5173 = scmp.eq.s32.totalorder 0, 0
    // Predicated region
    $region66: #{_mha_forward.1} parent=1 // pred_check
      %p5174 = pneg %p5173
    $region67: #{_mha_forward.1} parent=1 // pred_check_branch
      %5176 = sbr.rel (%p5174) target = $region69
    $region68: #{_mha_forward.1} parent=1 // pred_region
      %v5177 = vld [vmem:[#allocation10] sm:$0xf]
      %v5179 = vlaneseq
      %v5180 = vshrl.u32 %v5179, 7
      %v5181 = vsub.s32 0, %v5180
      %v5182 = vrot.slane %v5177, %v5181
      %v5183 = vlaneseq
      %v5184 = vshrl.u32 %v5183, 7
      %v5185 = vsub.s32 1, %v5184
      %v5186 = vrot.slane %v5177, %v5185
      %v5187 = vlaneseq
      %v5188 = vshrl.u32 %v5187, 7
      %v5189 = vsub.s32 2, %v5188
      %v5190 = vrot.slane %v5177, %v5189
      %v5191 = vlaneseq
      %v5192 = vshrl.u32 %v5191, 7
      %v5193 = vsub.s32 3, %v5192
      %v5194 = vrot.slane %v5177, %v5193
      %v5199 = vadd.f32 %v5009, %v5182
      %v5200 = vadd.f32 %v5011, %v5186
      %v5201 = vadd.f32 %v5163, %v5190
      %v5202 = vadd.f32 %v5165, %v5194
      %v5203 = vadd.f32 %v5015, %v5182
      %v5204 = vadd.f32 %v5017, %v5186
      %v5205 = vadd.f32 %v5169, %v5190
      %v5206 = vadd.f32 %v5171, %v5194
      %5207 = vst [vmem:[%s11] sm:$0xff] %v5199
      %5208 = vst [vmem:[%s11 + $0x8] sm:$0xff] %v5200
      %5209 = vst [vmem:[%s11 + $0x10] sm:$0xff] %v5201
      %5210 = vst [vmem:[%s11 + $0x18] sm:$0xff] %v5202
      %5211 = vst [vmem:[%s11 + $0x20] sm:$0xff] %v5203
      %5212 = vst [vmem:[%s11 + $0x28] sm:$0xff] %v5204
      %5213 = vst [vmem:[%s11 + $0x30] sm:$0xff] %v5205
      %5214 = vst [vmem:[%s11 + $0x38] sm:$0xff] %v5206
    $region69: #{_mha_forward.1} parent=1 // pred_fallthru
      _
    %p5215 = scmp.ne.s32.totalorder 0, 0
    // Predicated region
    $region70: #{_mha_forward.1} parent=1 // pred_check
      %p5216 = pneg %p5215
    $region71: #{_mha_forward.1} parent=1 // pred_check_branch
      %5218 = sbr.rel (%p5216) target = $region73
    $region72: #{_mha_forward.1} parent=1 // pred_region
      %5219 = vst [vmem:[%s11] sm:$0xff] %v5009
      %5220 = vst [vmem:[%s11 + $0x8] sm:$0xff] %v5011
      %5221 = vst [vmem:[%s11 + $0x10] sm:$0xff] %v5163
      %5222 = vst [vmem:[%s11 + $0x18] sm:$0xff] %v5165
      %5223 = vst [vmem:[%s11 + $0x20] sm:$0xff] %v5015
      %5224 = vst [vmem:[%s11 + $0x28] sm:$0xff] %v5017
      %5225 = vst [vmem:[%s11 + $0x30] sm:$0xff] %v5169
      %5226 = vst [vmem:[%s11 + $0x38] sm:$0xff] %v5171
    $region73: #{_mha_forward.1} parent=1 // pred_fallthru
      _
    // Predicated region
    $region74: #{_mha_forward.1} parent=1 // pred_check
      _
    $region75: #{_mha_forward.1} parent=1 // pred_check_branch
      %5228 = sbr.rel (0) target = $region77
    $region76: #{_mha_forward.1} parent=1 // pred_region
      _
    $region77: #{_mha_forward.1} parent=1 // pred_fallthru
      _
    // Predicated region
    $region78: #{_mha_forward.1} parent=1 // pred_check
      _
    $region79: #{_mha_forward.1} parent=1 // pred_check_branch
      %5230 = sbr.rel (0) target = $region81
    $region80: #{_mha_forward.1} parent=1 // pred_region
      _
    $region81: #{_mha_forward.1} parent=1 // pred_fallthru
      _
    %5231 = vsyncpa [#allocation4], 1
    %5232 = vsyncpa [#allocation6], 1
    %5233 = vsyncpa [#allocation9], 1

</llo_original>
